<compile_context>
chip_gen: v7x
topology: tpu7x:2x2x1
jax: 0.10.0
libtpu: 0.0.40
codegen_flags: <defaults>
</compile_context>

<pallas_src>
import functools
import math

import jax
import jax.numpy as jnp
from jax import lax
from jax.experimental import pallas as pl
from jax.experimental.pallas import tpu as pltpu


# Row layout of the packed parameter-vector array (one DMA for all of them).
ROW_LN1_G, ROW_LN1_B, ROW_LN2_G, ROW_LN2_B = 0, 1, 2, 3
ROW_B_IN, ROW_B_OUT, ROW_B1, ROW_B2 = 4, 5, 6, 7
NUM_VEC_ROWS = 8


def _layernorm(x, gamma, beta, eps=1e-5):
    mu = jnp.mean(x, axis=-1, keepdims=True)
    var = jnp.mean((x - mu) ** 2, axis=-1, keepdims=True)
    return (x - mu) * lax.rsqrt(var + eps) * gamma + beta


def _erf_poly(x):
    """Abramowitz–Stegun 7.1.26 erf approximation (|err| < 1.5e-7).

    Uses only mul/add/div/exp/select so it lowers to plain VPU + EUP ops.
    """
    p = 0.3275911
    a1, a2, a3, a4, a5 = (0.254829592, -0.284496736, 1.421413741,
                          -1.453152027, 1.061405429)
    ax = jnp.abs(x)
    t = 1.0 / (1.0 + p * ax)
    poly = ((((a5 * t + a4) * t + a3) * t + a2) * t + a1) * t
    y = 1.0 - poly * jnp.exp(-ax * ax)
    return jnp.where(x >= 0.0, y, -y)


def _gelu_exact(x):
    # exact (erf) GELU — matches torch.nn.GELU() default
    return 0.5 * x * (1.0 + _erf_poly(x * (1.0 / math.sqrt(2.0))))


def transformer_block_kernel(B, S, D, H, Hm,
                             x_ref, vecs_ref, w_in_ref, w_out_ref,
                             w1_ref, w2_ref, out_ref):
    Dh = D // H
    N = B * S

    x = x_ref[...].reshape(N, D)

    # Hoisted parameter vectors: single load, value slices, reused everywhere.
    vecs = vecs_ref[...]
    ln1_g = vecs[ROW_LN1_G:ROW_LN1_G + 1, :D]
    ln1_b = vecs[ROW_LN1_B:ROW_LN1_B + 1, :D]
    ln2_g = vecs[ROW_LN2_G:ROW_LN2_G + 1, :D]
    ln2_b = vecs[ROW_LN2_B:ROW_LN2_B + 1, :D]
    b_in = vecs[ROW_B_IN:ROW_B_IN + 1, :3 * D]
    b_out = vecs[ROW_B_OUT:ROW_B_OUT + 1, :D]
    b1 = vecs[ROW_B1:ROW_B1 + 1, :Hm]
    b2 = vecs[ROW_B2:ROW_B2 + 1, :D]

    # ---- sublayer 1: LN -> fused QKV (q-scale pre-folded) -> attention ----
    xn = _layernorm(x, ln1_g, ln1_b)                      # f32 elementwise
    qkv = jnp.dot(xn.astype(jnp.bfloat16), w_in_ref[...],
                  preferred_element_type=jnp.float32) + b_in
    q = qkv[:, 0:D].reshape(B, S, D)          # 1/sqrt(Dh) already folded in
    k = qkv[:, D:2 * D].reshape(B, S, D)
    v = qkv[:, 2 * D:3 * D].reshape(B, S, D)

    # Per-head attention (H is tiny -> static unroll).  Each head's output is
    # folded directly into the output projection via the sublane-aligned row
    # slice of w_out, so no jnp.concatenate / lane re-pack is needed.
    attn_out = None
    for h in range(H):
        lo = h * Dh
        qh = q[:, :, lo:lo + Dh]
        kh = k[:, :, lo:lo + Dh]
        vh = v[:, :, lo:lo + Dh]
        s = jnp.einsum('bqd,bkd->bqk', qh, kh,
                       preferred_element_type=jnp.float32)
        s = s - jnp.max(s, axis=-1, keepdims=True)
        e = jnp.exp(s)
        p = e * pl.reciprocal(jnp.sum(e, axis=-1, keepdims=True), approx=True)
        oh = jnp.einsum('bqk,bkd->bqd', p, vh,
                        preferred_element_type=jnp.float32)
        contrib = jnp.dot(oh.reshape(N, Dh).astype(jnp.bfloat16),
                          w_out_ref[lo:lo + Dh, :],
                          preferred_element_type=jnp.float32)
        attn_out = contrib if attn_out is None else attn_out + contrib
    x1 = x + attn_out + b_out

    # ---- sublayer 2: LN -> Linear -> GELU -> Linear -> residual ----
    x2n = _layernorm(x1, ln2_g, ln2_b)                    # f32 elementwise
    h1 = jnp.dot(x2n.astype(jnp.bfloat16), w1_ref[...],
                 preferred_element_type=jnp.float32) + b1
    h1 = _gelu_exact(h1)                                  # f32 elementwise
    mlp = jnp.dot(h1.astype(jnp.bfloat16), w2_ref[...],
                  preferred_element_type=jnp.float32) + b2
    out_ref[...] = (x1 + mlp).reshape(B, S, D)


def prepare_params(params, num_heads):
    """One-time host-side parameter transform (hoisted out of the hot path).

    * packs every 1-D parameter vector into one (8, Wmax) f32 array (one DMA),
    * folds the 1/sqrt(Dh) query scale into the Q columns of w_in / b_in,
    * casts the four weight matrices to bf16 for MXU streaming.
    """
    D = params["w_out"].shape[0]
    Hm = params["w1"].shape[1]
    Dh = D // num_heads
    scale = 1.0 / math.sqrt(Dh)

    col_scale = jnp.concatenate(
        [jnp.full((D,), scale, jnp.float32), jnp.ones((2 * D,), jnp.float32)])
    w_in = params["w_in"] * col_scale[None, :]
    b_in = params["b_in"] * col_scale

    wmax = max(Hm, 3 * D, 128)
    vecs = jnp.zeros((NUM_VEC_ROWS, wmax), jnp.float32)
    vecs = vecs.at[ROW_LN1_G, :D].set(params["ln1_g"])
    vecs = vecs.at[ROW_LN1_B, :D].set(params["ln1_b"])
    vecs = vecs.at[ROW_LN2_G, :D].set(params["ln2_g"])
    vecs = vecs.at[ROW_LN2_B, :D].set(params["ln2_b"])
    vecs = vecs.at[ROW_B_IN, :3 * D].set(b_in)
    vecs = vecs.at[ROW_B_OUT, :D].set(params["b_out"])
    vecs = vecs.at[ROW_B1, :Hm].set(params["b1"])
    vecs = vecs.at[ROW_B2, :D].set(params["b2"])

    return dict(
        vecs=vecs,
        w_in=w_in.astype(jnp.bfloat16),
        w_out=params["w_out"].astype(jnp.bfloat16),
        w1=params["w1"].astype(jnp.bfloat16),
        w2=params["w2"].astype(jnp.bfloat16),
    )


def transformer_block(x, prep, num_heads):
    B, S, D = x.shape
    Hm = prep["w1"].shape[1]
    Dh = D // num_heads
    N = B * S

    flops = int(2 * N * D * 3 * D                       # fused QKV projection
                + 2 * B * num_heads * S * S * Dh * 2    # scores + attn@V
                + 2 * N * D * D                         # out projection
                + 2 * N * D * Hm * 2)                   # MLP
    transcendentals = int(B * num_heads * S * S + N * Hm)
    bytes_accessed = int(
        4 * (2 * x.size + prep["vecs"].size)            # f32 activations/vecs
        + 2 * (prep["w_in"].size + prep["w_out"].size   # bf16 weights
               + prep["w1"].size + prep["w2"].size))

    kernel = functools.partial(transformer_block_kernel, B, S, D, num_heads, Hm)
    return pl.pallas_call(
        kernel,
        out_shape=jax.ShapeDtypeStruct((B, S, D), jnp.float32),
        in_specs=[pl.BlockSpec(memory_space=pltpu.MemorySpace.VMEM)] * 6,
        out_specs=pl.BlockSpec(memory_space=pltpu.MemorySpace.VMEM),
        compiler_params=pltpu.CompilerParams(
            vmem_limit_bytes=32 * 1024 * 1024),
        cost_estimate=pl.CostEstimate(flops=flops,
                                      transcendentals=transcendentals,
                                      bytes_accessed=bytes_accessed),
    )(x, prep["vecs"], prep["w_in"], prep["w_out"], prep["w1"], prep["w2"])


def reference(x, params, num_heads):
    """Plain-JAX f32 replica of the PyTorch forward (eval mode, exact GELU)."""
    B, S, D = x.shape
    Dh = D // num_heads
    xn = _layernorm(x, params["ln1_g"], params["ln1_b"])
    qkv = xn @ params["w_in"] + params["b_in"]
    q, k, v = qkv[..., :D], qkv[..., D:2 * D], qkv[..., 2 * D:]

    def split(t):
        return t.reshape(B, S, num_heads, Dh).transpose(0, 2, 1, 3)

    qh, kh, vh = split(q), split(k), split(v)
    s = jnp.einsum('bhqd,bhkd->bhqk', qh, kh) / math.sqrt(Dh)
    p = jax.nn.softmax(s, axis=-1)
    a = jnp.einsum('bhqk,bhkd->bhqd', p, vh)
    a = a.transpose(0, 2, 1, 3).reshape(B, S, D)
    attn_out = a @ params["w_out"] + params["b_out"]
    x1 = x + attn_out
    x2n = _layernorm(x1, params["ln2_g"], params["ln2_b"])
    h1 = x2n @ params["w1"] + params["b1"]
    h1 = 0.5 * h1 * (1.0 + lax.erf(h1 / math.sqrt(2.0)))   # exact torch GELU
    return x1 + h1 @ params["w2"] + params["b2"]


def init_params(key, D, mlp_ratio=4.0):
    Hm = int(D * mlp_ratio)
    ks = jax.random.split(key, 8)

    def lin_w(k, din, dout):
        s = 1.0 / math.sqrt(din)
        return jax.random.uniform(k, (din, dout), jnp.float32, -s, s)

    def vec(k, n, scale=0.02):
        return scale * jax.random.normal(k, (n,), jnp.float32)

    return dict(
        ln1_g=jnp.ones((D,), jnp.float32), ln1_b=jnp.zeros((D,), jnp.float32),
        ln2_g=jnp.ones((D,), jnp.float32), ln2_b=jnp.zeros((D,), jnp.float32),
        w_in=lin_w(ks[0], D, 3 * D), b_in=vec(ks[1], 3 * D),
        w_out=lin_w(ks[2], D, D), b_out=vec(ks[3], D),
        w1=lin_w(ks[4], D, Hm), b1=vec(ks[5], Hm),
        w2=lin_w(ks[6], Hm, D), b2=vec(ks[7], D),
    )


if __name__ == "__main__":
    # Lane/sublane-dense small shapes: B*S = 16 rows (mult. of 8 sublanes),
    # D = 128, 3D = 384, mlp_hidden = 512 all multiples of 128 lanes.
    B, S, D, H = 2, 8, 128, 4
    key = jax.random.PRNGKey(0)
    kx, kp = jax.random.split(key)
    x = jax.random.normal(kx, (B, S, D), jnp.float32)
    params = init_params(kp, D)

    prep = prepare_params(params, H)        # one-time, outside the hot path
    fwd = jax.jit(functools.partial(transformer_block, num_heads=H))

    out = jax.block_until_ready(fwd(x, prep))

    ref = reference(x, params, H)
    assert out.shape == (B, S, D)
    # bf16 weights / bf16 matmul operands + approx reciprocal => loosened tol
    # vs. the f32 torch-semantics reference.
    max_err = float(jnp.max(jnp.abs(out - ref)))
    assert jnp.allclose(out, ref, atol=4e-2, rtol=4e-2), (
        f"mismatch vs reference: max abs err {max_err}")
    print("KERNEL_OK")
</pallas_src>

<mosaic_0001>
module attributes {stable_mosaic.version = 11 : i64} {
  func.func @transformer_block_kernel(%arg0: memref<2x8x128xf32, #tpu.memory_space<vmem>>, %arg1: memref<8x512xf32, #tpu.memory_space<vmem>>, %arg2: memref<128x384xbf16, #tpu.memory_space<vmem>>, %arg3: memref<128x128xbf16, #tpu.memory_space<vmem>>, %arg4: memref<128x512xbf16, #tpu.memory_space<vmem>>, %arg5: memref<512x128xbf16, #tpu.memory_space<vmem>>, %arg6: memref<2x8x128xf32, #tpu.memory_space<vmem>>) attributes {dimension_semantics = [], scalar_prefetch = 0 : i64, scratch_operands = 0 : i64, tpu.core_type = #tpu.core_type<tc>} {
    %c0 = arith.constant 0 : index
    %c0_0 = arith.constant 0 : index
    %c0_1 = arith.constant 0 : index
    %0 = vector.load %arg0[%c0, %c0_0, %c0_1] : memref<2x8x128xf32, #tpu.memory_space<vmem>>, vector<2x8x128xf32>
    %1 = vector.shape_cast %0 : vector<2x8x128xf32> to vector<16x128xf32>
    %c0_2 = arith.constant 0 : index
    %c0_3 = arith.constant 0 : index
    %2 = vector.load %arg1[%c0_2, %c0_3] : memref<8x512xf32, #tpu.memory_space<vmem>>, vector<8x512xf32>
    %3 = vector.extract_strided_slice %2 {offsets = [0, 0], sizes = [1, 128], strides = [1, 1]} : vector<8x512xf32> to vector<1x128xf32>
    %4 = vector.extract_strided_slice %2 {offsets = [1, 0], sizes = [1, 128], strides = [1, 1]} : vector<8x512xf32> to vector<1x128xf32>
    %5 = vector.extract_strided_slice %2 {offsets = [2, 0], sizes = [1, 128], strides = [1, 1]} : vector<8x512xf32> to vector<1x128xf32>
    %6 = vector.extract_strided_slice %2 {offsets = [3, 0], sizes = [1, 128], strides = [1, 1]} : vector<8x512xf32> to vector<1x128xf32>
    %7 = vector.extract_strided_slice %2 {offsets = [4, 0], sizes = [1, 384], strides = [1, 1]} : vector<8x512xf32> to vector<1x384xf32>
    %8 = vector.extract_strided_slice %2 {offsets = [5, 0], sizes = [1, 128], strides = [1, 1]} : vector<8x512xf32> to vector<1x128xf32>
    %9 = vector.extract_strided_slice %2 {offsets = [6, 0], sizes = [1, 512], strides = [1, 1]} : vector<8x512xf32> to vector<1x512xf32>
    %10 = vector.extract_strided_slice %2 {offsets = [7, 0], sizes = [1, 128], strides = [1, 1]} : vector<8x512xf32> to vector<1x128xf32>
    %cst = arith.constant dense<0.000000e+00> : vector<16xf32>
    %11 = vector.multi_reduction <add>, %1, %cst [1] : vector<16x128xf32> to vector<16xf32>
    %12 = vector.shape_cast %11 : vector<16xf32> to vector<16x1xf32>
    %cst_4 = arith.constant 1.280000e+02 : f32
    %13 = vector.broadcast %cst_4 : f32 to vector<16x1xf32>
    %14 = arith.divf %12, %13 : vector<16x1xf32>
    %15 = vector.broadcast %14 : vector<16x1xf32> to vector<16x128xf32>
    %16 = arith.subf %1, %15 : vector<16x128xf32>
    %17 = arith.mulf %16, %16 : vector<16x128xf32>
    %cst_5 = arith.constant dense<0.000000e+00> : vector<16xf32>
    %18 = vector.multi_reduction <add>, %17, %cst_5 [1] : vector<16x128xf32> to vector<16xf32>
    %19 = vector.shape_cast %18 : vector<16xf32> to vector<16x1xf32>
    %cst_6 = arith.constant 1.280000e+02 : f32
    %20 = vector.broadcast %cst_6 : f32 to vector<16x1xf32>
    %21 = arith.divf %19, %20 : vector<16x1xf32>
    %22 = vector.broadcast %14 : vector<16x1xf32> to vector<16x128xf32>
    %23 = arith.subf %1, %22 : vector<16x128xf32>
    %cst_7 = arith.constant 9.99999974E-6 : f32
    %24 = vector.broadcast %cst_7 : f32 to vector<16x1xf32>
    %25 = arith.addf %21, %24 : vector<16x1xf32>
    %26 = math.rsqrt %25 : vector<16x1xf32>
    %27 = vector.broadcast %26 : vector<16x1xf32> to vector<16x128xf32>
    %28 = arith.mulf %23, %27 : vector<16x128xf32>
    %29 = vector.broadcast %3 : vector<1x128xf32> to vector<16x128xf32>
    %30 = arith.mulf %28, %29 : vector<16x128xf32>
    %31 = vector.broadcast %4 : vector<1x128xf32> to vector<16x128xf32>
    %32 = arith.addf %30, %31 : vector<16x128xf32>
    %33 = arith.truncf %32 : vector<16x128xf32> to vector<16x128xbf16>
    %c0_8 = arith.constant 0 : index
    %c0_9 = arith.constant 0 : index
    %34 = vector.load %arg2[%c0_8, %c0_9] : memref<128x384xbf16, #tpu.memory_space<vmem>>, vector<128x384xbf16>
    %cst_10 = arith.constant dense<0.000000e+00> : vector<16x384xf32>
    %35 = tpu.matmul %33, %34, %cst_10 {dimension_numbers = #tpu.dot_dimension_numbers<[1], [0], [0], [1], [0, 0, 1, 1], [], []>} : vector<16x128xbf16>, vector<128x384xbf16>, vector<16x384xf32> -> vector<16x384xf32>
    %36 = vector.broadcast %7 : vector<1x384xf32> to vector<16x384xf32>
    %37 = arith.addf %35, %36 : vector<16x384xf32>
    %38 = vector.extract_strided_slice %37 {offsets = [0, 0], sizes = [16, 128], strides = [1, 1]} : vector<16x384xf32> to vector<16x128xf32>
    %39 = vector.shape_cast %38 : vector<16x128xf32> to vector<2x8x128xf32>
    %40 = vector.extract_strided_slice %37 {offsets = [0, 128], sizes = [16, 128], strides = [1, 1]} : vector<16x384xf32> to vector<16x128xf32>
    %41 = vector.shape_cast %40 : vector<16x128xf32> to vector<2x8x128xf32>
    %42 = vector.extract_strided_slice %37 {offsets = [0, 256], sizes = [16, 128], strides = [1, 1]} : vector<16x384xf32> to vector<16x128xf32>
    %43 = vector.shape_cast %42 : vector<16x128xf32> to vector<2x8x128xf32>
    %44 = vector.extract_strided_slice %39 {offsets = [0, 0, 0], sizes = [2, 8, 32], strides = [1, 1, 1]} : vector<2x8x128xf32> to vector<2x8x32xf32>
    %45 = vector.extract_strided_slice %41 {offsets = [0, 0, 0], sizes = [2, 8, 32], strides = [1, 1, 1]} : vector<2x8x128xf32> to vector<2x8x32xf32>
    %46 = vector.extract_strided_slice %43 {offsets = [0, 0, 0], sizes = [2, 8, 32], strides = [1, 1, 1]} : vector<2x8x128xf32> to vector<2x8x32xf32>
    "tpu.trace_start"() <{level = 10 : i32, message = "bqd,bkd->bqk"}> : () -> ()
    %cst_11 = arith.constant dense<0.000000e+00> : vector<2x8x8xf32>
    %47 = tpu.matmul %44, %45, %cst_11 {dimension_numbers = #tpu.dot_dimension_numbers<[2], [2], [1], [1], [0, 0, 0, 1, 1, 1], [0], [0]>} : vector<2x8x32xf32>, vector<2x8x32xf32>, vector<2x8x8xf32> -> vector<2x8x8xf32>
    "tpu.trace_stop"() : () -> ()
    %cst_12 = arith.constant dense<0xFF800000> : vector<2x8xf32>
    %48 = vector.multi_reduction <maximumf>, %47, %cst_12 [2] : vector<2x8x8xf32> to vector<2x8xf32>
    %49 = vector.shape_cast %48 : vector<2x8xf32> to vector<2x8x1xf32>
    %50 = vector.broadcast %49 : vector<2x8x1xf32> to vector<2x8x8xf32>
    %51 = arith.subf %47, %50 : vector<2x8x8xf32>
    %52 = math.exp %51 : vector<2x8x8xf32>
    %cst_13 = arith.constant dense<0.000000e+00> : vector<2x8xf32>
    %53 = vector.multi_reduction <add>, %52, %cst_13 [2] : vector<2x8x8xf32> to vector<2x8xf32>
    %54 = vector.shape_cast %53 : vector<2x8xf32> to vector<2x8x1xf32>
    %55 = tpu.reciprocal %54 {approx = true} : vector<2x8x1xf32> -> vector<2x8x1xf32>
    %56 = vector.broadcast %55 : vector<2x8x1xf32> to vector<2x8x8xf32>
    %57 = arith.mulf %52, %56 : vector<2x8x8xf32>
    "tpu.trace_start"() <{level = 10 : i32, message = "bqk,bkd->bqd"}> : () -> ()
    %cst_14 = arith.constant dense<0.000000e+00> : vector<2x8x32xf32>
    %58 = tpu.matmul %57, %46, %cst_14 {dimension_numbers = #tpu.dot_dimension_numbers<[2], [1], [1], [2], [0, 0, 0, 1, 1, 2], [0], [0]>} : vector<2x8x8xf32>, vector<2x8x32xf32>, vector<2x8x32xf32> -> vector<2x8x32xf32>
    "tpu.trace_stop"() : () -> ()
    %59 = vector.shape_cast %58 : vector<2x8x32xf32> to vector<16x32xf32>
    %60 = arith.truncf %59 : vector<16x32xf32> to vector<16x32xbf16>
    %c0_15 = arith.constant 0 : index
    %c0_16 = arith.constant 0 : index
    %61 = vector.load %arg3[%c0_15, %c0_16] : memref<128x128xbf16, #tpu.memory_space<vmem>>, vector<32x128xbf16>
    %cst_17 = arith.constant dense<0.000000e+00> : vector<16x128xf32>
    %62 = tpu.matmul %60, %61, %cst_17 {dimension_numbers = #tpu.dot_dimension_numbers<[1], [0], [0], [1], [0, 0, 1, 1], [], []>} : vector<16x32xbf16>, vector<32x128xbf16>, vector<16x128xf32> -> vector<16x128xf32>
    %63 = vector.extract_strided_slice %39 {offsets = [0, 0, 32], sizes = [2, 8, 32], strides = [1, 1, 1]} : vector<2x8x128xf32> to vector<2x8x32xf32>
    %64 = vector.extract_strided_slice %41 {offsets = [0, 0, 32], sizes = [2, 8, 32], strides = [1, 1, 1]} : vector<2x8x128xf32> to vector<2x8x32xf32>
    %65 = vector.extract_strided_slice %43 {offsets = [0, 0, 32], sizes = [2, 8, 32], strides = [1, 1, 1]} : vector<2x8x128xf32> to vector<2x8x32xf32>
    "tpu.trace_start"() <{level = 10 : i32, message = "bqd,bkd->bqk"}> : () -> ()
    %cst_18 = arith.constant dense<0.000000e+00> : vector<2x8x8xf32>
    %66 = tpu.matmul %63, %64, %cst_18 {dimension_numbers = #tpu.dot_dimension_numbers<[2], [2], [1], [1], [0, 0, 0, 1, 1, 1], [0], [0]>} : vector<2x8x32xf32>, vector<2x8x32xf32>, vector<2x8x8xf32> -> vector<2x8x8xf32>
    "tpu.trace_stop"() : () -> ()
    %cst_19 = arith.constant dense<0xFF800000> : vector<2x8xf32>
    %67 = vector.multi_reduction <maximumf>, %66, %cst_19 [2] : vector<2x8x8xf32> to vector<2x8xf32>
    %68 = vector.shape_cast %67 : vector<2x8xf32> to vector<2x8x1xf32>
    %69 = vector.broadcast %68 : vector<2x8x1xf32> to vector<2x8x8xf32>
    %70 = arith.subf %66, %69 : vector<2x8x8xf32>
    %71 = math.exp %70 : vector<2x8x8xf32>
    %cst_20 = arith.constant dense<0.000000e+00> : vector<2x8xf32>
    %72 = vector.multi_reduction <add>, %71, %cst_20 [2] : vector<2x8x8xf32> to vector<2x8xf32>
    %73 = vector.shape_cast %72 : vector<2x8xf32> to vector<2x8x1xf32>
    %74 = tpu.reciprocal %73 {approx = true} : vector<2x8x1xf32> -> vector<2x8x1xf32>
    %75 = vector.broadcast %74 : vector<2x8x1xf32> to vector<2x8x8xf32>
    %76 = arith.mulf %71, %75 : vector<2x8x8xf32>
    "tpu.trace_start"() <{level = 10 : i32, message = "bqk,bkd->bqd"}> : () -> ()
    %cst_21 = arith.constant dense<0.000000e+00> : vector<2x8x32xf32>
    %77 = tpu.matmul %76, %65, %cst_21 {dimension_numbers = #tpu.dot_dimension_numbers<[2], [1], [1], [2], [0, 0, 0, 1, 1, 2], [0], [0]>} : vector<2x8x8xf32>, vector<2x8x32xf32>, vector<2x8x32xf32> -> vector<2x8x32xf32>
    "tpu.trace_stop"() : () -> ()
    %78 = vector.shape_cast %77 : vector<2x8x32xf32> to vector<16x32xf32>
    %79 = arith.truncf %78 : vector<16x32xf32> to vector<16x32xbf16>
    %c32 = arith.constant 32 : index
    %c0_22 = arith.constant 0 : index
    %80 = vector.load %arg3[%c32, %c0_22] : memref<128x128xbf16, #tpu.memory_space<vmem>>, vector<32x128xbf16>
    %cst_23 = arith.constant dense<0.000000e+00> : vector<16x128xf32>
    %81 = tpu.matmul %79, %80, %cst_23 {dimension_numbers = #tpu.dot_dimension_numbers<[1], [0], [0], [1], [0, 0, 1, 1], [], []>} : vector<16x32xbf16>, vector<32x128xbf16>, vector<16x128xf32> -> vector<16x128xf32>
    %82 = arith.addf %62, %81 : vector<16x128xf32>
    %83 = vector.extract_strided_slice %39 {offsets = [0, 0, 64], sizes = [2, 8, 32], strides = [1, 1, 1]} : vector<2x8x128xf32> to vector<2x8x32xf32>
    %84 = vector.extract_strided_slice %41 {offsets = [0, 0, 64], sizes = [2, 8, 32], strides = [1, 1, 1]} : vector<2x8x128xf32> to vector<2x8x32xf32>
    %85 = vector.extract_strided_slice %43 {offsets = [0, 0, 64], sizes = [2, 8, 32], strides = [1, 1, 1]} : vector<2x8x128xf32> to vector<2x8x32xf32>
    "tpu.trace_start"() <{level = 10 : i32, message = "bqd,bkd->bqk"}> : () -> ()
    %cst_24 = arith.constant dense<0.000000e+00> : vector<2x8x8xf32>
    %86 = tpu.matmul %83, %84, %cst_24 {dimension_numbers = #tpu.dot_dimension_numbers<[2], [2], [1], [1], [0, 0, 0, 1, 1, 1], [0], [0]>} : vector<2x8x32xf32>, vector<2x8x32xf32>, vector<2x8x8xf32> -> vector<2x8x8xf32>
    "tpu.trace_stop"() : () -> ()
    %cst_25 = arith.constant dense<0xFF800000> : vector<2x8xf32>
    %87 = vector.multi_reduction <maximumf>, %86, %cst_25 [2] : vector<2x8x8xf32> to vector<2x8xf32>
    %88 = vector.shape_cast %87 : vector<2x8xf32> to vector<2x8x1xf32>
    %89 = vector.broadcast %88 : vector<2x8x1xf32> to vector<2x8x8xf32>
    %90 = arith.subf %86, %89 : vector<2x8x8xf32>
    %91 = math.exp %90 : vector<2x8x8xf32>
    %cst_26 = arith.constant dense<0.000000e+00> : vector<2x8xf32>
    %92 = vector.multi_reduction <add>, %91, %cst_26 [2] : vector<2x8x8xf32> to vector<2x8xf32>
    %93 = vector.shape_cast %92 : vector<2x8xf32> to vector<2x8x1xf32>
    %94 = tpu.reciprocal %93 {approx = true} : vector<2x8x1xf32> -> vector<2x8x1xf32>
    %95 = vector.broadcast %94 : vector<2x8x1xf32> to vector<2x8x8xf32>
    %96 = arith.mulf %91, %95 : vector<2x8x8xf32>
    "tpu.trace_start"() <{level = 10 : i32, message = "bqk,bkd->bqd"}> : () -> ()
    %cst_27 = arith.constant dense<0.000000e+00> : vector<2x8x32xf32>
    %97 = tpu.matmul %96, %85, %cst_27 {dimension_numbers = #tpu.dot_dimension_numbers<[2], [1], [1], [2], [0, 0, 0, 1, 1, 2], [0], [0]>} : vector<2x8x8xf32>, vector<2x8x32xf32>, vector<2x8x32xf32> -> vector<2x8x32xf32>
    "tpu.trace_stop"() : () -> ()
    %98 = vector.shape_cast %97 : vector<2x8x32xf32> to vector<16x32xf32>
    %99 = arith.truncf %98 : vector<16x32xf32> to vector<16x32xbf16>
    %c64 = arith.constant 64 : index
    %c0_28 = arith.constant 0 : index
    %100 = vector.load %arg3[%c64, %c0_28] : memref<128x128xbf16, #tpu.memory_space<vmem>>, vector<32x128xbf16>
    %cst_29 = arith.constant dense<0.000000e+00> : vector<16x128xf32>
    %101 = tpu.matmul %99, %100, %cst_29 {dimension_numbers = #tpu.dot_dimension_numbers<[1], [0], [0], [1], [0, 0, 1, 1], [], []>} : vector<16x32xbf16>, vector<32x128xbf16>, vector<16x128xf32> -> vector<16x128xf32>
    %102 = arith.addf %82, %101 : vector<16x128xf32>
    %103 = vector.extract_strided_slice %39 {offsets = [0, 0, 96], sizes = [2, 8, 32], strides = [1, 1, 1]} : vector<2x8x128xf32> to vector<2x8x32xf32>
    %104 = vector.extract_strided_slice %41 {offsets = [0, 0, 96], sizes = [2, 8, 32], strides = [1, 1, 1]} : vector<2x8x128xf32> to vector<2x8x32xf32>
    %105 = vector.extract_strided_slice %43 {offsets = [0, 0, 96], sizes = [2, 8, 32], strides = [1, 1, 1]} : vector<2x8x128xf32> to vector<2x8x32xf32>
    "tpu.trace_start"() <{level = 10 : i32, message = "bqd,bkd->bqk"}> : () -> ()
    %cst_30 = arith.constant dense<0.000000e+00> : vector<2x8x8xf32>
    %106 = tpu.matmul %103, %104, %cst_30 {dimension_numbers = #tpu.dot_dimension_numbers<[2], [2], [1], [1], [0, 0, 0, 1, 1, 1], [0], [0]>} : vector<2x8x32xf32>, vector<2x8x32xf32>, vector<2x8x8xf32> -> vector<2x8x8xf32>
    "tpu.trace_stop"() : () -> ()
    %cst_31 = arith.constant dense<0xFF800000> : vector<2x8xf32>
    %107 = vector.multi_reduction <maximumf>, %106, %cst_31 [2] : vector<2x8x8xf32> to vector<2x8xf32>
    %108 = vector.shape_cast %107 : vector<2x8xf32> to vector<2x8x1xf32>
    %109 = vector.broadcast %108 : vector<2x8x1xf32> to vector<2x8x8xf32>
    %110 = arith.subf %106, %109 : vector<2x8x8xf32>
    %111 = math.exp %110 : vector<2x8x8xf32>
    %cst_32 = arith.constant dense<0.000000e+00> : vector<2x8xf32>
    %112 = vector.multi_reduction <add>, %111, %cst_32 [2] : vector<2x8x8xf32> to vector<2x8xf32>
    %113 = vector.shape_cast %112 : vector<2x8xf32> to vector<2x8x1xf32>
    %114 = tpu.reciprocal %113 {approx = true} : vector<2x8x1xf32> -> vector<2x8x1xf32>
    %115 = vector.broadcast %114 : vector<2x8x1xf32> to vector<2x8x8xf32>
    %116 = arith.mulf %111, %115 : vector<2x8x8xf32>
    "tpu.trace_start"() <{level = 10 : i32, message = "bqk,bkd->bqd"}> : () -> ()
    %cst_33 = arith.constant dense<0.000000e+00> : vector<2x8x32xf32>
    %117 = tpu.matmul %116, %105, %cst_33 {dimension_numbers = #tpu.dot_dimension_numbers<[2], [1], [1], [2], [0, 0, 0, 1, 1, 2], [0], [0]>} : vector<2x8x8xf32>, vector<2x8x32xf32>, vector<2x8x32xf32> -> vector<2x8x32xf32>
    "tpu.trace_stop"() : () -> ()
    %118 = vector.shape_cast %117 : vector<2x8x32xf32> to vector<16x32xf32>
    %119 = arith.truncf %118 : vector<16x32xf32> to vector<16x32xbf16>
    %c96 = arith.constant 96 : index
    %c0_34 = arith.constant 0 : index
    %120 = vector.load %arg3[%c96, %c0_34] : memref<128x128xbf16, #tpu.memory_space<vmem>>, vector<32x128xbf16>
    %cst_35 = arith.constant dense<0.000000e+00> : vector<16x128xf32>
    %121 = tpu.matmul %119, %120, %cst_35 {dimension_numbers = #tpu.dot_dimension_numbers<[1], [0], [0], [1], [0, 0, 1, 1], [], []>} : vector<16x32xbf16>, vector<32x128xbf16>, vector<16x128xf32> -> vector<16x128xf32>
    %122 = arith.addf %102, %121 : vector<16x128xf32>
    %123 = arith.addf %1, %122 : vector<16x128xf32>
    %124 = vector.broadcast %8 : vector<1x128xf32> to vector<16x128xf32>
    %125 = arith.addf %123, %124 : vector<16x128xf32>
    %cst_36 = arith.constant dense<0.000000e+00> : vector<16xf32>
    %126 = vector.multi_reduction <add>, %125, %cst_36 [1] : vector<16x128xf32> to vector<16xf32>
    %127 = vector.shape_cast %126 : vector<16xf32> to vector<16x1xf32>
    %cst_37 = arith.constant 1.280000e+02 : f32
    %128 = vector.broadcast %cst_37 : f32 to vector<16x1xf32>
    %129 = arith.divf %127, %128 : vector<16x1xf32>
    %130 = vector.broadcast %129 : vector<16x1xf32> to vector<16x128xf32>
    %131 = arith.subf %125, %130 : vector<16x128xf32>
    %132 = arith.mulf %131, %131 : vector<16x128xf32>
    %cst_38 = arith.constant dense<0.000000e+00> : vector<16xf32>
    %133 = vector.multi_reduction <add>, %132, %cst_38 [1] : vector<16x128xf32> to vector<16xf32>
    %134 = vector.shape_cast %133 : vector<16xf32> to vector<16x1xf32>
    %cst_39 = arith.constant 1.280000e+02 : f32
    %135 = vector.broadcast %cst_39 : f32 to vector<16x1xf32>
    %136 = arith.divf %134, %135 : vector<16x1xf32>
    %137 = vector.broadcast %129 : vector<16x1xf32> to vector<16x128xf32>
    %138 = arith.subf %125, %137 : vector<16x128xf32>
    %cst_40 = arith.constant 9.99999974E-6 : f32
    %139 = vector.broadcast %cst_40 : f32 to vector<16x1xf32>
    %140 = arith.addf %136, %139 : vector<16x1xf32>
    %141 = math.rsqrt %140 : vector<16x1xf32>
    %142 = vector.broadcast %141 : vector<16x1xf32> to vector<16x128xf32>
    %143 = arith.mulf %138, %142 : vector<16x128xf32>
    %144 = vector.broadcast %5 : vector<1x128xf32> to vector<16x128xf32>
    %145 = arith.mulf %143, %144 : vector<16x128xf32>
    %146 = vector.broadcast %6 : vector<1x128xf32> to vector<16x128xf32>
    %147 = arith.addf %145, %146 : vector<16x128xf32>
    %148 = arith.truncf %147 : vector<16x128xf32> to vector<16x128xbf16>
    %c0_41 = arith.constant 0 : index
    %c0_42 = arith.constant 0 : index
    %149 = vector.load %arg4[%c0_41, %c0_42] : memref<128x512xbf16, #tpu.memory_space<vmem>>, vector<128x512xbf16>
    %cst_43 = arith.constant dense<0.000000e+00> : vector<16x512xf32>
    %150 = tpu.matmul %148, %149, %cst_43 {dimension_numbers = #tpu.dot_dimension_numbers<[1], [0], [0], [1], [0, 0, 1, 1], [], []>} : vector<16x128xbf16>, vector<128x512xbf16>, vector<16x512xf32> -> vector<16x512xf32>
    %151 = vector.broadcast %9 : vector<1x512xf32> to vector<16x512xf32>
    %152 = arith.addf %150, %151 : vector<16x512xf32>
    %cst_44 = arith.constant 5.000000e-01 : f32
    %153 = vector.broadcast %cst_44 : f32 to vector<16x512xf32>
    %154 = arith.mulf %153, %152 : vector<16x512xf32>
    %cst_45 = arith.constant 0.707106769 : f32
    %155 = vector.broadcast %cst_45 : f32 to vector<16x512xf32>
    %156 = arith.mulf %152, %155 : vector<16x512xf32>
    %157 = math.absf %156 : vector<16x512xf32>
    %cst_46 = arith.constant 0.327591091 : f32
    %158 = vector.broadcast %cst_46 : f32 to vector<16x512xf32>
    %159 = arith.mulf %158, %157 : vector<16x512xf32>
    %cst_47 = arith.constant 1.000000e+00 : f32
    %160 = vector.broadcast %cst_47 : f32 to vector<16x512xf32>
    %161 = arith.addf %160, %159 : vector<16x512xf32>
    %cst_48 = arith.constant 1.000000e+00 : f32
    %162 = vector.broadcast %cst_48 : f32 to vector<16x512xf32>
    %163 = arith.divf %162, %161 : vector<16x512xf32>
    %cst_49 = arith.constant 1.06140542 : f32
    %164 = vector.broadcast %cst_49 : f32 to vector<16x512xf32>
    %165 = arith.mulf %164, %163 : vector<16x512xf32>
    %cst_50 = arith.constant -1.45315206 : f32
    %166 = vector.broadcast %cst_50 : f32 to vector<16x512xf32>
    %167 = arith.addf %165, %166 : vector<16x512xf32>
    %168 = arith.mulf %167, %163 : vector<16x512xf32>
    %cst_51 = arith.constant 1.42141378 : f32
    %169 = vector.broadcast %cst_51 : f32 to vector<16x512xf32>
    %170 = arith.addf %168, %169 : vector<16x512xf32>
    %171 = arith.mulf %170, %163 : vector<16x512xf32>
    %cst_52 = arith.constant -0.284496725 : f32
    %172 = vector.broadcast %cst_52 : f32 to vector<16x512xf32>
    %173 = arith.addf %171, %172 : vector<16x512xf32>
    %174 = arith.mulf %173, %163 : vector<16x512xf32>
    %cst_53 = arith.constant 0.254829586 : f32
    %175 = vector.broadcast %cst_53 : f32 to vector<16x512xf32>
    %176 = arith.addf %174, %175 : vector<16x512xf32>
    %177 = arith.mulf %176, %163 : vector<16x512xf32>
    %cst_54 = arith.constant 0.000000e+00 : f32
    %178 = vector.broadcast %cst_54 : f32 to vector<16x512xf32>
    %179 = arith.subf %178, %157 : vector<16x512xf32>
    %180 = arith.mulf %179, %157 : vector<16x512xf32>
    %181 = math.exp %180 : vector<16x512xf32>
    %182 = arith.mulf %177, %181 : vector<16x512xf32>
    %cst_55 = arith.constant 1.000000e+00 : f32
    %183 = vector.broadcast %cst_55 : f32 to vector<16x512xf32>
    %184 = arith.subf %183, %182 : vector<16x512xf32>
    %cst_56 = arith.constant 0.000000e+00 : f32
    %185 = vector.broadcast %cst_56 : f32 to vector<16x512xf32>
    %186 = arith.cmpf oge, %156, %185 : vector<16x512xf32>
    %cst_57 = arith.constant 0.000000e+00 : f32
    %187 = vector.broadcast %cst_57 : f32 to vector<16x512xf32>
    %188 = arith.subf %187, %184 : vector<16x512xf32>
    %189 = arith.select %186, %184, %188 : vector<16x512xi1>, vector<16x512xf32>
    %cst_58 = arith.constant 1.000000e+00 : f32
    %190 = vector.broadcast %cst_58 : f32 to vector<16x512xf32>
    %191 = arith.addf %190, %189 : vector<16x512xf32>
    %192 = arith.mulf %154, %191 : vector<16x512xf32>
    %193 = arith.truncf %192 : vector<16x512xf32> to vector<16x512xbf16>
    %c0_59 = arith.constant 0 : index
    %c0_60 = arith.constant 0 : index
    %194 = vector.load %arg5[%c0_59, %c0_60] : memref<512x128xbf16, #tpu.memory_space<vmem>>, vector<512x128xbf16>
    %cst_61 = arith.constant dense<0.000000e+00> : vector<16x128xf32>
    %195 = tpu.matmul %193, %194, %cst_61 {dimension_numbers = #tpu.dot_dimension_numbers<[1], [0], [0], [1], [0, 0, 1, 1], [], []>} : vector<16x512xbf16>, vector<512x128xbf16>, vector<16x128xf32> -> vector<16x128xf32>
    %196 = vector.broadcast %10 : vector<1x128xf32> to vector<16x128xf32>
    %197 = arith.addf %195, %196 : vector<16x128xf32>
    %198 = arith.addf %125, %197 : vector<16x128xf32>
    %199 = vector.shape_cast %198 : vector<16x128xf32> to vector<2x8x128xf32>
    %c0_62 = arith.constant 0 : index
    %c0_63 = arith.constant 0 : index
    %c0_64 = arith.constant 0 : index
    %200 = vector.load %arg6[%c0_62, %c0_63, %c0_64] : memref<2x8x128xf32, #tpu.memory_space<vmem>>, vector<2x8x128xf32>
    tpu.vector_store %arg6[%c0_62, %c0_63, %c0_64], %199 {strides = array<i32>} : memref<2x8x128xf32, #tpu.memory_space<vmem>>, vector<2x8x128xf32>,
    return
  }
}

</mosaic_0001>

<llo_original>
// kernel: transformer_block.1
$region0: #{transformer_block.1}
  #allocation0 [shape = 'u32[]', space=smem, size = 0x4, offset = 0x4, fixed_abs, tag = 'smem constant byte address 0x4 - core index']
  #allocation1 [shape = 'u32[144,128]{1,0:T(1,128)}', space=vmem, size = 0x12000, scoped, tag = 'internal scratch']
  %s0 = inlined_call_operand.hbm [shape: f32[2,8,128], index: 0, kind: input, shape index: {}]
  %s1 = inlined_call_operand.hbm [shape: f32[8,512], index: 1, kind: input, shape index: {}]
  %s2 = inlined_call_operand.hbm [shape: bf16[128,384], index: 2, kind: input, shape index: {}]
  %s3 = inlined_call_operand.hbm [shape: bf16[128,128], index: 3, kind: input, shape index: {}]
  %s4 = inlined_call_operand.hbm [shape: bf16[128,512], index: 4, kind: input, shape index: {}]
  %s5 = inlined_call_operand.hbm [shape: bf16[512,128], index: 5, kind: input, shape index: {}]
  %s6 = inlined_call_operand.hbm [shape: f32[2,8,128], index: 6, kind: output, shape index: {}]
  %s7 = sld [smem:[#allocation0]]
  $region58: #{transformer_block.1} parent=0
    _
  %s9 = ssub.s32 1, %s7
  %s10 = scalar_select 0, %s9, %s7
  $region1: #{transformer_block.1} parent=0
    #allocation2 [shape = 'u8[8192]{0}', space=vmem, size = 0x2000, scoped, tag = 'input window, operand 0, single buffered']
    #allocation3 [shape = 's32[1]{0}', space=sflag, size = 0x4, scoped, tag = 'scoped memory for transformer_block.1']
    #allocation4 [shape = 's32[1]{0}', space=sflag, size = 0x4, scoped, tag = 'scoped memory for transformer_block.1']
    #allocation5 [shape = 'u8[16384]{0}', space=vmem, size = 0x4000, scoped, tag = 'input window, operand 1, single buffered']
    #allocation6 [shape = 's32[1]{0}', space=sflag, size = 0x4, scoped, tag = 'scoped memory for transformer_block.1']
    #allocation7 [shape = 'u8[98304]{0}', space=vmem, size = 0x18000, scoped, tag = 'input window, operand 2, single buffered']
    #allocation8 [shape = 'u8[32768]{0}', space=vmem, size = 0x8000, scoped, tag = 'input window, operand 3, single buffered']
    #allocation9 [shape = 's32[1]{0}', space=sflag, size = 0x4, scoped, tag = 'scoped memory for transformer_block.1']
    #allocation10 [shape = 'u8[131072]{0}', space=vmem, size = 0x20000, scoped, tag = 'input window, operand 4, single buffered']
    #allocation11 [shape = 'u8[131072]{0}', space=vmem, size = 0x20000, scoped, tag = 'input window, operand 5, single buffered']
    #allocation12 [shape = 's32[1]{0}', space=sflag, size = 0x4, scoped, tag = 'scoped memory for transformer_block.1']
    #allocation13 [shape = 'u8[8192]{0}', space=vmem, size = 0x2000, scoped, tag = 'output window, operand 0, single buffered']
    %11 = vsyncpa [#allocation3], 0
    %12 = vsyncpa [#allocation6], 0
    %13 = vsyncpa [#allocation9], 0
    %14 = vsyncpa [#allocation12], 0
    %15 = vsyncpa [#allocation4], 0
    // Predicated region
    $region2: #{transformer_block.1} parent=1 // pred_check
      _
    $region3: #{transformer_block.1} parent=1 // pred_check_branch
      %17 = sbr.rel (0) target = $region5
    $region4: #{transformer_block.1} parent=1 // pred_region
      %s19 = ssub.s32 256, 256
      %20 = vsyncadd [#allocation3], %s19
      %s21 = sshll.u32 [#allocation2], 4
      %s22 = int_to_ptr.vmem [resolvable:$true] %s21
      %27 = dma.hbm_to_vmem [thread:$0]  %s0, 256, %s22, [#allocation3], 128, 128, 8
    $region5: #{transformer_block.1} parent=1 // pred_fallthru
      _
    // Predicated region
    $region6: #{transformer_block.1} parent=1 // pred_check
      _
    $region7: #{transformer_block.1} parent=1 // pred_check_branch
      %29 = sbr.rel (0) target = $region9
    $region8: #{transformer_block.1} parent=1 // pred_region
      %s31 = ssub.s32 512, 512
      %32 = vsyncadd [#allocation6], %s31
      %s34 = sshll.u32 [#allocation5], 4
      %s35 = int_to_ptr.vmem [resolvable:$true] %s34
      %37 = dma.hbm_to_vmem [thread:$0]  %s1, 512, %s35, [#allocation6]
    $region9: #{transformer_block.1} parent=1 // pred_fallthru
      _
    // Predicated region
    $region10: #{transformer_block.1} parent=1 // pred_check
      _
    $region11: #{transformer_block.1} parent=1 // pred_check_branch
      %39 = sbr.rel (0) target = $region13
    $region12: #{transformer_block.1} parent=1 // pred_region
      %s41 = ssub.s32 3072, 3072
      %42 = vsyncadd [#allocation6], %s41
      %s43 = sshll.u32 [#allocation7], 4
      %s44 = int_to_ptr.vmem [resolvable:$true] %s43
      %49 = dma.hbm_to_vmem [thread:$0]  %s2, 3072, %s44, [#allocation6], 192, 192, 12
    $region13: #{transformer_block.1} parent=1 // pred_fallthru
      _
    // Predicated region
    $region14: #{transformer_block.1} parent=1 // pred_check
      _
    $region15: #{transformer_block.1} parent=1 // pred_check_branch
      %51 = sbr.rel (0) target = $region17
    $region16: #{transformer_block.1} parent=1 // pred_region
      %s53 = ssub.s32 1024, 1024
      %54 = vsyncadd [#allocation9], %s53
      %s55 = sshll.u32 [#allocation8], 4
      %s56 = int_to_ptr.vmem [resolvable:$true] %s55
      %61 = dma.hbm_to_vmem [thread:$0]  %s3, 1024, %s56, [#allocation9], 64, 64, 4
    $region17: #{transformer_block.1} parent=1 // pred_fallthru
      _
    // Predicated region
    $region18: #{transformer_block.1} parent=1 // pred_check
      _
    $region19: #{transformer_block.1} parent=1 // pred_check_branch
      %63 = sbr.rel (0) target = $region21
    $region20: #{transformer_block.1} parent=1 // pred_region
      %s65 = ssub.s32 4096, 4096
      %66 = vsyncadd [#allocation9], %s65
      %s67 = sshll.u32 [#allocation10], 4
      %s68 = int_to_ptr.vmem [resolvable:$true] %s67
      %73 = dma.hbm_to_vmem [thread:$0]  %s4, 4096, %s68, [#allocation9], 256, 256, 16
    $region21: #{transformer_block.1} parent=1 // pred_fallthru
      _
    // Predicated region
    $region22: #{transformer_block.1} parent=1 // pred_check
      _
    $region23: #{transformer_block.1} parent=1 // pred_check_branch
      %75 = sbr.rel (0) target = $region25
    $region24: #{transformer_block.1} parent=1 // pred_region
      %s77 = ssub.s32 4096, 4096
      %78 = vsyncadd [#allocation12], %s77
      %s79 = sshll.u32 [#allocation11], 4
      %s80 = int_to_ptr.vmem [resolvable:$true] %s79
      %85 = dma.hbm_to_vmem [thread:$0]  %s5, 4096, %s80, [#allocation12], 64, 64, 4
    $region25: #{transformer_block.1} parent=1 // pred_fallthru
      _
    // Predicated region
    $region26: #{transformer_block.1} parent=1 // pred_check
      _
    $region27: #{transformer_block.1} parent=1 // pred_check_branch
      %87 = sbr.rel (0) target = $region29
    $region28: #{transformer_block.1} parent=1 // pred_region
      %88 = dma.done [#allocation3], 256
    $region29: #{transformer_block.1} parent=1 // pred_fallthru
      _
    // Predicated region
    $region30: #{transformer_block.1} parent=1 // pred_check
      _
    $region31: #{transformer_block.1} parent=1 // pred_check_branch
      %90 = sbr.rel (0) target = $region33
    $region32: #{transformer_block.1} parent=1 // pred_region
      %91 = dma.done [#allocation6], 512
    $region33: #{transformer_block.1} parent=1 // pred_fallthru
      _
    // Predicated region
    $region34: #{transformer_block.1} parent=1 // pred_check
      _
    $region35: #{transformer_block.1} parent=1 // pred_check_branch
      %93 = sbr.rel (0) target = $region37
    $region36: #{transformer_block.1} parent=1 // pred_region
      %94 = dma.done [#allocation6], 3072
    $region37: #{transformer_block.1} parent=1 // pred_fallthru
      _
    // Predicated region
    $region38: #{transformer_block.1} parent=1 // pred_check
      _
    $region39: #{transformer_block.1} parent=1 // pred_check_branch
      %96 = sbr.rel (0) target = $region41
    $region40: #{transformer_block.1} parent=1 // pred_region
      %97 = dma.done [#allocation9], 1024
    $region41: #{transformer_block.1} parent=1 // pred_fallthru
      _
    // Predicated region
    $region42: #{transformer_block.1} parent=1 // pred_check
      _
    $region43: #{transformer_block.1} parent=1 // pred_check_branch
      %99 = sbr.rel (0) target = $region45
    $region44: #{transformer_block.1} parent=1 // pred_region
      %100 = dma.done [#allocation9], 4096
    $region45: #{transformer_block.1} parent=1 // pred_fallthru
      _
    // Predicated region
    $region46: #{transformer_block.1} parent=1 // pred_check
      _
    $region47: #{transformer_block.1} parent=1 // pred_check_branch
      %102 = sbr.rel (0) target = $region49
    $region48: #{transformer_block.1} parent=1 // pred_region
      %103 = dma.done [#allocation12], 4096
    $region49: #{transformer_block.1} parent=1 // pred_fallthru
      _
    %v105 = vld [vmem:[#allocation2] sm:$0xff]
    %v106 = vld [vmem:[#allocation2 + $0x8] sm:$0xff]
    %v107 = vld [vmem:[#allocation5] sm:$0xff]
    %v108 = vld [vmem:[#allocation5 + $0x8] sm:$0xff]
    %v109 = vld [vmem:[#allocation5 + $0x10] sm:$0xff]
    %v110 = vld [vmem:[#allocation5 + $0x18] sm:$0xff]
    %111 = vadd.xlane.f32.xlu0 %v105
    %v112 = vpop.xlane.xlu0 %111
    %113 = vadd.xlane.f32.xlu0 %v106
    %v114 = vpop.xlane.xlu0 %113
    %v115 = vrcp.pop 128.0
    %v116 = vmul.f32 %v112, %v115
    %v117 = vmul.f32 %v114, %v115
    %v118 = vsub.f32 %v105, %v116
    %v119 = vsub.f32 %v106, %v117
    %v120 = vmul.f32 %v118, %v118
    %v121 = vmul.f32 %v119, %v119
    %122 = vadd.xlane.f32.xlu0 %v120
    %v123 = vpop.xlane.xlu0 %122
    %124 = vadd.xlane.f32.xlu0 %v121
    %v125 = vpop.xlane.xlu0 %124
    %v126 = vmul.f32 %v123, %v115
    %v127 = vmul.f32 %v125, %v115
    %v128 = vadd.f32 %v126, 1e-05
    %v129 = vadd.f32 %v127, 1e-05
    %v130 = vrsqrt.pop %v128
    %v131 = vrsqrt.pop %v129
    %v132 = vmul.f32 %v118, %v130
    %v133 = vmul.f32 %v119, %v131
    %v134 = vlaneseq
    %v135 = vshrl.u32 %v134, 7
    %v136 = vsub.s32 0, %v135
    %v137 = vrot.slane %v107, %v136
    %v138 = vmul.f32 %v132, %v137
    %v139 = vmul.f32 %v133, %v137
    %v140 = vlaneseq
    %v141 = vshrl.u32 %v140, 7
    %v142 = vsub.s32 1, %v141
    %v143 = vrot.slane %v107, %v142
    %v144 = vadd.f32 %v138, %v143
    %v145 = vadd.f32 %v139, %v143
    %v146 = vpack.c.bf16 %v145, %v144
    %v147 = vld [vmem:[#allocation7] sm:$0xff]
    %v148 = vld [vmem:[#allocation7 + $0x8] sm:$0xf]
    %v149 = vld [vmem:[#allocation7 + $0xc] sm:$0xff]
    %v150 = vld [vmem:[#allocation7 + $0x14] sm:$0xf]
    %v151 = vld [vmem:[#allocation7 + $0x18] sm:$0xff]
    %v152 = vld [vmem:[#allocation7 + $0x20] sm:$0xf]
    %v153 = vld [vmem:[#allocation7 + $0x24] sm:$0xff]
    %v154 = vld [vmem:[#allocation7 + $0x2c] sm:$0xf]
    %v155 = vld [vmem:[#allocation7 + $0x30] sm:$0xff]
    %v156 = vld [vmem:[#allocation7 + $0x38] sm:$0xf]
    %v157 = vld [vmem:[#allocation7 + $0x3c] sm:$0xff]
    %v158 = vld [vmem:[#allocation7 + $0x44] sm:$0xf]
    %v159 = vld [vmem:[#allocation7 + $0x48] sm:$0xff]
    %v160 = vld [vmem:[#allocation7 + $0x50] sm:$0xf]
    %v161 = vld [vmem:[#allocation7 + $0x54] sm:$0xff]
    %v162 = vld [vmem:[#allocation7 + $0x5c] sm:$0xf]
    %v163 = vld [vmem:[#allocation7 + $0x60] sm:$0xff]
    %v164 = vld [vmem:[#allocation7 + $0x68] sm:$0xf]
    %v165 = vld [vmem:[#allocation7 + $0x6c] sm:$0xff]
    %v166 = vld [vmem:[#allocation7 + $0x74] sm:$0xf]
    %v167 = vld [vmem:[#allocation7 + $0x78] sm:$0xff]
    %v168 = vld [vmem:[#allocation7 + $0x80] sm:$0xf]
    %v169 = vld [vmem:[#allocation7 + $0x84] sm:$0xff]
    %v170 = vld [vmem:[#allocation7 + $0x8c] sm:$0xf]
    %v171 = vld [vmem:[#allocation7 + $0x90] sm:$0xff]
    %v172 = vld [vmem:[#allocation7 + $0x98] sm:$0xf]
    %v173 = vld [vmem:[#allocation7 + $0x9c] sm:$0xff]
    %v174 = vld [vmem:[#allocation7 + $0xa4] sm:$0xf]
    %v175 = vld [vmem:[#allocation7 + $0xa8] sm:$0xff]
    %v176 = vld [vmem:[#allocation7 + $0xb0] sm:$0xf]
    %v177 = vld [vmem:[#allocation7 + $0xb4] sm:$0xff]
    %v178 = vld [vmem:[#allocation7 + $0xbc] sm:$0xf]
    %v179 = vlaneseq
    %v180 = vshrl.u32 %v179, 7
    %v181 = vsub.s32 4, %v180
    %v182 = vrot.slane %v107, %v181
    %v183 = vlaneseq
    %v184 = vshrl.u32 %v183, 7
    %v185 = vsub.s32 4, %v184
    %v186 = vrot.slane %v108, %v185
    %v187 = vlaneseq
    %v188 = vshrl.u32 %v187, 7
    %v189 = vsub.s32 4, %v188
    %v190 = vrot.slane %v109, %v189
    %v223 = vunpack.c.l.b16 %v147
    %v224 = vunpack.c.h.b16 %v147
    %v225 = vunpack.c.l.b16 %v148
    %v226 = vunpack.c.l.b16 %v149
    %v227 = vunpack.c.h.b16 %v149
    %v228 = vunpack.c.l.b16 %v150
    %v229 = vunpack.c.l.b16 %v151
    %v230 = vunpack.c.h.b16 %v151
    %v231 = vunpack.c.l.b16 %v152
    %v232 = vunpack.c.l.b16 %v153
    %v233 = vunpack.c.h.b16 %v153
    %v234 = vunpack.c.l.b16 %v154
    %v235 = vunpack.c.l.b16 %v155
    %v236 = vunpack.c.h.b16 %v155
    %v237 = vunpack.c.l.b16 %v156
    %v238 = vunpack.c.l.b16 %v157
    %v239 = vunpack.c.h.b16 %v157
    %v240 = vunpack.c.l.b16 %v158
    %v241 = vunpack.c.l.b16 %v159
    %v242 = vunpack.c.h.b16 %v159
    %v243 = vunpack.c.l.b16 %v160
    %v244 = vunpack.c.l.b16 %v161
    %v245 = vunpack.c.h.b16 %v161
    %v246 = vunpack.c.l.b16 %v162
    %v247 = vunpack.c.l.b16 %v163
    %v248 = vunpack.c.h.b16 %v163
    %v249 = vunpack.c.l.b16 %v164
    %v250 = vunpack.c.l.b16 %v165
    %v251 = vunpack.c.h.b16 %v165
    %v252 = vunpack.c.l.b16 %v166
    %v253 = vunpack.c.l.b16 %v167
    %v254 = vunpack.c.h.b16 %v167
    %v255 = vunpack.c.l.b16 %v168
    %v256 = vunpack.c.l.b16 %v169
    %v257 = vunpack.c.h.b16 %v169
    %v258 = vunpack.c.l.b16 %v170
    %v259 = vunpack.c.l.b16 %v171
    %v260 = vunpack.c.h.b16 %v171
    %v261 = vunpack.c.l.b16 %v172
    %v262 = vunpack.c.l.b16 %v173
    %v263 = vunpack.c.h.b16 %v173
    %v264 = vunpack.c.l.b16 %v174
    %v265 = vunpack.c.l.b16 %v175
    %v266 = vunpack.c.h.b16 %v175
    %v267 = vunpack.c.l.b16 %v176
    %v268 = vunpack.c.l.b16 %v177
    %v269 = vunpack.c.h.b16 %v177
    %v270 = vunpack.c.l.b16 %v178
    %v271 = vpack.c.b16 %v226, %v223
    %v272 = vpack.c.b16 %v227, %v224
    %v273 = vpack.c.b16 %v228, %v225
    %v274 = vpack.c.b16 %v232, %v229
    %v275 = vpack.c.b16 %v233, %v230
    %v276 = vpack.c.b16 %v234, %v231
    %v277 = vpack.c.b16 %v238, %v235
    %v278 = vpack.c.b16 %v239, %v236
    %v279 = vpack.c.b16 %v240, %v237
    %v280 = vpack.c.b16 %v244, %v241
    %v281 = vpack.c.b16 %v245, %v242
    %v282 = vpack.c.b16 %v246, %v243
    %v283 = vpack.c.b16 %v250, %v247
    %v284 = vpack.c.b16 %v251, %v248
    %v285 = vpack.c.b16 %v252, %v249
    %v286 = vpack.c.b16 %v256, %v253
    %v287 = vpack.c.b16 %v257, %v254
    %v288 = vpack.c.b16 %v258, %v255
    %v289 = vpack.c.b16 %v262, %v259
    %v290 = vpack.c.b16 %v263, %v260
    %v291 = vpack.c.b16 %v264, %v261
    %v292 = vpack.c.b16 %v268, %v265
    %v293 = vpack.c.b16 %v269, %v266
    %v294 = vpack.c.b16 %v270, %v267
    %319 = vmatprep.subr.bf16.mxu0 %v272
    %320 = vmatpush1.bf16.msra.mxu0 %v271
    %321 = vmatprep.subr.bf16.mxu0 %v275
    %322 = vmatpush1.bf16.msra.mxu0 %v274
    %323 = vmatprep.subr.bf16.mxu0 %v278
    %324 = vmatpush1.bf16.msra.mxu0 %v277
    %325 = vmatprep.subr.bf16.mxu0 %v281
    %326 = vmatpush1.bf16.msra.mxu0 %v280
    %327 = vmatprep.subr.bf16.mxu0 %v284
    %328 = vmatpush1.bf16.msra.mxu0 %v283
    %329 = vmatprep.subr.bf16.mxu0 %v287
    %330 = vmatpush1.bf16.msra.mxu0 %v286
    %331 = vmatprep.subr.bf16.mxu0 %v290
    %332 = vmatpush1.bf16.msra.mxu0 %v289
    %333 = vmatprep.subr.bf16.mxu0 %v293
    %334 = vmatpush1.bf16.msra.mxu0 %v292
    %335 = vmatprep.subr.bf16.mxu0 0
    %336 = vmatpush1.bf16.msra.mxu0 0
    %337 = vmatprep.subr.bf16.mxu0 0
    %338 = vmatpush1.bf16.msra.mxu0 0
    %339 = vmatprep.subr.bf16.mxu0 0
    %340 = vmatpush1.bf16.msra.mxu0 0
    %341 = vmatprep.subr.bf16.mxu0 0
    %342 = vmatpush1.bf16.msra.mxu0 0
    %343 = vmatprep.subr.bf16.mxu0 0
    %344 = vmatpush1.bf16.msra.mxu0 0
    %345 = vmatprep.subr.bf16.mxu0 0
    %346 = vmatpush1.bf16.msra.mxu0 0
    %347 = vmatprep.subr.bf16.mxu0 0
    %348 = vmatpush1.bf16.msra.mxu0 0
    %349 = vmatprep.subr.bf16.mxu0 0
    %350 = vmatpush1.bf16.msra.mxu0 0
    %351 = vmatprep.mubr.bf16.mxu0 0
    %352 = vmatmul.mubr.bf16.gmra.mrb[0].mxu0 %v146
    %v353 = vpop.f32.mrb[0].mxu0
    %v354 = vadd.f32 %v182, %v353
    %v355 = vpop.f32.mrb[0].mxu0
    %v356 = vadd.f32 %v186, %v355
    %v357 = vpop.f32.mrb[0].mxu0
    %v358 = vadd.f32 %v182, %v357
    %v359 = vpop.f32.mrb[0].mxu0
    %v360 = vadd.f32 %v186, %v359
    %361 = vdwg.mxu0
    %362 = vmatprep.subr.bf16.mxu0 0
    %363 = vmatpush1.bf16.msra.mxu0 %v273
    %364 = vmatprep.subr.bf16.mxu0 0
    %365 = vmatpush1.bf16.msra.mxu0 %v276
    %366 = vmatprep.subr.bf16.mxu0 0
    %367 = vmatpush1.bf16.msra.mxu0 %v279
    %368 = vmatprep.subr.bf16.mxu0 0
    %369 = vmatpush1.bf16.msra.mxu0 %v282
    %370 = vmatprep.subr.bf16.mxu0 0
    %371 = vmatpush1.bf16.msra.mxu0 %v285
    %372 = vmatprep.subr.bf16.mxu0 0
    %373 = vmatpush1.bf16.msra.mxu0 %v288
    %374 = vmatprep.subr.bf16.mxu0 0
    %375 = vmatpush1.bf16.msra.mxu0 %v291
    %376 = vmatprep.subr.bf16.mxu0 0
    %377 = vmatpush1.bf16.msra.mxu0 %v294
    %378 = vmatprep.subr.bf16.mxu0 0
    %379 = vmatpush1.bf16.msra.mxu0 0
    %380 = vmatprep.subr.bf16.mxu0 0
    %381 = vmatpush1.bf16.msra.mxu0 0
    %382 = vmatprep.subr.bf16.mxu0 0
    %383 = vmatpush1.bf16.msra.mxu0 0
    %384 = vmatprep.subr.bf16.mxu0 0
    %385 = vmatpush1.bf16.msra.mxu0 0
    %386 = vmatprep.subr.bf16.mxu0 0
    %387 = vmatpush1.bf16.msra.mxu0 0
    %388 = vmatprep.subr.bf16.mxu0 0
    %389 = vmatpush1.bf16.msra.mxu0 0
    %390 = vmatprep.subr.bf16.mxu0 0
    %391 = vmatpush1.bf16.msra.mxu0 0
    %392 = vmatprep.subr.bf16.mxu0 0
    %393 = vmatpush1.bf16.msra.mxu0 0
    %394 = vmatprep.mubr.bf16.mxu0 0
    %395 = vmatmul.mubr.bf16.gmra.mrb[0].mxu0 %v146
    %v396 = vpop.f32.mrb[0].mxu0
    %v397 = vadd.f32 %v190, %v396
    %v398 = vpop.f32.mrb[0].mxu0
    %v399 = vpop.f32.mrb[0].mxu0
    %v400 = vadd.f32 %v190, %v399
    %v401 = vpop.f32.mrb[0].mxu0
    %402 = vdwg.mxu0
    %vm403 = vcmask 261120
    %v405 = vsel %vm403, %v354, 0
    %v408 = vsel %vm403, %v356, 0
    %410 = vmatprep.subr.mxu0 0.0
    %411 = vmatpush1.xpose.msra.mxu0 %v408
    %412 = vmatprep.subr.mxu0 0.0
    %413 = vmatpush1.xpose.msra.mxu0 0.0
    %414 = vmatprep.subr.mxu0 0.0
    %415 = vmatpush1.xpose.msra.mxu0 0.0
    %416 = vmatprep.subr.mxu0 0.0
    %417 = vmatpush1.xpose.msra.mxu0 0.0
    %418 = vmatprep.subr.mxu0 0.0
    %419 = vmatpush1.xpose.msra.mxu0 0.0
    %420 = vmatprep.subr.mxu0 0.0
    %421 = vmatpush1.xpose.msra.mxu0 0.0
    %422 = vmatprep.subr.mxu0 0.0
    %423 = vmatpush1.xpose.msra.mxu0 0.0
    %424 = vmatprep.subr.mxu0 0.0
    %425 = vmatpush1.xpose.msra.mxu0 0.0
    %426 = vmatprep.subr.mxu0 0.0
    %427 = vmatpush1.xpose.msra.mxu0 0.0
    %428 = vmatprep.subr.mxu0 0.0
    %429 = vmatpush1.xpose.msra.mxu0 0.0
    %430 = vmatprep.subr.mxu0 0.0
    %431 = vmatpush1.xpose.msra.mxu0 0.0
    %432 = vmatprep.subr.mxu0 0.0
    %433 = vmatpush1.xpose.msra.mxu0 0.0
    %434 = vmatprep.subr.mxu0 0.0
    %435 = vmatpush1.xpose.msra.mxu0 0.0
    %436 = vmatprep.subr.mxu0 0.0
    %437 = vmatpush1.xpose.msra.mxu0 0.0
    %438 = vmatprep.subr.mxu0 0.0
    %439 = vmatpush1.xpose.msra.mxu0 0.0
    %440 = vmatprep.subr.mxu0 0.0
    %441 = vmatpush1.xpose.msra.mxu0 0.0
    %442 = vmatprep.subr.mxu0 0.0
    %443 = vmatpush1.xpose.msra.mxu0 0.0
    %444 = vmatprep.subr.mxu0 0.0
    %445 = vmatpush1.xpose.msra.mxu0 0.0
    %446 = vmatprep.subr.mxu0 0.0
    %447 = vmatpush1.xpose.msra.mxu0 0.0
    %448 = vmatprep.subr.mxu0 0.0
    %449 = vmatpush1.xpose.msra.mxu0 0.0
    %450 = vmatprep.subr.mxu0 0.0
    %451 = vmatpush1.xpose.msra.mxu0 0.0
    %452 = vmatprep.subr.mxu0 0.0
    %453 = vmatpush1.xpose.msra.mxu0 0.0
    %454 = vmatprep.subr.mxu0 0.0
    %455 = vmatpush1.xpose.msra.mxu0 0.0
    %456 = vmatprep.subr.mxu0 0.0
    %457 = vmatpush1.xpose.msra.mxu0 0.0
    %458 = vmatprep.subr.mxu0 0.0
    %459 = vmatpush1.xpose.msra.mxu0 0.0
    %460 = vmatprep.subr.mxu0 0.0
    %461 = vmatpush1.xpose.msra.mxu0 0.0
    %462 = vmatprep.subr.mxu0 0.0
    %463 = vmatpush1.xpose.msra.mxu0 0.0
    %464 = vmatprep.subr.mxu0 0.0
    %465 = vmatpush1.xpose.msra.mxu0 0.0
    %466 = vmatprep.subr.mxu0 0.0
    %467 = vmatpush1.xpose.msra.mxu0 0.0
    %468 = vmatprep.subr.mxu0 0.0
    %469 = vmatpush1.xpose.msra.mxu0 0.0
    %470 = vmatprep.subr.mxu0 0.0
    %471 = vmatpush1.xpose.msra.mxu0 0.0
    %472 = vmatprep.subr.mxu0 0.0
    %473 = vmatpush1.xpose.msra.mxu0 0.0
    %474 = vmatprep.mubr.f32.mxu0 0.0
    %475 = vmatmul.mubr.f32.gmra.mrb[0].mxu0 %v405
    %v476 = vpop.f32.mrb[0].mxu0
    %v477 = vadd.f32 0.0, %v476
    %v478 = vpop.f32.mrb[0].mxu0
    %479 = vdwg.mxu0
    %v481 = vsel %vm403, %v358, 0
    %v484 = vsel %vm403, %v360, 0
    %486 = vmatprep.subr.mxu0 0.0
    %487 = vmatpush1.xpose.msra.mxu0 %v484
    %488 = vmatprep.subr.mxu0 0.0
    %489 = vmatpush1.xpose.msra.mxu0 0.0
    %490 = vmatprep.subr.mxu0 0.0
    %491 = vmatpush1.xpose.msra.mxu0 0.0
    %492 = vmatprep.subr.mxu0 0.0
    %493 = vmatpush1.xpose.msra.mxu0 0.0
    %494 = vmatprep.subr.mxu0 0.0
    %495 = vmatpush1.xpose.msra.mxu0 0.0
    %496 = vmatprep.subr.mxu0 0.0
    %497 = vmatpush1.xpose.msra.mxu0 0.0
    %498 = vmatprep.subr.mxu0 0.0
    %499 = vmatpush1.xpose.msra.mxu0 0.0
    %500 = vmatprep.subr.mxu0 0.0
    %501 = vmatpush1.xpose.msra.mxu0 0.0
    %502 = vmatprep.subr.mxu0 0.0
    %503 = vmatpush1.xpose.msra.mxu0 0.0
    %504 = vmatprep.subr.mxu0 0.0
    %505 = vmatpush1.xpose.msra.mxu0 0.0
    %506 = vmatprep.subr.mxu0 0.0
    %507 = vmatpush1.xpose.msra.mxu0 0.0
    %508 = vmatprep.subr.mxu0 0.0
    %509 = vmatpush1.xpose.msra.mxu0 0.0
    %510 = vmatprep.subr.mxu0 0.0
    %511 = vmatpush1.xpose.msra.mxu0 0.0
    %512 = vmatprep.subr.mxu0 0.0
    %513 = vmatpush1.xpose.msra.mxu0 0.0
    %514 = vmatprep.subr.mxu0 0.0
    %515 = vmatpush1.xpose.msra.mxu0 0.0
    %516 = vmatprep.subr.mxu0 0.0
    %517 = vmatpush1.xpose.msra.mxu0 0.0
    %518 = vmatprep.subr.mxu0 0.0
    %519 = vmatpush1.xpose.msra.mxu0 0.0
    %520 = vmatprep.subr.mxu0 0.0
    %521 = vmatpush1.xpose.msra.mxu0 0.0
    %522 = vmatprep.subr.mxu0 0.0
    %523 = vmatpush1.xpose.msra.mxu0 0.0
    %524 = vmatprep.subr.mxu0 0.0
    %525 = vmatpush1.xpose.msra.mxu0 0.0
    %526 = vmatprep.subr.mxu0 0.0
    %527 = vmatpush1.xpose.msra.mxu0 0.0
    %528 = vmatprep.subr.mxu0 0.0
    %529 = vmatpush1.xpose.msra.mxu0 0.0
    %530 = vmatprep.subr.mxu0 0.0
    %531 = vmatpush1.xpose.msra.mxu0 0.0
    %532 = vmatprep.subr.mxu0 0.0
    %533 = vmatpush1.xpose.msra.mxu0 0.0
    %534 = vmatprep.subr.mxu0 0.0
    %535 = vmatpush1.xpose.msra.mxu0 0.0
    %536 = vmatprep.subr.mxu0 0.0
    %537 = vmatpush1.xpose.msra.mxu0 0.0
    %538 = vmatprep.subr.mxu0 0.0
    %539 = vmatpush1.xpose.msra.mxu0 0.0
    %540 = vmatprep.subr.mxu0 0.0
    %541 = vmatpush1.xpose.msra.mxu0 0.0
    %542 = vmatprep.subr.mxu0 0.0
    %543 = vmatpush1.xpose.msra.mxu0 0.0
    %544 = vmatprep.subr.mxu0 0.0
    %545 = vmatpush1.xpose.msra.mxu0 0.0
    %546 = vmatprep.subr.mxu0 0.0
    %547 = vmatpush1.xpose.msra.mxu0 0.0
    %548 = vmatprep.subr.mxu0 0.0
    %549 = vmatpush1.xpose.msra.mxu0 0.0
    %550 = vmatprep.mubr.f32.mxu0 0.0
    %551 = vmatmul.mubr.f32.gmra.mrb[0].mxu0 %v481
    %v552 = vpop.f32.mrb[0].mxu0
    %v553 = vadd.f32 0.0, %v552
    %v554 = vpop.f32.mrb[0].mxu0
    %555 = vdwg.mxu0
    %vm556 = vcmask 64512
    %v557 = vsel %vm556, %v477, -inf
    %558 = vmax.xlane.f32.xlu0 %v557
    %v559 = vpop.xlane.xlu0 %558
    %v560 = vsel %vm556, %v553, -inf
    %561 = vmax.xlane.f32.xlu0 %v560
    %v562 = vpop.xlane.xlu0 %561
    %v563 = vsub.f32 %v477, %v559
    %v564 = vsub.f32 %v553, %v562
    %v565 = vmul.f32 %v563, 1.442695
    %v566 = vpow.pop %v565
    %v567 = vmul.f32 %v564, 1.442695
    %v568 = vpow.pop %v567
    %v569 = vsel %vm556, %v566, 0.0
    %570 = vadd.xlane.f32.xlu0 %v569
    %v571 = vpop.xlane.xlu0 %570
    %v572 = vsel %vm556, %v568, 0.0
    %573 = vadd.xlane.f32.xlu0 %v572
    %v574 = vpop.xlane.xlu0 %573
    %v575 = vrcp.pop %v571
    %v576 = vrcp.pop %v574
    %v577 = vmul.f32 %v566, %v575
    %v578 = vmul.f32 %v568, %v576
    %v580 = vsel %vm556, %v577, 0
    %582 = vmatprep.subr.mxu0 0.0
    %583 = vmatpush1.msra.mxu0 %v397
    %584 = vmatprep.subr.mxu0 0.0
    %585 = vmatpush1.msra.mxu0 0.0
    %586 = vmatprep.subr.mxu0 0.0
    %587 = vmatpush1.msra.mxu0 0.0
    %588 = vmatprep.subr.mxu0 0.0
    %589 = vmatpush1.msra.mxu0 0.0
    %590 = vmatprep.subr.mxu0 0.0
    %591 = vmatpush1.msra.mxu0 0.0
    %592 = vmatprep.subr.mxu0 0.0
    %593 = vmatpush1.msra.mxu0 0.0
    %594 = vmatprep.subr.mxu0 0.0
    %595 = vmatpush1.msra.mxu0 0.0
    %596 = vmatprep.subr.mxu0 0.0
    %597 = vmatpush1.msra.mxu0 0.0
    %598 = vmatprep.subr.mxu0 0.0
    %599 = vmatpush1.msra.mxu0 0.0
    %600 = vmatprep.subr.mxu0 0.0
    %601 = vmatpush1.msra.mxu0 0.0
    %602 = vmatprep.subr.mxu0 0.0
    %603 = vmatpush1.msra.mxu0 0.0
    %604 = vmatprep.subr.mxu0 0.0
    %605 = vmatpush1.msra.mxu0 0.0
    %606 = vmatprep.subr.mxu0 0.0
    %607 = vmatpush1.msra.mxu0 0.0
    %608 = vmatprep.subr.mxu0 0.0
    %609 = vmatpush1.msra.mxu0 0.0
    %610 = vmatprep.subr.mxu0 0.0
    %611 = vmatpush1.msra.mxu0 0.0
    %612 = vmatprep.subr.mxu0 0.0
    %613 = vmatpush1.msra.mxu0 0.0
    %614 = vmatprep.subr.mxu0 0.0
    %615 = vmatpush1.msra.mxu0 0.0
    %616 = vmatprep.subr.mxu0 0.0
    %617 = vmatpush1.msra.mxu0 0.0
    %618 = vmatprep.subr.mxu0 0.0
    %619 = vmatpush1.msra.mxu0 0.0
    %620 = vmatprep.subr.mxu0 0.0
    %621 = vmatpush1.msra.mxu0 0.0
    %622 = vmatprep.subr.mxu0 0.0
    %623 = vmatpush1.msra.mxu0 0.0
    %624 = vmatprep.subr.mxu0 0.0
    %625 = vmatpush1.msra.mxu0 0.0
    %626 = vmatprep.subr.mxu0 0.0
    %627 = vmatpush1.msra.mxu0 0.0
    %628 = vmatprep.subr.mxu0 0.0
    %629 = vmatpush1.msra.mxu0 0.0
    %630 = vmatprep.subr.mxu0 0.0
    %631 = vmatpush1.msra.mxu0 0.0
    %632 = vmatprep.subr.mxu0 0.0
    %633 = vmatpush1.msra.mxu0 0.0
    %634 = vmatprep.subr.mxu0 0.0
    %635 = vmatpush1.msra.mxu0 0.0
    %636 = vmatprep.subr.mxu0 0.0
    %637 = vmatpush1.msra.mxu0 0.0
    %638 = vmatprep.subr.mxu0 0.0
    %639 = vmatpush1.msra.mxu0 0.0
    %640 = vmatprep.subr.mxu0 0.0
    %641 = vmatpush1.msra.mxu0 0.0
    %642 = vmatprep.subr.mxu0 0.0
    %643 = vmatpush1.msra.mxu0 0.0
    %644 = vmatprep.subr.mxu0 0.0
    %645 = vmatpush1.msra.mxu0 0.0
    %646 = vmatprep.mubr.f32.mxu0 0.0
    %647 = vmatmul.mubr.f32.gmra.mrb[0].mxu0 %v580
    %v648 = vpop.f32.mrb[0].mxu0
    %v649 = vadd.f32 0.0, %v648
    %v650 = vpop.f32.mrb[0].mxu0
    %651 = vdwg.mxu0
    %v653 = vsel %vm556, %v578, 0
    %655 = vmatprep.subr.mxu0 0.0
    %656 = vmatpush1.msra.mxu0 %v400
    %657 = vmatprep.subr.mxu0 0.0
    %658 = vmatpush1.msra.mxu0 0.0
    %659 = vmatprep.subr.mxu0 0.0
    %660 = vmatpush1.msra.mxu0 0.0
    %661 = vmatprep.subr.mxu0 0.0
    %662 = vmatpush1.msra.mxu0 0.0
    %663 = vmatprep.subr.mxu0 0.0
    %664 = vmatpush1.msra.mxu0 0.0
    %665 = vmatprep.subr.mxu0 0.0
    %666 = vmatpush1.msra.mxu0 0.0
    %667 = vmatprep.subr.mxu0 0.0
    %668 = vmatpush1.msra.mxu0 0.0
    %669 = vmatprep.subr.mxu0 0.0
    %670 = vmatpush1.msra.mxu0 0.0
    %671 = vmatprep.subr.mxu0 0.0
    %672 = vmatpush1.msra.mxu0 0.0
    %673 = vmatprep.subr.mxu0 0.0
    %674 = vmatpush1.msra.mxu0 0.0
    %675 = vmatprep.subr.mxu0 0.0
    %676 = vmatpush1.msra.mxu0 0.0
    %677 = vmatprep.subr.mxu0 0.0
    %678 = vmatpush1.msra.mxu0 0.0
    %679 = vmatprep.subr.mxu0 0.0
    %680 = vmatpush1.msra.mxu0 0.0
    %681 = vmatprep.subr.mxu0 0.0
    %682 = vmatpush1.msra.mxu0 0.0
    %683 = vmatprep.subr.mxu0 0.0
    %684 = vmatpush1.msra.mxu0 0.0
    %685 = vmatprep.subr.mxu0 0.0
    %686 = vmatpush1.msra.mxu0 0.0
    %687 = vmatprep.subr.mxu0 0.0
    %688 = vmatpush1.msra.mxu0 0.0
    %689 = vmatprep.subr.mxu0 0.0
    %690 = vmatpush1.msra.mxu0 0.0
    %691 = vmatprep.subr.mxu0 0.0
    %692 = vmatpush1.msra.mxu0 0.0
    %693 = vmatprep.subr.mxu0 0.0
    %694 = vmatpush1.msra.mxu0 0.0
    %695 = vmatprep.subr.mxu0 0.0
    %696 = vmatpush1.msra.mxu0 0.0
    %697 = vmatprep.subr.mxu0 0.0
    %698 = vmatpush1.msra.mxu0 0.0
    %699 = vmatprep.subr.mxu0 0.0
    %700 = vmatpush1.msra.mxu0 0.0
    %701 = vmatprep.subr.mxu0 0.0
    %702 = vmatpush1.msra.mxu0 0.0
    %703 = vmatprep.subr.mxu0 0.0
    %704 = vmatpush1.msra.mxu0 0.0
    %705 = vmatprep.subr.mxu0 0.0
    %706 = vmatpush1.msra.mxu0 0.0
    %707 = vmatprep.subr.mxu0 0.0
    %708 = vmatpush1.msra.mxu0 0.0
    %709 = vmatprep.subr.mxu0 0.0
    %710 = vmatpush1.msra.mxu0 0.0
    %711 = vmatprep.subr.mxu0 0.0
    %712 = vmatpush1.msra.mxu0 0.0
    %713 = vmatprep.subr.mxu0 0.0
    %714 = vmatpush1.msra.mxu0 0.0
    %715 = vmatprep.subr.mxu0 0.0
    %716 = vmatpush1.msra.mxu0 0.0
    %717 = vmatprep.subr.mxu0 0.0
    %718 = vmatpush1.msra.mxu0 0.0
    %719 = vmatprep.mubr.f32.mxu0 0.0
    %720 = vmatmul.mubr.f32.gmra.mrb[0].mxu0 %v653
    %v721 = vpop.f32.mrb[0].mxu0
    %v722 = vadd.f32 0.0, %v721
    %v723 = vpop.f32.mrb[0].mxu0
    %724 = vdwg.mxu0
    %v725 = vpack.c.bf16 %v722, %v649
    %v726 = vld [vmem:[#allocation8] sm:$0xf]
    %v727 = vld [vmem:[#allocation8 + $0x4] sm:$0xf]
    %v728 = vld [vmem:[#allocation8 + $0x8] sm:$0xf]
    %v729 = vld [vmem:[#allocation8 + $0xc] sm:$0xf]
    %730 = vrot.lane.b32.xlu0 %v354, 96
    %v731 = vpop.permute.xlu0 %730
    %732 = vrot.lane.b32.xlu0 %v356, 96
    %v733 = vpop.permute.xlu0 %732
    %v734 = vsel %vm403, %v731, 0
    %v736 = vsel %vm403, %v733, 0
    %738 = vmatprep.subr.mxu0 0.0
    %739 = vmatpush1.xpose.msra.mxu0 %v736
    %740 = vmatprep.subr.mxu0 0.0
    %741 = vmatpush1.xpose.msra.mxu0 0.0
    %742 = vmatprep.subr.mxu0 0.0
    %743 = vmatpush1.xpose.msra.mxu0 0.0
    %744 = vmatprep.subr.mxu0 0.0
    %745 = vmatpush1.xpose.msra.mxu0 0.0
    %746 = vmatprep.subr.mxu0 0.0
    %747 = vmatpush1.xpose.msra.mxu0 0.0
    %748 = vmatprep.subr.mxu0 0.0
    %749 = vmatpush1.xpose.msra.mxu0 0.0
    %750 = vmatprep.subr.mxu0 0.0
    %751 = vmatpush1.xpose.msra.mxu0 0.0
    %752 = vmatprep.subr.mxu0 0.0
    %753 = vmatpush1.xpose.msra.mxu0 0.0
    %754 = vmatprep.subr.mxu0 0.0
    %755 = vmatpush1.xpose.msra.mxu0 0.0
    %756 = vmatprep.subr.mxu0 0.0
    %757 = vmatpush1.xpose.msra.mxu0 0.0
    %758 = vmatprep.subr.mxu0 0.0
    %759 = vmatpush1.xpose.msra.mxu0 0.0
    %760 = vmatprep.subr.mxu0 0.0
    %761 = vmatpush1.xpose.msra.mxu0 0.0
    %762 = vmatprep.subr.mxu0 0.0
    %763 = vmatpush1.xpose.msra.mxu0 0.0
    %764 = vmatprep.subr.mxu0 0.0
    %765 = vmatpush1.xpose.msra.mxu0 0.0
    %766 = vmatprep.subr.mxu0 0.0
    %767 = vmatpush1.xpose.msra.mxu0 0.0
    %768 = vmatprep.subr.mxu0 0.0
    %769 = vmatpush1.xpose.msra.mxu0 0.0
    %770 = vmatprep.subr.mxu0 0.0
    %771 = vmatpush1.xpose.msra.mxu0 0.0
    %772 = vmatprep.subr.mxu0 0.0
    %773 = vmatpush1.xpose.msra.mxu0 0.0
    %774 = vmatprep.subr.mxu0 0.0
    %775 = vmatpush1.xpose.msra.mxu0 0.0
    %776 = vmatprep.subr.mxu0 0.0
    %777 = vmatpush1.xpose.msra.mxu0 0.0
    %778 = vmatprep.subr.mxu0 0.0
    %779 = vmatpush1.xpose.msra.mxu0 0.0
    %780 = vmatprep.subr.mxu0 0.0
    %781 = vmatpush1.xpose.msra.mxu0 0.0
    %782 = vmatprep.subr.mxu0 0.0
    %783 = vmatpush1.xpose.msra.mxu0 0.0
    %784 = vmatprep.subr.mxu0 0.0
    %785 = vmatpush1.xpose.msra.mxu0 0.0
    %786 = vmatprep.subr.mxu0 0.0
    %787 = vmatpush1.xpose.msra.mxu0 0.0
    %788 = vmatprep.subr.mxu0 0.0
    %789 = vmatpush1.xpose.msra.mxu0 0.0
    %790 = vmatprep.subr.mxu0 0.0
    %791 = vmatpush1.xpose.msra.mxu0 0.0
    %792 = vmatprep.subr.mxu0 0.0
    %793 = vmatpush1.xpose.msra.mxu0 0.0
    %794 = vmatprep.subr.mxu0 0.0
    %795 = vmatpush1.xpose.msra.mxu0 0.0
    %796 = vmatprep.subr.mxu0 0.0
    %797 = vmatpush1.xpose.msra.mxu0 0.0
    %798 = vmatprep.subr.mxu0 0.0
    %799 = vmatpush1.xpose.msra.mxu0 0.0
    %800 = vmatprep.subr.mxu0 0.0
    %801 = vmatpush1.xpose.msra.mxu0 0.0
    %802 = vmatprep.mubr.f32.mxu0 0.0
    %803 = vmatmul.mubr.f32.gmra.mrb[0].mxu0 %v734
    %v804 = vpop.f32.mrb[0].mxu0
    %v805 = vadd.f32 0.0, %v804
    %v806 = vpop.f32.mrb[0].mxu0
    %807 = vdwg.mxu0
    %808 = vrot.lane.b32.xlu0 %v358, 96
    %v809 = vpop.permute.xlu0 %808
    %810 = vrot.lane.b32.xlu0 %v360, 96
    %v811 = vpop.permute.xlu0 %810
    %v812 = vsel %vm403, %v809, 0
    %v814 = vsel %vm403, %v811, 0
    %816 = vmatprep.subr.mxu0 0.0
    %817 = vmatpush1.xpose.msra.mxu0 %v814
    %818 = vmatprep.subr.mxu0 0.0
    %819 = vmatpush1.xpose.msra.mxu0 0.0
    %820 = vmatprep.subr.mxu0 0.0
    %821 = vmatpush1.xpose.msra.mxu0 0.0
    %822 = vmatprep.subr.mxu0 0.0
    %823 = vmatpush1.xpose.msra.mxu0 0.0
    %824 = vmatprep.subr.mxu0 0.0
    %825 = vmatpush1.xpose.msra.mxu0 0.0
    %826 = vmatprep.subr.mxu0 0.0
    %827 = vmatpush1.xpose.msra.mxu0 0.0
    %828 = vmatprep.subr.mxu0 0.0
    %829 = vmatpush1.xpose.msra.mxu0 0.0
    %830 = vmatprep.subr.mxu0 0.0
    %831 = vmatpush1.xpose.msra.mxu0 0.0
    %832 = vmatprep.subr.mxu0 0.0
    %833 = vmatpush1.xpose.msra.mxu0 0.0
    %834 = vmatprep.subr.mxu0 0.0
    %835 = vmatpush1.xpose.msra.mxu0 0.0
    %836 = vmatprep.subr.mxu0 0.0
    %837 = vmatpush1.xpose.msra.mxu0 0.0
    %838 = vmatprep.subr.mxu0 0.0
    %839 = vmatpush1.xpose.msra.mxu0 0.0
    %840 = vmatprep.subr.mxu0 0.0
    %841 = vmatpush1.xpose.msra.mxu0 0.0
    %842 = vmatprep.subr.mxu0 0.0
    %843 = vmatpush1.xpose.msra.mxu0 0.0
    %844 = vmatprep.subr.mxu0 0.0
    %845 = vmatpush1.xpose.msra.mxu0 0.0
    %846 = vmatprep.subr.mxu0 0.0
    %847 = vmatpush1.xpose.msra.mxu0 0.0
    %848 = vmatprep.subr.mxu0 0.0
    %849 = vmatpush1.xpose.msra.mxu0 0.0
    %850 = vmatprep.subr.mxu0 0.0
    %851 = vmatpush1.xpose.msra.mxu0 0.0
    %852 = vmatprep.subr.mxu0 0.0
    %853 = vmatpush1.xpose.msra.mxu0 0.0
    %854 = vmatprep.subr.mxu0 0.0
    %855 = vmatpush1.xpose.msra.mxu0 0.0
    %856 = vmatprep.subr.mxu0 0.0
    %857 = vmatpush1.xpose.msra.mxu0 0.0
    %858 = vmatprep.subr.mxu0 0.0
    %859 = vmatpush1.xpose.msra.mxu0 0.0
    %860 = vmatprep.subr.mxu0 0.0
    %861 = vmatpush1.xpose.msra.mxu0 0.0
    %862 = vmatprep.subr.mxu0 0.0
    %863 = vmatpush1.xpose.msra.mxu0 0.0
    %864 = vmatprep.subr.mxu0 0.0
    %865 = vmatpush1.xpose.msra.mxu0 0.0
    %866 = vmatprep.subr.mxu0 0.0
    %867 = vmatpush1.xpose.msra.mxu0 0.0
    %868 = vmatprep.subr.mxu0 0.0
    %869 = vmatpush1.xpose.msra.mxu0 0.0
    %870 = vmatprep.subr.mxu0 0.0
    %871 = vmatpush1.xpose.msra.mxu0 0.0
    %872 = vmatprep.subr.mxu0 0.0
    %873 = vmatpush1.xpose.msra.mxu0 0.0
    %874 = vmatprep.subr.mxu0 0.0
    %875 = vmatpush1.xpose.msra.mxu0 0.0
    %876 = vmatprep.subr.mxu0 0.0
    %877 = vmatpush1.xpose.msra.mxu0 0.0
    %878 = vmatprep.subr.mxu0 0.0
    %879 = vmatpush1.xpose.msra.mxu0 0.0
    %880 = vmatprep.mubr.f32.mxu0 0.0
    %881 = vmatmul.mubr.f32.gmra.mrb[0].mxu0 %v812
    %v882 = vpop.f32.mrb[0].mxu0
    %v883 = vadd.f32 0.0, %v882
    %v884 = vpop.f32.mrb[0].mxu0
    %885 = vdwg.mxu0
    %v886 = vsel %vm556, %v805, -inf
    %887 = vmax.xlane.f32.xlu0 %v886
    %v888 = vpop.xlane.xlu0 %887
    %v889 = vsel %vm556, %v883, -inf
    %890 = vmax.xlane.f32.xlu0 %v889
    %v891 = vpop.xlane.xlu0 %890
    %v892 = vsub.f32 %v805, %v888
    %v893 = vsub.f32 %v883, %v891
    %v894 = vmul.f32 %v892, 1.442695
    %v895 = vpow.pop %v894
    %v896 = vmul.f32 %v893, 1.442695
    %v897 = vpow.pop %v896
    %v898 = vsel %vm556, %v895, 0.0
    %899 = vadd.xlane.f32.xlu0 %v898
    %v900 = vpop.xlane.xlu0 %899
    %v901 = vsel %vm556, %v897, 0.0
    %902 = vadd.xlane.f32.xlu0 %v901
    %v903 = vpop.xlane.xlu0 %902
    %v904 = vrcp.pop %v900
    %v905 = vrcp.pop %v903
    %v906 = vmul.f32 %v895, %v904
    %v907 = vmul.f32 %v897, %v905
    %909 = vrot.lane.b32.xlu0 %v397, 96
    %v910 = vpop.permute.xlu0 %909
    %v913 = vsel %vm556, %v906, 0
    %915 = vmatprep.subr.mxu0 0.0
    %916 = vmatpush1.msra.mxu0 %v910
    %917 = vmatprep.subr.mxu0 0.0
    %918 = vmatpush1.msra.mxu0 0.0
    %919 = vmatprep.subr.mxu0 0.0
    %920 = vmatpush1.msra.mxu0 0.0
    %921 = vmatprep.subr.mxu0 0.0
    %922 = vmatpush1.msra.mxu0 0.0
    %923 = vmatprep.subr.mxu0 0.0
    %924 = vmatpush1.msra.mxu0 0.0
    %925 = vmatprep.subr.mxu0 0.0
    %926 = vmatpush1.msra.mxu0 0.0
    %927 = vmatprep.subr.mxu0 0.0
    %928 = vmatpush1.msra.mxu0 0.0
    %929 = vmatprep.subr.mxu0 0.0
    %930 = vmatpush1.msra.mxu0 0.0
    %931 = vmatprep.subr.mxu0 0.0
    %932 = vmatpush1.msra.mxu0 0.0
    %933 = vmatprep.subr.mxu0 0.0
    %934 = vmatpush1.msra.mxu0 0.0
    %935 = vmatprep.subr.mxu0 0.0
    %936 = vmatpush1.msra.mxu0 0.0
    %937 = vmatprep.subr.mxu0 0.0
    %938 = vmatpush1.msra.mxu0 0.0
    %939 = vmatprep.subr.mxu0 0.0
    %940 = vmatpush1.msra.mxu0 0.0
    %941 = vmatprep.subr.mxu0 0.0
    %942 = vmatpush1.msra.mxu0 0.0
    %943 = vmatprep.subr.mxu0 0.0
    %944 = vmatpush1.msra.mxu0 0.0
    %945 = vmatprep.subr.mxu0 0.0
    %946 = vmatpush1.msra.mxu0 0.0
    %947 = vmatprep.subr.mxu0 0.0
    %948 = vmatpush1.msra.mxu0 0.0
    %949 = vmatprep.subr.mxu0 0.0
    %950 = vmatpush1.msra.mxu0 0.0
    %951 = vmatprep.subr.mxu0 0.0
    %952 = vmatpush1.msra.mxu0 0.0
    %953 = vmatprep.subr.mxu0 0.0
    %954 = vmatpush1.msra.mxu0 0.0
    %955 = vmatprep.subr.mxu0 0.0
    %956 = vmatpush1.msra.mxu0 0.0
    %957 = vmatprep.subr.mxu0 0.0
    %958 = vmatpush1.msra.mxu0 0.0
    %959 = vmatprep.subr.mxu0 0.0
    %960 = vmatpush1.msra.mxu0 0.0
    %961 = vmatprep.subr.mxu0 0.0
    %962 = vmatpush1.msra.mxu0 0.0
    %963 = vmatprep.subr.mxu0 0.0
    %964 = vmatpush1.msra.mxu0 0.0
    %965 = vmatprep.subr.mxu0 0.0
    %966 = vmatpush1.msra.mxu0 0.0
    %967 = vmatprep.subr.mxu0 0.0
    %968 = vmatpush1.msra.mxu0 0.0
    %969 = vmatprep.subr.mxu0 0.0
    %970 = vmatpush1.msra.mxu0 0.0
    %971 = vmatprep.subr.mxu0 0.0
    %972 = vmatpush1.msra.mxu0 0.0
    %973 = vmatprep.subr.mxu0 0.0
    %974 = vmatpush1.msra.mxu0 0.0
    %975 = vmatprep.subr.mxu0 0.0
    %976 = vmatpush1.msra.mxu0 0.0
    %977 = vmatprep.subr.mxu0 0.0
    %978 = vmatpush1.msra.mxu0 0.0
    %979 = vmatprep.mubr.f32.mxu0 0.0
    %980 = vmatmul.mubr.f32.gmra.mrb[0].mxu0 %v913
    %v981 = vpop.f32.mrb[0].mxu0
    %v982 = vadd.f32 0.0, %v981
    %v983 = vpop.f32.mrb[0].mxu0
    %984 = vdwg.mxu0
    %986 = vrot.lane.b32.xlu0 %v400, 96
    %v987 = vpop.permute.xlu0 %986
    %v990 = vsel %vm556, %v907, 0
    %992 = vmatprep.subr.mxu0 0.0
    %993 = vmatpush1.msra.mxu0 %v987
    %994 = vmatprep.subr.mxu0 0.0
    %995 = vmatpush1.msra.mxu0 0.0
    %996 = vmatprep.subr.mxu0 0.0
    %997 = vmatpush1.msra.mxu0 0.0
    %998 = vmatprep.subr.mxu0 0.0
    %999 = vmatpush1.msra.mxu0 0.0
    %1000 = vmatprep.subr.mxu0 0.0
    %1001 = vmatpush1.msra.mxu0 0.0
    %1002 = vmatprep.subr.mxu0 0.0
    %1003 = vmatpush1.msra.mxu0 0.0
    %1004 = vmatprep.subr.mxu0 0.0
    %1005 = vmatpush1.msra.mxu0 0.0
    %1006 = vmatprep.subr.mxu0 0.0
    %1007 = vmatpush1.msra.mxu0 0.0
    %1008 = vmatprep.subr.mxu0 0.0
    %1009 = vmatpush1.msra.mxu0 0.0
    %1010 = vmatprep.subr.mxu0 0.0
    %1011 = vmatpush1.msra.mxu0 0.0
    %1012 = vmatprep.subr.mxu0 0.0
    %1013 = vmatpush1.msra.mxu0 0.0
    %1014 = vmatprep.subr.mxu0 0.0
    %1015 = vmatpush1.msra.mxu0 0.0
    %1016 = vmatprep.subr.mxu0 0.0
    %1017 = vmatpush1.msra.mxu0 0.0
    %1018 = vmatprep.subr.mxu0 0.0
    %1019 = vmatpush1.msra.mxu0 0.0
    %1020 = vmatprep.subr.mxu0 0.0
    %1021 = vmatpush1.msra.mxu0 0.0
    %1022 = vmatprep.subr.mxu0 0.0
    %1023 = vmatpush1.msra.mxu0 0.0
    %1024 = vmatprep.subr.mxu0 0.0
    %1025 = vmatpush1.msra.mxu0 0.0
    %1026 = vmatprep.subr.mxu0 0.0
    %1027 = vmatpush1.msra.mxu0 0.0
    %1028 = vmatprep.subr.mxu0 0.0
    %1029 = vmatpush1.msra.mxu0 0.0
    %1030 = vmatprep.subr.mxu0 0.0
    %1031 = vmatpush1.msra.mxu0 0.0
    %1032 = vmatprep.subr.mxu0 0.0
    %1033 = vmatpush1.msra.mxu0 0.0
    %1034 = vmatprep.subr.mxu0 0.0
    %1035 = vmatpush1.msra.mxu0 0.0
    %1036 = vmatprep.subr.mxu0 0.0
    %1037 = vmatpush1.msra.mxu0 0.0
    %1038 = vmatprep.subr.mxu0 0.0
    %1039 = vmatpush1.msra.mxu0 0.0
    %1040 = vmatprep.subr.mxu0 0.0
    %1041 = vmatpush1.msra.mxu0 0.0
    %1042 = vmatprep.subr.mxu0 0.0
    %1043 = vmatpush1.msra.mxu0 0.0
    %1044 = vmatprep.subr.mxu0 0.0
    %1045 = vmatpush1.msra.mxu0 0.0
    %1046 = vmatprep.subr.mxu0 0.0
    %1047 = vmatpush1.msra.mxu0 0.0
    %1048 = vmatprep.subr.mxu0 0.0
    %1049 = vmatpush1.msra.mxu0 0.0
    %1050 = vmatprep.subr.mxu0 0.0
    %1051 = vmatpush1.msra.mxu0 0.0
    %1052 = vmatprep.subr.mxu0 0.0
    %1053 = vmatpush1.msra.mxu0 0.0
    %1054 = vmatprep.subr.mxu0 0.0
    %1055 = vmatpush1.msra.mxu0 0.0
    %1056 = vmatprep.mubr.f32.mxu0 0.0
    %1057 = vmatmul.mubr.f32.gmra.mrb[0].mxu0 %v990
    %v1058 = vpop.f32.mrb[0].mxu0
    %v1059 = vadd.f32 0.0, %v1058
    %v1060 = vpop.f32.mrb[0].mxu0
    %1061 = vdwg.mxu0
    %v1062 = vpack.c.bf16 %v1059, %v982
    %v1063 = vld [vmem:[#allocation8 + $0x10] sm:$0xf]
    %v1064 = vld [vmem:[#allocation8 + $0x14] sm:$0xf]
    %v1065 = vld [vmem:[#allocation8 + $0x18] sm:$0xf]
    %v1066 = vld [vmem:[#allocation8 + $0x1c] sm:$0xf]
    %v1071 = vunpack.c.l.b16 %v1063
    %v1072 = vunpack.c.l.b16 %v1064
    %v1073 = vunpack.c.l.b16 %v1065
    %v1074 = vunpack.c.l.b16 %v1066
    %v1075 = vpack.c.b16 %v1072, %v1071
    %v1076 = vpack.c.b16 %v1074, %v1073
    %v1080 = vsel %vm403, %v1062, 0
    %1082 = vmatprep.subr.bf16.mxu0 0
    %1083 = vmatpush1.bf16.msra.mxu0 %v1075
    %1084 = vmatprep.subr.bf16.mxu0 0
    %1085 = vmatpush1.bf16.msra.mxu0 %v1076
    %1086 = vmatprep.subr.bf16.mxu0 0
    %1087 = vmatpush1.bf16.msra.mxu0 0
    %1088 = vmatprep.subr.bf16.mxu0 0
    %1089 = vmatpush1.bf16.msra.mxu0 0
    %1090 = vmatprep.subr.bf16.mxu0 0
    %1091 = vmatpush1.bf16.msra.mxu0 0
    %1092 = vmatprep.subr.bf16.mxu0 0
    %1093 = vmatpush1.bf16.msra.mxu0 0
    %1094 = vmatprep.subr.bf16.mxu0 0
    %1095 = vmatpush1.bf16.msra.mxu0 0
    %1096 = vmatprep.subr.bf16.mxu0 0
    %1097 = vmatpush1.bf16.msra.mxu0 0
    %1098 = vmatprep.subr.bf16.mxu0 0
    %1099 = vmatpush1.bf16.msra.mxu0 0
    %1100 = vmatprep.subr.bf16.mxu0 0
    %1101 = vmatpush1.bf16.msra.mxu0 0
    %1102 = vmatprep.subr.bf16.mxu0 0
    %1103 = vmatpush1.bf16.msra.mxu0 0
    %1104 = vmatprep.subr.bf16.mxu0 0
    %1105 = vmatpush1.bf16.msra.mxu0 0
    %1106 = vmatprep.subr.bf16.mxu0 0
    %1107 = vmatpush1.bf16.msra.mxu0 0
    %1108 = vmatprep.subr.bf16.mxu0 0
    %1109 = vmatpush1.bf16.msra.mxu0 0
    %1110 = vmatprep.subr.bf16.mxu0 0
    %1111 = vmatpush1.bf16.msra.mxu0 0
    %1112 = vmatprep.subr.bf16.mxu0 0
    %1113 = vmatpush1.bf16.msra.mxu0 0
    %1114 = vmatprep.mubr.bf16.mxu0 0
    %1115 = vmatmul.mubr.bf16.gmra.mrb[0].mxu0 %v1080
    %v1116 = vpop.f32.mrb[0].mxu0
    %v1117 = vadd.f32 0.0, %v1116
    %v1118 = vpop.f32.mrb[0].mxu0
    %v1119 = vpop.f32.mrb[0].mxu0
    %v1120 = vadd.f32 0.0, %v1119
    %v1121 = vpop.f32.mrb[0].mxu0
    %1122 = vdwg.mxu0
    %v1127 = vunpack.c.l.b16 %v726
    %v1128 = vunpack.c.l.b16 %v727
    %v1129 = vunpack.c.l.b16 %v728
    %v1130 = vunpack.c.l.b16 %v729
    %v1131 = vpack.c.b16 %v1128, %v1127
    %v1132 = vpack.c.b16 %v1130, %v1129
    %v1136 = vsel %vm403, %v725, 0
    %1138 = vmatprep.subr.bf16.mxu0 0
    %1139 = vmatpush1.bf16.msra.mxu0 %v1131
    %1140 = vmatprep.subr.bf16.mxu0 0
    %1141 = vmatpush1.bf16.msra.mxu0 %v1132
    %1142 = vmatprep.subr.bf16.mxu0 0
    %1143 = vmatpush1.bf16.msra.mxu0 0
    %1144 = vmatprep.subr.bf16.mxu0 0
    %1145 = vmatpush1.bf16.msra.mxu0 0
    %1146 = vmatprep.subr.bf16.mxu0 0
    %1147 = vmatpush1.bf16.msra.mxu0 0
    %1148 = vmatprep.subr.bf16.mxu0 0
    %1149 = vmatpush1.bf16.msra.mxu0 0
    %1150 = vmatprep.subr.bf16.mxu0 0
    %1151 = vmatpush1.bf16.msra.mxu0 0
    %1152 = vmatprep.subr.bf16.mxu0 0
    %1153 = vmatpush1.bf16.msra.mxu0 0
    %1154 = vmatprep.subr.bf16.mxu0 0
    %1155 = vmatpush1.bf16.msra.mxu0 0
    %1156 = vmatprep.subr.bf16.mxu0 0
    %1157 = vmatpush1.bf16.msra.mxu0 0
    %1158 = vmatprep.subr.bf16.mxu0 0
    %1159 = vmatpush1.bf16.msra.mxu0 0
    %1160 = vmatprep.subr.bf16.mxu0 0
    %1161 = vmatpush1.bf16.msra.mxu0 0
    %1162 = vmatprep.subr.bf16.mxu0 0
    %1163 = vmatpush1.bf16.msra.mxu0 0
    %1164 = vmatprep.subr.bf16.mxu0 0
    %1165 = vmatpush1.bf16.msra.mxu0 0
    %1166 = vmatprep.subr.bf16.mxu0 0
    %1167 = vmatpush1.bf16.msra.mxu0 0
    %1168 = vmatprep.subr.bf16.mxu0 0
    %1169 = vmatpush1.bf16.msra.mxu0 0
    %1170 = vmatprep.mubr.bf16.mxu0 0
    %1171 = vmatmul.mubr.bf16.gmra.mrb[0].mxu0 %v1136
    %v1172 = vpop.f32.mrb[0].mxu0
    %v1173 = vadd.f32 %v1117, %v1172
    %v1174 = vpop.f32.mrb[0].mxu0
    %v1175 = vpop.f32.mrb[0].mxu0
    %v1176 = vadd.f32 %v1120, %v1175
    %v1177 = vpop.f32.mrb[0].mxu0
    %1178 = vdwg.mxu0
    %1179 = vrot.lane.b32.xlu0 %v354, 64
    %v1180 = vpop.permute.xlu0 %1179
    %1181 = vrot.lane.b32.xlu0 %v356, 64
    %v1182 = vpop.permute.xlu0 %1181
    %v1183 = vsel %vm403, %v1180, 0
    %v1185 = vsel %vm403, %v1182, 0
    %1187 = vmatprep.subr.mxu0 0.0
    %1188 = vmatpush1.xpose.msra.mxu0 %v1185
    %1189 = vmatprep.subr.mxu0 0.0
    %1190 = vmatpush1.xpose.msra.mxu0 0.0
    %1191 = vmatprep.subr.mxu0 0.0
    %1192 = vmatpush1.xpose.msra.mxu0 0.0
    %1193 = vmatprep.subr.mxu0 0.0
    %1194 = vmatpush1.xpose.msra.mxu0 0.0
    %1195 = vmatprep.subr.mxu0 0.0
    %1196 = vmatpush1.xpose.msra.mxu0 0.0
    %1197 = vmatprep.subr.mxu0 0.0
    %1198 = vmatpush1.xpose.msra.mxu0 0.0
    %1199 = vmatprep.subr.mxu0 0.0
    %1200 = vmatpush1.xpose.msra.mxu0 0.0
    %1201 = vmatprep.subr.mxu0 0.0
    %1202 = vmatpush1.xpose.msra.mxu0 0.0
    %1203 = vmatprep.subr.mxu0 0.0
    %1204 = vmatpush1.xpose.msra.mxu0 0.0
    %1205 = vmatprep.subr.mxu0 0.0
    %1206 = vmatpush1.xpose.msra.mxu0 0.0
    %1207 = vmatprep.subr.mxu0 0.0
    %1208 = vmatpush1.xpose.msra.mxu0 0.0
    %1209 = vmatprep.subr.mxu0 0.0
    %1210 = vmatpush1.xpose.msra.mxu0 0.0
    %1211 = vmatprep.subr.mxu0 0.0
    %1212 = vmatpush1.xpose.msra.mxu0 0.0
    %1213 = vmatprep.subr.mxu0 0.0
    %1214 = vmatpush1.xpose.msra.mxu0 0.0
    %1215 = vmatprep.subr.mxu0 0.0
    %1216 = vmatpush1.xpose.msra.mxu0 0.0
    %1217 = vmatprep.subr.mxu0 0.0
    %1218 = vmatpush1.xpose.msra.mxu0 0.0
    %1219 = vmatprep.subr.mxu0 0.0
    %1220 = vmatpush1.xpose.msra.mxu0 0.0
    %1221 = vmatprep.subr.mxu0 0.0
    %1222 = vmatpush1.xpose.msra.mxu0 0.0
    %1223 = vmatprep.subr.mxu0 0.0
    %1224 = vmatpush1.xpose.msra.mxu0 0.0
    %1225 = vmatprep.subr.mxu0 0.0
    %1226 = vmatpush1.xpose.msra.mxu0 0.0
    %1227 = vmatprep.subr.mxu0 0.0
    %1228 = vmatpush1.xpose.msra.mxu0 0.0
    %1229 = vmatprep.subr.mxu0 0.0
    %1230 = vmatpush1.xpose.msra.mxu0 0.0
    %1231 = vmatprep.subr.mxu0 0.0
    %1232 = vmatpush1.xpose.msra.mxu0 0.0
    %1233 = vmatprep.subr.mxu0 0.0
    %1234 = vmatpush1.xpose.msra.mxu0 0.0
    %1235 = vmatprep.subr.mxu0 0.0
    %1236 = vmatpush1.xpose.msra.mxu0 0.0
    %1237 = vmatprep.subr.mxu0 0.0
    %1238 = vmatpush1.xpose.msra.mxu0 0.0
    %1239 = vmatprep.subr.mxu0 0.0
    %1240 = vmatpush1.xpose.msra.mxu0 0.0
    %1241 = vmatprep.subr.mxu0 0.0
    %1242 = vmatpush1.xpose.msra.mxu0 0.0
    %1243 = vmatprep.subr.mxu0 0.0
    %1244 = vmatpush1.xpose.msra.mxu0 0.0
    %1245 = vmatprep.subr.mxu0 0.0
    %1246 = vmatpush1.xpose.msra.mxu0 0.0
    %1247 = vmatprep.subr.mxu0 0.0
    %1248 = vmatpush1.xpose.msra.mxu0 0.0
    %1249 = vmatprep.subr.mxu0 0.0
    %1250 = vmatpush1.xpose.msra.mxu0 0.0
    %1251 = vmatprep.mubr.f32.mxu0 0.0
    %1252 = vmatmul.mubr.f32.gmra.mrb[0].mxu0 %v1183
    %v1253 = vpop.f32.mrb[0].mxu0
    %v1254 = vadd.f32 0.0, %v1253
    %v1255 = vpop.f32.mrb[0].mxu0
    %1256 = vdwg.mxu0
    %1257 = vrot.lane.b32.xlu0 %v358, 64
    %v1258 = vpop.permute.xlu0 %1257
    %1259 = vrot.lane.b32.xlu0 %v360, 64
    %v1260 = vpop.permute.xlu0 %1259
    %v1261 = vsel %vm403, %v1258, 0
    %v1263 = vsel %vm403, %v1260, 0
    %1265 = vmatprep.subr.mxu0 0.0
    %1266 = vmatpush1.xpose.msra.mxu0 %v1263
    %1267 = vmatprep.subr.mxu0 0.0
    %1268 = vmatpush1.xpose.msra.mxu0 0.0
    %1269 = vmatprep.subr.mxu0 0.0
    %1270 = vmatpush1.xpose.msra.mxu0 0.0
    %1271 = vmatprep.subr.mxu0 0.0
    %1272 = vmatpush1.xpose.msra.mxu0 0.0
    %1273 = vmatprep.subr.mxu0 0.0
    %1274 = vmatpush1.xpose.msra.mxu0 0.0
    %1275 = vmatprep.subr.mxu0 0.0
    %1276 = vmatpush1.xpose.msra.mxu0 0.0
    %1277 = vmatprep.subr.mxu0 0.0
    %1278 = vmatpush1.xpose.msra.mxu0 0.0
    %1279 = vmatprep.subr.mxu0 0.0
    %1280 = vmatpush1.xpose.msra.mxu0 0.0
    %1281 = vmatprep.subr.mxu0 0.0
    %1282 = vmatpush1.xpose.msra.mxu0 0.0
    %1283 = vmatprep.subr.mxu0 0.0
    %1284 = vmatpush1.xpose.msra.mxu0 0.0
    %1285 = vmatprep.subr.mxu0 0.0
    %1286 = vmatpush1.xpose.msra.mxu0 0.0
    %1287 = vmatprep.subr.mxu0 0.0
    %1288 = vmatpush1.xpose.msra.mxu0 0.0
    %1289 = vmatprep.subr.mxu0 0.0
    %1290 = vmatpush1.xpose.msra.mxu0 0.0
    %1291 = vmatprep.subr.mxu0 0.0
    %1292 = vmatpush1.xpose.msra.mxu0 0.0
    %1293 = vmatprep.subr.mxu0 0.0
    %1294 = vmatpush1.xpose.msra.mxu0 0.0
    %1295 = vmatprep.subr.mxu0 0.0
    %1296 = vmatpush1.xpose.msra.mxu0 0.0
    %1297 = vmatprep.subr.mxu0 0.0
    %1298 = vmatpush1.xpose.msra.mxu0 0.0
    %1299 = vmatprep.subr.mxu0 0.0
    %1300 = vmatpush1.xpose.msra.mxu0 0.0
    %1301 = vmatprep.subr.mxu0 0.0
    %1302 = vmatpush1.xpose.msra.mxu0 0.0
    %1303 = vmatprep.subr.mxu0 0.0
    %1304 = vmatpush1.xpose.msra.mxu0 0.0
    %1305 = vmatprep.subr.mxu0 0.0
    %1306 = vmatpush1.xpose.msra.mxu0 0.0
    %1307 = vmatprep.subr.mxu0 0.0
    %1308 = vmatpush1.xpose.msra.mxu0 0.0
    %1309 = vmatprep.subr.mxu0 0.0
    %1310 = vmatpush1.xpose.msra.mxu0 0.0
    %1311 = vmatprep.subr.mxu0 0.0
    %1312 = vmatpush1.xpose.msra.mxu0 0.0
    %1313 = vmatprep.subr.mxu0 0.0
    %1314 = vmatpush1.xpose.msra.mxu0 0.0
    %1315 = vmatprep.subr.mxu0 0.0
    %1316 = vmatpush1.xpose.msra.mxu0 0.0
    %1317 = vmatprep.subr.mxu0 0.0
    %1318 = vmatpush1.xpose.msra.mxu0 0.0
    %1319 = vmatprep.subr.mxu0 0.0
    %1320 = vmatpush1.xpose.msra.mxu0 0.0
    %1321 = vmatprep.subr.mxu0 0.0
    %1322 = vmatpush1.xpose.msra.mxu0 0.0
    %1323 = vmatprep.subr.mxu0 0.0
    %1324 = vmatpush1.xpose.msra.mxu0 0.0
    %1325 = vmatprep.subr.mxu0 0.0
    %1326 = vmatpush1.xpose.msra.mxu0 0.0
    %1327 = vmatprep.subr.mxu0 0.0
    %1328 = vmatpush1.xpose.msra.mxu0 0.0
    %1329 = vmatprep.mubr.f32.mxu0 0.0
    %1330 = vmatmul.mubr.f32.gmra.mrb[0].mxu0 %v1261
    %v1331 = vpop.f32.mrb[0].mxu0
    %v1332 = vadd.f32 0.0, %v1331
    %v1333 = vpop.f32.mrb[0].mxu0
    %1334 = vdwg.mxu0
    %v1335 = vsel %vm556, %v1254, -inf
    %1336 = vmax.xlane.f32.xlu0 %v1335
    %v1337 = vpop.xlane.xlu0 %1336
    %v1338 = vsel %vm556, %v1332, -inf
    %1339 = vmax.xlane.f32.xlu0 %v1338
    %v1340 = vpop.xlane.xlu0 %1339
    %v1341 = vsub.f32 %v1254, %v1337
    %v1342 = vsub.f32 %v1332, %v1340
    %v1343 = vmul.f32 %v1341, 1.442695
    %v1344 = vpow.pop %v1343
    %v1345 = vmul.f32 %v1342, 1.442695
    %v1346 = vpow.pop %v1345
    %v1347 = vsel %vm556, %v1344, 0.0
    %1348 = vadd.xlane.f32.xlu0 %v1347
    %v1349 = vpop.xlane.xlu0 %1348
    %v1350 = vsel %vm556, %v1346, 0.0
    %1351 = vadd.xlane.f32.xlu0 %v1350
    %v1352 = vpop.xlane.xlu0 %1351
    %v1353 = vrcp.pop %v1349
    %v1354 = vrcp.pop %v1352
    %v1355 = vmul.f32 %v1344, %v1353
    %v1356 = vmul.f32 %v1346, %v1354
    %1357 = vrot.lane.b32.xlu0 %v397, 64
    %v1358 = vpop.permute.xlu0 %1357
    %v1361 = vsel %vm556, %v1355, 0
    %1363 = vmatprep.subr.mxu0 0.0
    %1364 = vmatpush1.msra.mxu0 %v1358
    %1365 = vmatprep.subr.mxu0 0.0
    %1366 = vmatpush1.msra.mxu0 0.0
    %1367 = vmatprep.subr.mxu0 0.0
    %1368 = vmatpush1.msra.mxu0 0.0
    %1369 = vmatprep.subr.mxu0 0.0
    %1370 = vmatpush1.msra.mxu0 0.0
    %1371 = vmatprep.subr.mxu0 0.0
    %1372 = vmatpush1.msra.mxu0 0.0
    %1373 = vmatprep.subr.mxu0 0.0
    %1374 = vmatpush1.msra.mxu0 0.0
    %1375 = vmatprep.subr.mxu0 0.0
    %1376 = vmatpush1.msra.mxu0 0.0
    %1377 = vmatprep.subr.mxu0 0.0
    %1378 = vmatpush1.msra.mxu0 0.0
    %1379 = vmatprep.subr.mxu0 0.0
    %1380 = vmatpush1.msra.mxu0 0.0
    %1381 = vmatprep.subr.mxu0 0.0
    %1382 = vmatpush1.msra.mxu0 0.0
    %1383 = vmatprep.subr.mxu0 0.0
    %1384 = vmatpush1.msra.mxu0 0.0
    %1385 = vmatprep.subr.mxu0 0.0
    %1386 = vmatpush1.msra.mxu0 0.0
    %1387 = vmatprep.subr.mxu0 0.0
    %1388 = vmatpush1.msra.mxu0 0.0
    %1389 = vmatprep.subr.mxu0 0.0
    %1390 = vmatpush1.msra.mxu0 0.0
    %1391 = vmatprep.subr.mxu0 0.0
    %1392 = vmatpush1.msra.mxu0 0.0
    %1393 = vmatprep.subr.mxu0 0.0
    %1394 = vmatpush1.msra.mxu0 0.0
    %1395 = vmatprep.subr.mxu0 0.0
    %1396 = vmatpush1.msra.mxu0 0.0
    %1397 = vmatprep.subr.mxu0 0.0
    %1398 = vmatpush1.msra.mxu0 0.0
    %1399 = vmatprep.subr.mxu0 0.0
    %1400 = vmatpush1.msra.mxu0 0.0
    %1401 = vmatprep.subr.mxu0 0.0
    %1402 = vmatpush1.msra.mxu0 0.0
    %1403 = vmatprep.subr.mxu0 0.0
    %1404 = vmatpush1.msra.mxu0 0.0
    %1405 = vmatprep.subr.mxu0 0.0
    %1406 = vmatpush1.msra.mxu0 0.0
    %1407 = vmatprep.subr.mxu0 0.0
    %1408 = vmatpush1.msra.mxu0 0.0
    %1409 = vmatprep.subr.mxu0 0.0
    %1410 = vmatpush1.msra.mxu0 0.0
    %1411 = vmatprep.subr.mxu0 0.0
    %1412 = vmatpush1.msra.mxu0 0.0
    %1413 = vmatprep.subr.mxu0 0.0
    %1414 = vmatpush1.msra.mxu0 0.0
    %1415 = vmatprep.subr.mxu0 0.0
    %1416 = vmatpush1.msra.mxu0 0.0
    %1417 = vmatprep.subr.mxu0 0.0
    %1418 = vmatpush1.msra.mxu0 0.0
    %1419 = vmatprep.subr.mxu0 0.0
    %1420 = vmatpush1.msra.mxu0 0.0
    %1421 = vmatprep.subr.mxu0 0.0
    %1422 = vmatpush1.msra.mxu0 0.0
    %1423 = vmatprep.subr.mxu0 0.0
    %1424 = vmatpush1.msra.mxu0 0.0
    %1425 = vmatprep.subr.mxu0 0.0
    %1426 = vmatpush1.msra.mxu0 0.0
    %1427 = vmatprep.mubr.f32.mxu0 0.0
    %1428 = vmatmul.mubr.f32.gmra.mrb[0].mxu0 %v1361
    %v1429 = vpop.f32.mrb[0].mxu0
    %v1430 = vadd.f32 0.0, %v1429
    %v1431 = vpop.f32.mrb[0].mxu0
    %1432 = vdwg.mxu0
    %1433 = vrot.lane.b32.xlu0 %v400, 64
    %v1434 = vpop.permute.xlu0 %1433
    %v1437 = vsel %vm556, %v1356, 0
    %1439 = vmatprep.subr.mxu0 0.0
    %1440 = vmatpush1.msra.mxu0 %v1434
    %1441 = vmatprep.subr.mxu0 0.0
    %1442 = vmatpush1.msra.mxu0 0.0
    %1443 = vmatprep.subr.mxu0 0.0
    %1444 = vmatpush1.msra.mxu0 0.0
    %1445 = vmatprep.subr.mxu0 0.0
    %1446 = vmatpush1.msra.mxu0 0.0
    %1447 = vmatprep.subr.mxu0 0.0
    %1448 = vmatpush1.msra.mxu0 0.0
    %1449 = vmatprep.subr.mxu0 0.0
    %1450 = vmatpush1.msra.mxu0 0.0
    %1451 = vmatprep.subr.mxu0 0.0
    %1452 = vmatpush1.msra.mxu0 0.0
    %1453 = vmatprep.subr.mxu0 0.0
    %1454 = vmatpush1.msra.mxu0 0.0
    %1455 = vmatprep.subr.mxu0 0.0
    %1456 = vmatpush1.msra.mxu0 0.0
    %1457 = vmatprep.subr.mxu0 0.0
    %1458 = vmatpush1.msra.mxu0 0.0
    %1459 = vmatprep.subr.mxu0 0.0
    %1460 = vmatpush1.msra.mxu0 0.0
    %1461 = vmatprep.subr.mxu0 0.0
    %1462 = vmatpush1.msra.mxu0 0.0
    %1463 = vmatprep.subr.mxu0 0.0
    %1464 = vmatpush1.msra.mxu0 0.0
    %1465 = vmatprep.subr.mxu0 0.0
    %1466 = vmatpush1.msra.mxu0 0.0
    %1467 = vmatprep.subr.mxu0 0.0
    %1468 = vmatpush1.msra.mxu0 0.0
    %1469 = vmatprep.subr.mxu0 0.0
    %1470 = vmatpush1.msra.mxu0 0.0
    %1471 = vmatprep.subr.mxu0 0.0
    %1472 = vmatpush1.msra.mxu0 0.0
    %1473 = vmatprep.subr.mxu0 0.0
    %1474 = vmatpush1.msra.mxu0 0.0
    %1475 = vmatprep.subr.mxu0 0.0
    %1476 = vmatpush1.msra.mxu0 0.0
    %1477 = vmatprep.subr.mxu0 0.0
    %1478 = vmatpush1.msra.mxu0 0.0
    %1479 = vmatprep.subr.mxu0 0.0
    %1480 = vmatpush1.msra.mxu0 0.0
    %1481 = vmatprep.subr.mxu0 0.0
    %1482 = vmatpush1.msra.mxu0 0.0
    %1483 = vmatprep.subr.mxu0 0.0
    %1484 = vmatpush1.msra.mxu0 0.0
    %1485 = vmatprep.subr.mxu0 0.0
    %1486 = vmatpush1.msra.mxu0 0.0
    %1487 = vmatprep.subr.mxu0 0.0
    %1488 = vmatpush1.msra.mxu0 0.0
    %1489 = vmatprep.subr.mxu0 0.0
    %1490 = vmatpush1.msra.mxu0 0.0
    %1491 = vmatprep.subr.mxu0 0.0
    %1492 = vmatpush1.msra.mxu0 0.0
    %1493 = vmatprep.subr.mxu0 0.0
    %1494 = vmatpush1.msra.mxu0 0.0
    %1495 = vmatprep.subr.mxu0 0.0
    %1496 = vmatpush1.msra.mxu0 0.0
    %1497 = vmatprep.subr.mxu0 0.0
    %1498 = vmatpush1.msra.mxu0 0.0
    %1499 = vmatprep.subr.mxu0 0.0
    %1500 = vmatpush1.msra.mxu0 0.0
    %1501 = vmatprep.subr.mxu0 0.0
    %1502 = vmatpush1.msra.mxu0 0.0
    %1503 = vmatprep.mubr.f32.mxu0 0.0
    %1504 = vmatmul.mubr.f32.gmra.mrb[0].mxu0 %v1437
    %v1505 = vpop.f32.mrb[0].mxu0
    %v1506 = vadd.f32 0.0, %v1505
    %v1507 = vpop.f32.mrb[0].mxu0
    %1508 = vdwg.mxu0
    %v1509 = vpack.c.bf16 %v1506, %v1430
    %v1510 = vld [vmem:[#allocation8 + $0x20] sm:$0xf]
    %v1511 = vld [vmem:[#allocation8 + $0x24] sm:$0xf]
    %v1512 = vld [vmem:[#allocation8 + $0x28] sm:$0xf]
    %v1513 = vld [vmem:[#allocation8 + $0x2c] sm:$0xf]
    %v1518 = vunpack.c.l.b16 %v1510
    %v1519 = vunpack.c.l.b16 %v1511
    %v1520 = vunpack.c.l.b16 %v1512
    %v1521 = vunpack.c.l.b16 %v1513
    %v1522 = vpack.c.b16 %v1519, %v1518
    %v1523 = vpack.c.b16 %v1521, %v1520
    %v1527 = vsel %vm403, %v1509, 0
    %1529 = vmatprep.subr.bf16.mxu0 0
    %1530 = vmatpush1.bf16.msra.mxu0 %v1522
    %1531 = vmatprep.subr.bf16.mxu0 0
    %1532 = vmatpush1.bf16.msra.mxu0 %v1523
    %1533 = vmatprep.subr.bf16.mxu0 0
    %1534 = vmatpush1.bf16.msra.mxu0 0
    %1535 = vmatprep.subr.bf16.mxu0 0
    %1536 = vmatpush1.bf16.msra.mxu0 0
    %1537 = vmatprep.subr.bf16.mxu0 0
    %1538 = vmatpush1.bf16.msra.mxu0 0
    %1539 = vmatprep.subr.bf16.mxu0 0
    %1540 = vmatpush1.bf16.msra.mxu0 0
    %1541 = vmatprep.subr.bf16.mxu0 0
    %1542 = vmatpush1.bf16.msra.mxu0 0
    %1543 = vmatprep.subr.bf16.mxu0 0
    %1544 = vmatpush1.bf16.msra.mxu0 0
    %1545 = vmatprep.subr.bf16.mxu0 0
    %1546 = vmatpush1.bf16.msra.mxu0 0
    %1547 = vmatprep.subr.bf16.mxu0 0
    %1548 = vmatpush1.bf16.msra.mxu0 0
    %1549 = vmatprep.subr.bf16.mxu0 0
    %1550 = vmatpush1.bf16.msra.mxu0 0
    %1551 = vmatprep.subr.bf16.mxu0 0
    %1552 = vmatpush1.bf16.msra.mxu0 0
    %1553 = vmatprep.subr.bf16.mxu0 0
    %1554 = vmatpush1.bf16.msra.mxu0 0
    %1555 = vmatprep.subr.bf16.mxu0 0
    %1556 = vmatpush1.bf16.msra.mxu0 0
    %1557 = vmatprep.subr.bf16.mxu0 0
    %1558 = vmatpush1.bf16.msra.mxu0 0
    %1559 = vmatprep.subr.bf16.mxu0 0
    %1560 = vmatpush1.bf16.msra.mxu0 0
    %1561 = vmatprep.mubr.bf16.mxu0 0
    %1562 = vmatmul.mubr.bf16.gmra.mrb[0].mxu0 %v1527
    %v1563 = vpop.f32.mrb[0].mxu0
    %v1564 = vadd.f32 0.0, %v1563
    %v1565 = vpop.f32.mrb[0].mxu0
    %v1566 = vpop.f32.mrb[0].mxu0
    %v1567 = vadd.f32 0.0, %v1566
    %v1568 = vpop.f32.mrb[0].mxu0
    %1569 = vdwg.mxu0
    %v1570 = vadd.f32 %v1173, %v1564
    %v1571 = vadd.f32 %v1176, %v1567
    %1572 = vrot.lane.b32.xlu0 %v354, 32
    %v1573 = vpop.permute.xlu0 %1572
    %1574 = vrot.lane.b32.xlu0 %v356, 32
    %v1575 = vpop.permute.xlu0 %1574
    %v1576 = vsel %vm403, %v1573, 0
    %v1578 = vsel %vm403, %v1575, 0
    %1580 = vmatprep.subr.mxu0 0.0
    %1581 = vmatpush1.xpose.msra.mxu0 %v1578
    %1582 = vmatprep.subr.mxu0 0.0
    %1583 = vmatpush1.xpose.msra.mxu0 0.0
    %1584 = vmatprep.subr.mxu0 0.0
    %1585 = vmatpush1.xpose.msra.mxu0 0.0
    %1586 = vmatprep.subr.mxu0 0.0
    %1587 = vmatpush1.xpose.msra.mxu0 0.0
    %1588 = vmatprep.subr.mxu0 0.0
    %1589 = vmatpush1.xpose.msra.mxu0 0.0
    %1590 = vmatprep.subr.mxu0 0.0
    %1591 = vmatpush1.xpose.msra.mxu0 0.0
    %1592 = vmatprep.subr.mxu0 0.0
    %1593 = vmatpush1.xpose.msra.mxu0 0.0
    %1594 = vmatprep.subr.mxu0 0.0
    %1595 = vmatpush1.xpose.msra.mxu0 0.0
    %1596 = vmatprep.subr.mxu0 0.0
    %1597 = vmatpush1.xpose.msra.mxu0 0.0
    %1598 = vmatprep.subr.mxu0 0.0
    %1599 = vmatpush1.xpose.msra.mxu0 0.0
    %1600 = vmatprep.subr.mxu0 0.0
    %1601 = vmatpush1.xpose.msra.mxu0 0.0
    %1602 = vmatprep.subr.mxu0 0.0
    %1603 = vmatpush1.xpose.msra.mxu0 0.0
    %1604 = vmatprep.subr.mxu0 0.0
    %1605 = vmatpush1.xpose.msra.mxu0 0.0
    %1606 = vmatprep.subr.mxu0 0.0
    %1607 = vmatpush1.xpose.msra.mxu0 0.0
    %1608 = vmatprep.subr.mxu0 0.0
    %1609 = vmatpush1.xpose.msra.mxu0 0.0
    %1610 = vmatprep.subr.mxu0 0.0
    %1611 = vmatpush1.xpose.msra.mxu0 0.0
    %1612 = vmatprep.subr.mxu0 0.0
    %1613 = vmatpush1.xpose.msra.mxu0 0.0
    %1614 = vmatprep.subr.mxu0 0.0
    %1615 = vmatpush1.xpose.msra.mxu0 0.0
    %1616 = vmatprep.subr.mxu0 0.0
    %1617 = vmatpush1.xpose.msra.mxu0 0.0
    %1618 = vmatprep.subr.mxu0 0.0
    %1619 = vmatpush1.xpose.msra.mxu0 0.0
    %1620 = vmatprep.subr.mxu0 0.0
    %1621 = vmatpush1.xpose.msra.mxu0 0.0
    %1622 = vmatprep.subr.mxu0 0.0
    %1623 = vmatpush1.xpose.msra.mxu0 0.0
    %1624 = vmatprep.subr.mxu0 0.0
    %1625 = vmatpush1.xpose.msra.mxu0 0.0
    %1626 = vmatprep.subr.mxu0 0.0
    %1627 = vmatpush1.xpose.msra.mxu0 0.0
    %1628 = vmatprep.subr.mxu0 0.0
    %1629 = vmatpush1.xpose.msra.mxu0 0.0
    %1630 = vmatprep.subr.mxu0 0.0
    %1631 = vmatpush1.xpose.msra.mxu0 0.0
    %1632 = vmatprep.subr.mxu0 0.0
    %1633 = vmatpush1.xpose.msra.mxu0 0.0
    %1634 = vmatprep.subr.mxu0 0.0
    %1635 = vmatpush1.xpose.msra.mxu0 0.0
    %1636 = vmatprep.subr.mxu0 0.0
    %1637 = vmatpush1.xpose.msra.mxu0 0.0
    %1638 = vmatprep.subr.mxu0 0.0
    %1639 = vmatpush1.xpose.msra.mxu0 0.0
    %1640 = vmatprep.subr.mxu0 0.0
    %1641 = vmatpush1.xpose.msra.mxu0 0.0
    %1642 = vmatprep.subr.mxu0 0.0
    %1643 = vmatpush1.xpose.msra.mxu0 0.0
    %1644 = vmatprep.mubr.f32.mxu0 0.0
    %1645 = vmatmul.mubr.f32.gmra.mrb[0].mxu0 %v1576
    %v1646 = vpop.f32.mrb[0].mxu0
    %v1647 = vadd.f32 0.0, %v1646
    %v1648 = vpop.f32.mrb[0].mxu0
    %1649 = vdwg.mxu0
    %1650 = vrot.lane.b32.xlu0 %v358, 32
    %v1651 = vpop.permute.xlu0 %1650
    %1652 = vrot.lane.b32.xlu0 %v360, 32
    %v1653 = vpop.permute.xlu0 %1652
    %v1654 = vsel %vm403, %v1651, 0
    %v1656 = vsel %vm403, %v1653, 0
    %1658 = vmatprep.subr.mxu0 0.0
    %1659 = vmatpush1.xpose.msra.mxu0 %v1656
    %1660 = vmatprep.subr.mxu0 0.0
    %1661 = vmatpush1.xpose.msra.mxu0 0.0
    %1662 = vmatprep.subr.mxu0 0.0
    %1663 = vmatpush1.xpose.msra.mxu0 0.0
    %1664 = vmatprep.subr.mxu0 0.0
    %1665 = vmatpush1.xpose.msra.mxu0 0.0
    %1666 = vmatprep.subr.mxu0 0.0
    %1667 = vmatpush1.xpose.msra.mxu0 0.0
    %1668 = vmatprep.subr.mxu0 0.0
    %1669 = vmatpush1.xpose.msra.mxu0 0.0
    %1670 = vmatprep.subr.mxu0 0.0
    %1671 = vmatpush1.xpose.msra.mxu0 0.0
    %1672 = vmatprep.subr.mxu0 0.0
    %1673 = vmatpush1.xpose.msra.mxu0 0.0
    %1674 = vmatprep.subr.mxu0 0.0
    %1675 = vmatpush1.xpose.msra.mxu0 0.0
    %1676 = vmatprep.subr.mxu0 0.0
    %1677 = vmatpush1.xpose.msra.mxu0 0.0
    %1678 = vmatprep.subr.mxu0 0.0
    %1679 = vmatpush1.xpose.msra.mxu0 0.0
    %1680 = vmatprep.subr.mxu0 0.0
    %1681 = vmatpush1.xpose.msra.mxu0 0.0
    %1682 = vmatprep.subr.mxu0 0.0
    %1683 = vmatpush1.xpose.msra.mxu0 0.0
    %1684 = vmatprep.subr.mxu0 0.0
    %1685 = vmatpush1.xpose.msra.mxu0 0.0
    %1686 = vmatprep.subr.mxu0 0.0
    %1687 = vmatpush1.xpose.msra.mxu0 0.0
    %1688 = vmatprep.subr.mxu0 0.0
    %1689 = vmatpush1.xpose.msra.mxu0 0.0
    %1690 = vmatprep.subr.mxu0 0.0
    %1691 = vmatpush1.xpose.msra.mxu0 0.0
    %1692 = vmatprep.subr.mxu0 0.0
    %1693 = vmatpush1.xpose.msra.mxu0 0.0
    %1694 = vmatprep.subr.mxu0 0.0
    %1695 = vmatpush1.xpose.msra.mxu0 0.0
    %1696 = vmatprep.subr.mxu0 0.0
    %1697 = vmatpush1.xpose.msra.mxu0 0.0
    %1698 = vmatprep.subr.mxu0 0.0
    %1699 = vmatpush1.xpose.msra.mxu0 0.0
    %1700 = vmatprep.subr.mxu0 0.0
    %1701 = vmatpush1.xpose.msra.mxu0 0.0
    %1702 = vmatprep.subr.mxu0 0.0
    %1703 = vmatpush1.xpose.msra.mxu0 0.0
    %1704 = vmatprep.subr.mxu0 0.0
    %1705 = vmatpush1.xpose.msra.mxu0 0.0
    %1706 = vmatprep.subr.mxu0 0.0
    %1707 = vmatpush1.xpose.msra.mxu0 0.0
    %1708 = vmatprep.subr.mxu0 0.0
    %1709 = vmatpush1.xpose.msra.mxu0 0.0
    %1710 = vmatprep.subr.mxu0 0.0
    %1711 = vmatpush1.xpose.msra.mxu0 0.0
    %1712 = vmatprep.subr.mxu0 0.0
    %1713 = vmatpush1.xpose.msra.mxu0 0.0
    %1714 = vmatprep.subr.mxu0 0.0
    %1715 = vmatpush1.xpose.msra.mxu0 0.0
    %1716 = vmatprep.subr.mxu0 0.0
    %1717 = vmatpush1.xpose.msra.mxu0 0.0
    %1718 = vmatprep.subr.mxu0 0.0
    %1719 = vmatpush1.xpose.msra.mxu0 0.0
    %1720 = vmatprep.subr.mxu0 0.0
    %1721 = vmatpush1.xpose.msra.mxu0 0.0
    %1722 = vmatprep.mubr.f32.mxu0 0.0
    %1723 = vmatmul.mubr.f32.gmra.mrb[0].mxu0 %v1654
    %v1724 = vpop.f32.mrb[0].mxu0
    %v1725 = vadd.f32 0.0, %v1724
    %v1726 = vpop.f32.mrb[0].mxu0
    %1727 = vdwg.mxu0
    %v1728 = vsel %vm556, %v1647, -inf
    %1729 = vmax.xlane.f32.xlu0 %v1728
    %v1730 = vpop.xlane.xlu0 %1729
    %v1731 = vsel %vm556, %v1725, -inf
    %1732 = vmax.xlane.f32.xlu0 %v1731
    %v1733 = vpop.xlane.xlu0 %1732
    %v1734 = vsub.f32 %v1647, %v1730
    %v1735 = vsub.f32 %v1725, %v1733
    %v1736 = vmul.f32 %v1734, 1.442695
    %v1737 = vpow.pop %v1736
    %v1738 = vmul.f32 %v1735, 1.442695
    %v1739 = vpow.pop %v1738
    %v1740 = vsel %vm556, %v1737, 0.0
    %1741 = vadd.xlane.f32.xlu0 %v1740
    %v1742 = vpop.xlane.xlu0 %1741
    %v1743 = vsel %vm556, %v1739, 0.0
    %1744 = vadd.xlane.f32.xlu0 %v1743
    %v1745 = vpop.xlane.xlu0 %1744
    %v1746 = vrcp.pop %v1742
    %v1747 = vrcp.pop %v1745
    %v1748 = vmul.f32 %v1737, %v1746
    %v1749 = vmul.f32 %v1739, %v1747
    %1750 = vrot.lane.b32.xlu0 %v397, 32
    %v1751 = vpop.permute.xlu0 %1750
    %v1754 = vsel %vm556, %v1748, 0
    %1756 = vmatprep.subr.mxu0 0.0
    %1757 = vmatpush1.msra.mxu0 %v1751
    %1758 = vmatprep.subr.mxu0 0.0
    %1759 = vmatpush1.msra.mxu0 0.0
    %1760 = vmatprep.subr.mxu0 0.0
    %1761 = vmatpush1.msra.mxu0 0.0
    %1762 = vmatprep.subr.mxu0 0.0
    %1763 = vmatpush1.msra.mxu0 0.0
    %1764 = vmatprep.subr.mxu0 0.0
    %1765 = vmatpush1.msra.mxu0 0.0
    %1766 = vmatprep.subr.mxu0 0.0
    %1767 = vmatpush1.msra.mxu0 0.0
    %1768 = vmatprep.subr.mxu0 0.0
    %1769 = vmatpush1.msra.mxu0 0.0
    %1770 = vmatprep.subr.mxu0 0.0
    %1771 = vmatpush1.msra.mxu0 0.0
    %1772 = vmatprep.subr.mxu0 0.0
    %1773 = vmatpush1.msra.mxu0 0.0
    %1774 = vmatprep.subr.mxu0 0.0
    %1775 = vmatpush1.msra.mxu0 0.0
    %1776 = vmatprep.subr.mxu0 0.0
    %1777 = vmatpush1.msra.mxu0 0.0
    %1778 = vmatprep.subr.mxu0 0.0
    %1779 = vmatpush1.msra.mxu0 0.0
    %1780 = vmatprep.subr.mxu0 0.0
    %1781 = vmatpush1.msra.mxu0 0.0
    %1782 = vmatprep.subr.mxu0 0.0
    %1783 = vmatpush1.msra.mxu0 0.0
    %1784 = vmatprep.subr.mxu0 0.0
    %1785 = vmatpush1.msra.mxu0 0.0
    %1786 = vmatprep.subr.mxu0 0.0
    %1787 = vmatpush1.msra.mxu0 0.0
    %1788 = vmatprep.subr.mxu0 0.0
    %1789 = vmatpush1.msra.mxu0 0.0
    %1790 = vmatprep.subr.mxu0 0.0
    %1791 = vmatpush1.msra.mxu0 0.0
    %1792 = vmatprep.subr.mxu0 0.0
    %1793 = vmatpush1.msra.mxu0 0.0
    %1794 = vmatprep.subr.mxu0 0.0
    %1795 = vmatpush1.msra.mxu0 0.0
    %1796 = vmatprep.subr.mxu0 0.0
    %1797 = vmatpush1.msra.mxu0 0.0
    %1798 = vmatprep.subr.mxu0 0.0
    %1799 = vmatpush1.msra.mxu0 0.0
    %1800 = vmatprep.subr.mxu0 0.0
    %1801 = vmatpush1.msra.mxu0 0.0
    %1802 = vmatprep.subr.mxu0 0.0
    %1803 = vmatpush1.msra.mxu0 0.0
    %1804 = vmatprep.subr.mxu0 0.0
    %1805 = vmatpush1.msra.mxu0 0.0
    %1806 = vmatprep.subr.mxu0 0.0
    %1807 = vmatpush1.msra.mxu0 0.0
    %1808 = vmatprep.subr.mxu0 0.0
    %1809 = vmatpush1.msra.mxu0 0.0
    %1810 = vmatprep.subr.mxu0 0.0
    %1811 = vmatpush1.msra.mxu0 0.0
    %1812 = vmatprep.subr.mxu0 0.0
    %1813 = vmatpush1.msra.mxu0 0.0
    %1814 = vmatprep.subr.mxu0 0.0
    %1815 = vmatpush1.msra.mxu0 0.0
    %1816 = vmatprep.subr.mxu0 0.0
    %1817 = vmatpush1.msra.mxu0 0.0
    %1818 = vmatprep.subr.mxu0 0.0
    %1819 = vmatpush1.msra.mxu0 0.0
    %1820 = vmatprep.mubr.f32.mxu0 0.0
    %1821 = vmatmul.mubr.f32.gmra.mrb[0].mxu0 %v1754
    %v1822 = vpop.f32.mrb[0].mxu0
    %v1823 = vadd.f32 0.0, %v1822
    %v1824 = vpop.f32.mrb[0].mxu0
    %1825 = vdwg.mxu0
    %1826 = vrot.lane.b32.xlu0 %v400, 32
    %v1827 = vpop.permute.xlu0 %1826
    %v1830 = vsel %vm556, %v1749, 0
    %1832 = vmatprep.subr.mxu0 0.0
    %1833 = vmatpush1.msra.mxu0 %v1827
    %1834 = vmatprep.subr.mxu0 0.0
    %1835 = vmatpush1.msra.mxu0 0.0
    %1836 = vmatprep.subr.mxu0 0.0
    %1837 = vmatpush1.msra.mxu0 0.0
    %1838 = vmatprep.subr.mxu0 0.0
    %1839 = vmatpush1.msra.mxu0 0.0
    %1840 = vmatprep.subr.mxu0 0.0
    %1841 = vmatpush1.msra.mxu0 0.0
    %1842 = vmatprep.subr.mxu0 0.0
    %1843 = vmatpush1.msra.mxu0 0.0
    %1844 = vmatprep.subr.mxu0 0.0
    %1845 = vmatpush1.msra.mxu0 0.0
    %1846 = vmatprep.subr.mxu0 0.0
    %1847 = vmatpush1.msra.mxu0 0.0
    %1848 = vmatprep.subr.mxu0 0.0
    %1849 = vmatpush1.msra.mxu0 0.0
    %1850 = vmatprep.subr.mxu0 0.0
    %1851 = vmatpush1.msra.mxu0 0.0
    %1852 = vmatprep.subr.mxu0 0.0
    %1853 = vmatpush1.msra.mxu0 0.0
    %1854 = vmatprep.subr.mxu0 0.0
    %1855 = vmatpush1.msra.mxu0 0.0
    %1856 = vmatprep.subr.mxu0 0.0
    %1857 = vmatpush1.msra.mxu0 0.0
    %1858 = vmatprep.subr.mxu0 0.0
    %1859 = vmatpush1.msra.mxu0 0.0
    %1860 = vmatprep.subr.mxu0 0.0
    %1861 = vmatpush1.msra.mxu0 0.0
    %1862 = vmatprep.subr.mxu0 0.0
    %1863 = vmatpush1.msra.mxu0 0.0
    %1864 = vmatprep.subr.mxu0 0.0
    %1865 = vmatpush1.msra.mxu0 0.0
    %1866 = vmatprep.subr.mxu0 0.0
    %1867 = vmatpush1.msra.mxu0 0.0
    %1868 = vmatprep.subr.mxu0 0.0
    %1869 = vmatpush1.msra.mxu0 0.0
    %1870 = vmatprep.subr.mxu0 0.0
    %1871 = vmatpush1.msra.mxu0 0.0
    %1872 = vmatprep.subr.mxu0 0.0
    %1873 = vmatpush1.msra.mxu0 0.0
    %1874 = vmatprep.subr.mxu0 0.0
    %1875 = vmatpush1.msra.mxu0 0.0
    %1876 = vmatprep.subr.mxu0 0.0
    %1877 = vmatpush1.msra.mxu0 0.0
    %1878 = vmatprep.subr.mxu0 0.0
    %1879 = vmatpush1.msra.mxu0 0.0
    %1880 = vmatprep.subr.mxu0 0.0
    %1881 = vmatpush1.msra.mxu0 0.0
    %1882 = vmatprep.subr.mxu0 0.0
    %1883 = vmatpush1.msra.mxu0 0.0
    %1884 = vmatprep.subr.mxu0 0.0
    %1885 = vmatpush1.msra.mxu0 0.0
    %1886 = vmatprep.subr.mxu0 0.0
    %1887 = vmatpush1.msra.mxu0 0.0
    %1888 = vmatprep.subr.mxu0 0.0
    %1889 = vmatpush1.msra.mxu0 0.0
    %1890 = vmatprep.subr.mxu0 0.0
    %1891 = vmatpush1.msra.mxu0 0.0
    %1892 = vmatprep.subr.mxu0 0.0
    %1893 = vmatpush1.msra.mxu0 0.0
    %1894 = vmatprep.subr.mxu0 0.0
    %1895 = vmatpush1.msra.mxu0 0.0
    %1896 = vmatprep.mubr.f32.mxu0 0.0
    %1897 = vmatmul.mubr.f32.gmra.mrb[0].mxu0 %v1830
    %v1898 = vpop.f32.mrb[0].mxu0
    %v1899 = vadd.f32 0.0, %v1898
    %v1900 = vpop.f32.mrb[0].mxu0
    %1901 = vdwg.mxu0
    %v1902 = vpack.c.bf16 %v1899, %v1823
    %v1903 = vld [vmem:[#allocation8 + $0x30] sm:$0xf]
    %v1904 = vld [vmem:[#allocation8 + $0x34] sm:$0xf]
    %v1905 = vld [vmem:[#allocation8 + $0x38] sm:$0xf]
    %v1906 = vld [vmem:[#allocation8 + $0x3c] sm:$0xf]
    %v1911 = vunpack.c.l.b16 %v1903
    %v1912 = vunpack.c.l.b16 %v1904
    %v1913 = vunpack.c.l.b16 %v1905
    %v1914 = vunpack.c.l.b16 %v1906
    %v1915 = vpack.c.b16 %v1912, %v1911
    %v1916 = vpack.c.b16 %v1914, %v1913
    %v1920 = vsel %vm403, %v1902, 0
    %1922 = vmatprep.subr.bf16.mxu0 0
    %1923 = vmatpush1.bf16.msra.mxu0 %v1915
    %1924 = vmatprep.subr.bf16.mxu0 0
    %1925 = vmatpush1.bf16.msra.mxu0 %v1916
    %1926 = vmatprep.subr.bf16.mxu0 0
    %1927 = vmatpush1.bf16.msra.mxu0 0
    %1928 = vmatprep.subr.bf16.mxu0 0
    %1929 = vmatpush1.bf16.msra.mxu0 0
    %1930 = vmatprep.subr.bf16.mxu0 0
    %1931 = vmatpush1.bf16.msra.mxu0 0
    %1932 = vmatprep.subr.bf16.mxu0 0
    %1933 = vmatpush1.bf16.msra.mxu0 0
    %1934 = vmatprep.subr.bf16.mxu0 0
    %1935 = vmatpush1.bf16.msra.mxu0 0
    %1936 = vmatprep.subr.bf16.mxu0 0
    %1937 = vmatpush1.bf16.msra.mxu0 0
    %1938 = vmatprep.subr.bf16.mxu0 0
    %1939 = vmatpush1.bf16.msra.mxu0 0
    %1940 = vmatprep.subr.bf16.mxu0 0
    %1941 = vmatpush1.bf16.msra.mxu0 0
    %1942 = vmatprep.subr.bf16.mxu0 0
    %1943 = vmatpush1.bf16.msra.mxu0 0
    %1944 = vmatprep.subr.bf16.mxu0 0
    %1945 = vmatpush1.bf16.msra.mxu0 0
    %1946 = vmatprep.subr.bf16.mxu0 0
    %1947 = vmatpush1.bf16.msra.mxu0 0
    %1948 = vmatprep.subr.bf16.mxu0 0
    %1949 = vmatpush1.bf16.msra.mxu0 0
    %1950 = vmatprep.subr.bf16.mxu0 0
    %1951 = vmatpush1.bf16.msra.mxu0 0
    %1952 = vmatprep.subr.bf16.mxu0 0
    %1953 = vmatpush1.bf16.msra.mxu0 0
    %1954 = vmatprep.mubr.bf16.mxu0 0
    %1955 = vmatmul.mubr.bf16.gmra.mrb[0].mxu0 %v1920
    %v1956 = vpop.f32.mrb[0].mxu0
    %v1957 = vadd.f32 0.0, %v1956
    %v1958 = vpop.f32.mrb[0].mxu0
    %v1959 = vpop.f32.mrb[0].mxu0
    %v1960 = vadd.f32 0.0, %v1959
    %v1961 = vpop.f32.mrb[0].mxu0
    %1962 = vdwg.mxu0
    %v1963 = vadd.f32 %v1570, %v1957
    %v1964 = vadd.f32 %v1571, %v1960
    %v1965 = vadd.f32 %v105, %v1963
    %v1966 = vadd.f32 %v106, %v1964
    %v1967 = vlaneseq
    %v1968 = vshrl.u32 %v1967, 7
    %v1969 = vsub.s32 5, %v1968
    %v1970 = vrot.slane %v107, %v1969
    %v1971 = vadd.f32 %v1965, %v1970
    %v1972 = vadd.f32 %v1966, %v1970
    %1973 = vadd.xlane.f32.xlu0 %v1971
    %v1974 = vpop.xlane.xlu0 %1973
    %1975 = vadd.xlane.f32.xlu0 %v1972
    %v1976 = vpop.xlane.xlu0 %1975
    %v1977 = vmul.f32 %v1974, %v115
    %v1978 = vmul.f32 %v1976, %v115
    %v1979 = vsub.f32 %v1971, %v1977
    %v1980 = vsub.f32 %v1972, %v1978
    %v1981 = vmul.f32 %v1979, %v1979
    %v1982 = vmul.f32 %v1980, %v1980
    %1983 = vadd.xlane.f32.xlu0 %v1981
    %v1984 = vpop.xlane.xlu0 %1983
    %1985 = vadd.xlane.f32.xlu0 %v1982
    %v1986 = vpop.xlane.xlu0 %1985
    %v1987 = vmul.f32 %v1984, %v115
    %v1988 = vmul.f32 %v1986, %v115
    %v1989 = vadd.f32 %v1987, 1e-05
    %v1990 = vadd.f32 %v1988, 1e-05
    %v1991 = vrsqrt.pop %v1989
    %v1992 = vrsqrt.pop %v1990
    %v1993 = vmul.f32 %v1979, %v1991
    %v1994 = vmul.f32 %v1980, %v1992
    %v1995 = vlaneseq
    %v1996 = vshrl.u32 %v1995, 7
    %v1997 = vsub.s32 2, %v1996
    %v1998 = vrot.slane %v107, %v1997
    %v1999 = vmul.f32 %v1993, %v1998
    %v2000 = vmul.f32 %v1994, %v1998
    %v2001 = vlaneseq
    %v2002 = vshrl.u32 %v2001, 7
    %v2003 = vsub.s32 3, %v2002
    %v2004 = vrot.slane %v107, %v2003
    %v2005 = vadd.f32 %v1999, %v2004
    %v2006 = vadd.f32 %v2000, %v2004
    %v2007 = vpack.c.bf16 %v2006, %v2005
    %v2008 = vld [vmem:[#allocation10] sm:$0xff]
    %v2009 = vld [vmem:[#allocation10 + $0x8] sm:$0xff]
    %v2010 = vld [vmem:[#allocation10 + $0x10] sm:$0xff]
    %v2011 = vld [vmem:[#allocation10 + $0x18] sm:$0xff]
    %v2012 = vld [vmem:[#allocation10 + $0x20] sm:$0xff]
    %v2013 = vld [vmem:[#allocation10 + $0x28] sm:$0xff]
    %v2014 = vld [vmem:[#allocation10 + $0x30] sm:$0xff]
    %v2015 = vld [vmem:[#allocation10 + $0x38] sm:$0xff]
    %v2016 = vld [vmem:[#allocation10 + $0x40] sm:$0xff]
    %v2017 = vld [vmem:[#allocation10 + $0x48] sm:$0xff]
    %v2018 = vld [vmem:[#allocation10 + $0x50] sm:$0xff]
    %v2019 = vld [vmem:[#allocation10 + $0x58] sm:$0xff]
    %v2020 = vld [vmem:[#allocation10 + $0x60] sm:$0xff]
    %v2021 = vld [vmem:[#allocation10 + $0x68] sm:$0xff]
    %v2022 = vld [vmem:[#allocation10 + $0x70] sm:$0xff]
    %v2023 = vld [vmem:[#allocation10 + $0x78] sm:$0xff]
    %v2024 = vld [vmem:[#allocation10 + $0x80] sm:$0xff]
    %v2025 = vld [vmem:[#allocation10 + $0x88] sm:$0xff]
    %v2026 = vld [vmem:[#allocation10 + $0x90] sm:$0xff]
    %v2027 = vld [vmem:[#allocation10 + $0x98] sm:$0xff]
    %v2028 = vld [vmem:[#allocation10 + $0xa0] sm:$0xff]
    %v2029 = vld [vmem:[#allocation10 + $0xa8] sm:$0xff]
    %v2030 = vld [vmem:[#allocation10 + $0xb0] sm:$0xff]
    %v2031 = vld [vmem:[#allocation10 + $0xb8] sm:$0xff]
    %v2032 = vld [vmem:[#allocation10 + $0xc0] sm:$0xff]
    %v2033 = vld [vmem:[#allocation10 + $0xc8] sm:$0xff]
    %v2034 = vld [vmem:[#allocation10 + $0xd0] sm:$0xff]
    %v2035 = vld [vmem:[#allocation10 + $0xd8] sm:$0xff]
    %v2036 = vld [vmem:[#allocation10 + $0xe0] sm:$0xff]
    %v2037 = vld [vmem:[#allocation10 + $0xe8] sm:$0xff]
    %v2038 = vld [vmem:[#allocation10 + $0xf0] sm:$0xff]
    %v2039 = vld [vmem:[#allocation10 + $0xf8] sm:$0xff]
    %v2040 = vlaneseq
    %v2041 = vshrl.u32 %v2040, 7
    %v2042 = vsub.s32 6, %v2041
    %v2043 = vrot.slane %v107, %v2042
    %v2044 = vlaneseq
    %v2045 = vshrl.u32 %v2044, 7
    %v2046 = vsub.s32 6, %v2045
    %v2047 = vrot.slane %v108, %v2046
    %v2048 = vlaneseq
    %v2049 = vshrl.u32 %v2048, 7
    %v2050 = vsub.s32 6, %v2049
    %v2051 = vrot.slane %v109, %v2050
    %v2052 = vlaneseq
    %v2053 = vshrl.u32 %v2052, 7
    %v2054 = vsub.s32 6, %v2053
    %v2055 = vrot.slane %v110, %v2054
    %v2088 = vunpack.c.l.b16 %v2008
    %v2089 = vunpack.c.h.b16 %v2008
    %v2090 = vunpack.c.l.b16 %v2009
    %v2091 = vunpack.c.h.b16 %v2009
    %v2092 = vunpack.c.l.b16 %v2010
    %v2093 = vunpack.c.h.b16 %v2010
    %v2094 = vunpack.c.l.b16 %v2011
    %v2095 = vunpack.c.h.b16 %v2011
    %v2096 = vunpack.c.l.b16 %v2012
    %v2097 = vunpack.c.h.b16 %v2012
    %v2098 = vunpack.c.l.b16 %v2013
    %v2099 = vunpack.c.h.b16 %v2013
    %v2100 = vunpack.c.l.b16 %v2014
    %v2101 = vunpack.c.h.b16 %v2014
    %v2102 = vunpack.c.l.b16 %v2015
    %v2103 = vunpack.c.h.b16 %v2015
    %v2104 = vunpack.c.l.b16 %v2016
    %v2105 = vunpack.c.h.b16 %v2016
    %v2106 = vunpack.c.l.b16 %v2017
    %v2107 = vunpack.c.h.b16 %v2017
    %v2108 = vunpack.c.l.b16 %v2018
    %v2109 = vunpack.c.h.b16 %v2018
    %v2110 = vunpack.c.l.b16 %v2019
    %v2111 = vunpack.c.h.b16 %v2019
    %v2112 = vunpack.c.l.b16 %v2020
    %v2113 = vunpack.c.h.b16 %v2020
    %v2114 = vunpack.c.l.b16 %v2021
    %v2115 = vunpack.c.h.b16 %v2021
    %v2116 = vunpack.c.l.b16 %v2022
    %v2117 = vunpack.c.h.b16 %v2022
    %v2118 = vunpack.c.l.b16 %v2023
    %v2119 = vunpack.c.h.b16 %v2023
    %v2120 = vunpack.c.l.b16 %v2024
    %v2121 = vunpack.c.h.b16 %v2024
    %v2122 = vunpack.c.l.b16 %v2025
    %v2123 = vunpack.c.h.b16 %v2025
    %v2124 = vunpack.c.l.b16 %v2026
    %v2125 = vunpack.c.h.b16 %v2026
    %v2126 = vunpack.c.l.b16 %v2027
    %v2127 = vunpack.c.h.b16 %v2027
    %v2128 = vunpack.c.l.b16 %v2028
    %v2129 = vunpack.c.h.b16 %v2028
    %v2130 = vunpack.c.l.b16 %v2029
    %v2131 = vunpack.c.h.b16 %v2029
    %v2132 = vunpack.c.l.b16 %v2030
    %v2133 = vunpack.c.h.b16 %v2030
    %v2134 = vunpack.c.l.b16 %v2031
    %v2135 = vunpack.c.h.b16 %v2031
    %v2136 = vunpack.c.l.b16 %v2032
    %v2137 = vunpack.c.h.b16 %v2032
    %v2138 = vunpack.c.l.b16 %v2033
    %v2139 = vunpack.c.h.b16 %v2033
    %v2140 = vunpack.c.l.b16 %v2034
    %v2141 = vunpack.c.h.b16 %v2034
    %v2142 = vunpack.c.l.b16 %v2035
    %v2143 = vunpack.c.h.b16 %v2035
    %v2144 = vunpack.c.l.b16 %v2036
    %v2145 = vunpack.c.h.b16 %v2036
    %v2146 = vunpack.c.l.b16 %v2037
    %v2147 = vunpack.c.h.b16 %v2037
    %v2148 = vunpack.c.l.b16 %v2038
    %v2149 = vunpack.c.h.b16 %v2038
    %v2150 = vunpack.c.l.b16 %v2039
    %v2151 = vunpack.c.h.b16 %v2039
    %v2152 = vpack.c.b16 %v2092, %v2088
    %v2153 = vpack.c.b16 %v2093, %v2089
    %v2154 = vpack.c.b16 %v2094, %v2090
    %v2155 = vpack.c.b16 %v2095, %v2091
    %v2156 = vpack.c.b16 %v2100, %v2096
    %v2157 = vpack.c.b16 %v2101, %v2097
    %v2158 = vpack.c.b16 %v2102, %v2098
    %v2159 = vpack.c.b16 %v2103, %v2099
    %v2160 = vpack.c.b16 %v2108, %v2104
    %v2161 = vpack.c.b16 %v2109, %v2105
    %v2162 = vpack.c.b16 %v2110, %v2106
    %v2163 = vpack.c.b16 %v2111, %v2107
    %v2164 = vpack.c.b16 %v2116, %v2112
    %v2165 = vpack.c.b16 %v2117, %v2113
    %v2166 = vpack.c.b16 %v2118, %v2114
    %v2167 = vpack.c.b16 %v2119, %v2115
    %v2168 = vpack.c.b16 %v2124, %v2120
    %v2169 = vpack.c.b16 %v2125, %v2121
    %v2170 = vpack.c.b16 %v2126, %v2122
    %v2171 = vpack.c.b16 %v2127, %v2123
    %v2172 = vpack.c.b16 %v2132, %v2128
    %v2173 = vpack.c.b16 %v2133, %v2129
    %v2174 = vpack.c.b16 %v2134, %v2130
    %v2175 = vpack.c.b16 %v2135, %v2131
    %v2176 = vpack.c.b16 %v2140, %v2136
    %v2177 = vpack.c.b16 %v2141, %v2137
    %v2178 = vpack.c.b16 %v2142, %v2138
    %v2179 = vpack.c.b16 %v2143, %v2139
    %v2180 = vpack.c.b16 %v2148, %v2144
    %v2181 = vpack.c.b16 %v2149, %v2145
    %v2182 = vpack.c.b16 %v2150, %v2146
    %v2183 = vpack.c.b16 %v2151, %v2147
    %2216 = vmatprep.subr.bf16.mxu0 %v2153
    %2217 = vmatpush1.bf16.msra.mxu0 %v2152
    %2218 = vmatprep.subr.bf16.mxu0 %v2157
    %2219 = vmatpush1.bf16.msra.mxu0 %v2156
    %2220 = vmatprep.subr.bf16.mxu0 %v2161
    %2221 = vmatpush1.bf16.msra.mxu0 %v2160
    %2222 = vmatprep.subr.bf16.mxu0 %v2165
    %2223 = vmatpush1.bf16.msra.mxu0 %v2164
    %2224 = vmatprep.subr.bf16.mxu0 %v2169
    %2225 = vmatpush1.bf16.msra.mxu0 %v2168
    %2226 = vmatprep.subr.bf16.mxu0 %v2173
    %2227 = vmatpush1.bf16.msra.mxu0 %v2172
    %2228 = vmatprep.subr.bf16.mxu0 %v2177
    %2229 = vmatpush1.bf16.msra.mxu0 %v2176
    %2230 = vmatprep.subr.bf16.mxu0 %v2181
    %2231 = vmatpush1.bf16.msra.mxu0 %v2180
    %2232 = vmatprep.subr.bf16.mxu0 0
    %2233 = vmatpush1.bf16.msra.mxu0 0
    %2234 = vmatprep.subr.bf16.mxu0 0
    %2235 = vmatpush1.bf16.msra.mxu0 0
    %2236 = vmatprep.subr.bf16.mxu0 0
    %2237 = vmatpush1.bf16.msra.mxu0 0
    %2238 = vmatprep.subr.bf16.mxu0 0
    %2239 = vmatpush1.bf16.msra.mxu0 0
    %2240 = vmatprep.subr.bf16.mxu0 0
    %2241 = vmatpush1.bf16.msra.mxu0 0
    %2242 = vmatprep.subr.bf16.mxu0 0
    %2243 = vmatpush1.bf16.msra.mxu0 0
    %2244 = vmatprep.subr.bf16.mxu0 0
    %2245 = vmatpush1.bf16.msra.mxu0 0
    %2246 = vmatprep.subr.bf16.mxu0 0
    %2247 = vmatpush1.bf16.msra.mxu0 0
    %2248 = vmatprep.mubr.bf16.mxu0 0
    %2249 = vmatmul.mubr.bf16.gmra.mrb[0].mxu0 %v2007
    %v2250 = vpop.f32.mrb[0].mxu0
    %v2251 = vadd.f32 %v2043, %v2250
    %v2252 = vpop.f32.mrb[0].mxu0
    %v2253 = vadd.f32 %v2047, %v2252
    %v2254 = vpop.f32.mrb[0].mxu0
    %v2255 = vadd.f32 %v2043, %v2254
    %v2256 = vpop.f32.mrb[0].mxu0
    %v2257 = vadd.f32 %v2047, %v2256
    %2258 = vdwg.mxu0
    %2259 = vmatprep.subr.bf16.mxu0 %v2155
    %2260 = vmatpush1.bf16.msra.mxu0 %v2154
    %2261 = vmatprep.subr.bf16.mxu0 %v2159
    %2262 = vmatpush1.bf16.msra.mxu0 %v2158
    %2263 = vmatprep.subr.bf16.mxu0 %v2163
    %2264 = vmatpush1.bf16.msra.mxu0 %v2162
    %2265 = vmatprep.subr.bf16.mxu0 %v2167
    %2266 = vmatpush1.bf16.msra.mxu0 %v2166
    %2267 = vmatprep.subr.bf16.mxu0 %v2171
    %2268 = vmatpush1.bf16.msra.mxu0 %v2170
    %2269 = vmatprep.subr.bf16.mxu0 %v2175
    %2270 = vmatpush1.bf16.msra.mxu0 %v2174
    %2271 = vmatprep.subr.bf16.mxu0 %v2179
    %2272 = vmatpush1.bf16.msra.mxu0 %v2178
    %2273 = vmatprep.subr.bf16.mxu0 %v2183
    %2274 = vmatpush1.bf16.msra.mxu0 %v2182
    %2275 = vmatprep.subr.bf16.mxu0 0
    %2276 = vmatpush1.bf16.msra.mxu0 0
    %2277 = vmatprep.subr.bf16.mxu0 0
    %2278 = vmatpush1.bf16.msra.mxu0 0
    %2279 = vmatprep.subr.bf16.mxu0 0
    %2280 = vmatpush1.bf16.msra.mxu0 0
    %2281 = vmatprep.subr.bf16.mxu0 0
    %2282 = vmatpush1.bf16.msra.mxu0 0
    %2283 = vmatprep.subr.bf16.mxu0 0
    %2284 = vmatpush1.bf16.msra.mxu0 0
    %2285 = vmatprep.subr.bf16.mxu0 0
    %2286 = vmatpush1.bf16.msra.mxu0 0
    %2287 = vmatprep.subr.bf16.mxu0 0
    %2288 = vmatpush1.bf16.msra.mxu0 0
    %2289 = vmatprep.subr.bf16.mxu0 0
    %2290 = vmatpush1.bf16.msra.mxu0 0
    %2291 = vmatprep.mubr.bf16.mxu0 0
    %2292 = vmatmul.mubr.bf16.gmra.mrb[0].mxu0 %v2007
    %v2293 = vpop.f32.mrb[0].mxu0
    %v2294 = vadd.f32 %v2051, %v2293
    %v2295 = vpop.f32.mrb[0].mxu0
    %v2296 = vadd.f32 %v2055, %v2295
    %v2297 = vpop.f32.mrb[0].mxu0
    %v2298 = vadd.f32 %v2051, %v2297
    %v2299 = vpop.f32.mrb[0].mxu0
    %v2300 = vadd.f32 %v2055, %v2299
    %2301 = vdwg.mxu0
    %v2302 = vmul.f32 %v2251, 0.5
    %v2303 = vmul.f32 %v2253, 0.5
    %v2304 = vmul.f32 %v2294, 0.5
    %v2305 = vmul.f32 %v2296, 0.5
    %v2306 = vmul.f32 %v2255, 0.5
    %v2307 = vmul.f32 %v2257, 0.5
    %v2308 = vmul.f32 %v2298, 0.5
    %v2309 = vmul.f32 %v2300, 0.5
    %v2310 = vmul.f32 %v2251, 0.70710677
    %v2311 = vmul.f32 %v2253, 0.70710677
    %v2312 = vmul.f32 %v2294, 0.70710677
    %v2313 = vmul.f32 %v2296, 0.70710677
    %v2314 = vmul.f32 %v2255, 0.70710677
    %v2315 = vmul.f32 %v2257, 0.70710677
    %v2316 = vmul.f32 %v2298, 0.70710677
    %v2317 = vmul.f32 %v2300, 0.70710677
    %v2318 = vand.u32 2147483647, %v2310
    %v2319 = vand.u32 2147483647, %v2311
    %v2320 = vand.u32 2147483647, %v2312
    %v2321 = vand.u32 2147483647, %v2313
    %v2322 = vand.u32 2147483647, %v2314
    %v2323 = vand.u32 2147483647, %v2315
    %v2324 = vand.u32 2147483647, %v2316
    %v2325 = vand.u32 2147483647, %v2317
    %v2326 = vmul.f32 %v2318, 0.3275911
    %v2327 = vmul.f32 %v2319, 0.3275911
    %v2328 = vmul.f32 %v2320, 0.3275911
    %v2329 = vmul.f32 %v2321, 0.3275911
    %v2330 = vmul.f32 %v2322, 0.3275911
    %v2331 = vmul.f32 %v2323, 0.3275911
    %v2332 = vmul.f32 %v2324, 0.3275911
    %v2333 = vmul.f32 %v2325, 0.3275911
    %v2334 = vadd.f32 %v2326, 1.0
    %v2335 = vadd.f32 %v2327, 1.0
    %v2336 = vadd.f32 %v2328, 1.0
    %v2337 = vadd.f32 %v2329, 1.0
    %v2338 = vadd.f32 %v2330, 1.0
    %v2339 = vadd.f32 %v2331, 1.0
    %v2340 = vadd.f32 %v2332, 1.0
    %v2341 = vadd.f32 %v2333, 1.0
    %v2342 = vrcp.pop %v2334
    %v2343 = vmul.f32 1.0, %v2342
    %v2344 = vrcp.pop %v2335
    %v2345 = vmul.f32 1.0, %v2344
    %v2346 = vrcp.pop %v2336
    %v2347 = vmul.f32 1.0, %v2346
    %v2348 = vrcp.pop %v2337
    %v2349 = vmul.f32 1.0, %v2348
    %v2350 = vrcp.pop %v2338
    %v2351 = vmul.f32 1.0, %v2350
    %v2352 = vrcp.pop %v2339
    %v2353 = vmul.f32 1.0, %v2352
    %v2354 = vrcp.pop %v2340
    %v2355 = vmul.f32 1.0, %v2354
    %v2356 = vrcp.pop %v2341
    %v2357 = vmul.f32 1.0, %v2356
    %v2358 = vmul.f32 %v2343, 1.0614054
    %v2359 = vmul.f32 %v2345, 1.0614054
    %v2360 = vmul.f32 %v2347, 1.0614054
    %v2361 = vmul.f32 %v2349, 1.0614054
    %v2362 = vmul.f32 %v2351, 1.0614054
    %v2363 = vmul.f32 %v2353, 1.0614054
    %v2364 = vmul.f32 %v2355, 1.0614054
    %v2365 = vmul.f32 %v2357, 1.0614054
    %v2366 = vadd.f32 %v2358, -1.4531521
    %v2367 = vadd.f32 %v2359, -1.4531521
    %v2368 = vadd.f32 %v2360, -1.4531521
    %v2369 = vadd.f32 %v2361, -1.4531521
    %v2370 = vadd.f32 %v2362, -1.4531521
    %v2371 = vadd.f32 %v2363, -1.4531521
    %v2372 = vadd.f32 %v2364, -1.4531521
    %v2373 = vadd.f32 %v2365, -1.4531521
    %v2374 = vmul.f32 %v2366, %v2343
    %v2375 = vmul.f32 %v2367, %v2345
    %v2376 = vmul.f32 %v2368, %v2347
    %v2377 = vmul.f32 %v2369, %v2349
    %v2378 = vmul.f32 %v2370, %v2351
    %v2379 = vmul.f32 %v2371, %v2353
    %v2380 = vmul.f32 %v2372, %v2355
    %v2381 = vmul.f32 %v2373, %v2357
    %v2382 = vadd.f32 %v2374, 1.4214138
    %v2383 = vadd.f32 %v2375, 1.4214138
    %v2384 = vadd.f32 %v2376, 1.4214138
    %v2385 = vadd.f32 %v2377, 1.4214138
    %v2386 = vadd.f32 %v2378, 1.4214138
    %v2387 = vadd.f32 %v2379, 1.4214138
    %v2388 = vadd.f32 %v2380, 1.4214138
    %v2389 = vadd.f32 %v2381, 1.4214138
    %v2390 = vmul.f32 %v2382, %v2343
    %v2391 = vmul.f32 %v2383, %v2345
    %v2392 = vmul.f32 %v2384, %v2347
    %v2393 = vmul.f32 %v2385, %v2349
    %v2394 = vmul.f32 %v2386, %v2351
    %v2395 = vmul.f32 %v2387, %v2353
    %v2396 = vmul.f32 %v2388, %v2355
    %v2397 = vmul.f32 %v2389, %v2357
    %v2398 = vadd.f32 %v2390, -0.28449672
    %v2399 = vadd.f32 %v2391, -0.28449672
    %v2400 = vadd.f32 %v2392, -0.28449672
    %v2401 = vadd.f32 %v2393, -0.28449672
    %v2402 = vadd.f32 %v2394, -0.28449672
    %v2403 = vadd.f32 %v2395, -0.28449672
    %v2404 = vadd.f32 %v2396, -0.28449672
    %v2405 = vadd.f32 %v2397, -0.28449672
    %v2406 = vmul.f32 %v2398, %v2343
    %v2407 = vmul.f32 %v2399, %v2345
    %v2408 = vmul.f32 %v2400, %v2347
    %v2409 = vmul.f32 %v2401, %v2349
    %v2410 = vmul.f32 %v2402, %v2351
    %v2411 = vmul.f32 %v2403, %v2353
    %v2412 = vmul.f32 %v2404, %v2355
    %v2413 = vmul.f32 %v2405, %v2357
    %v2414 = vadd.f32 %v2406, 0.2548296
    %v2415 = vadd.f32 %v2407, 0.2548296
    %v2416 = vadd.f32 %v2408, 0.2548296
    %v2417 = vadd.f32 %v2409, 0.2548296
    %v2418 = vadd.f32 %v2410, 0.2548296
    %v2419 = vadd.f32 %v2411, 0.2548296
    %v2420 = vadd.f32 %v2412, 0.2548296
    %v2421 = vadd.f32 %v2413, 0.2548296
    %v2422 = vmul.f32 %v2414, %v2343
    %v2423 = vmul.f32 %v2415, %v2345
    %v2424 = vmul.f32 %v2416, %v2347
    %v2425 = vmul.f32 %v2417, %v2349
    %v2426 = vmul.f32 %v2418, %v2351
    %v2427 = vmul.f32 %v2419, %v2353
    %v2428 = vmul.f32 %v2420, %v2355
    %v2429 = vmul.f32 %v2421, %v2357
    %v2430 = vsub.f32 0.0, %v2318
    %v2431 = vsub.f32 0.0, %v2319
    %v2432 = vsub.f32 0.0, %v2320
    %v2433 = vsub.f32 0.0, %v2321
    %v2434 = vsub.f32 0.0, %v2322
    %v2435 = vsub.f32 0.0, %v2323
    %v2436 = vsub.f32 0.0, %v2324
    %v2437 = vsub.f32 0.0, %v2325
    %v2438 = vmul.f32 %v2430, %v2318
    %v2439 = vmul.f32 %v2431, %v2319
    %v2440 = vmul.f32 %v2432, %v2320
    %v2441 = vmul.f32 %v2433, %v2321
    %v2442 = vmul.f32 %v2434, %v2322
    %v2443 = vmul.f32 %v2435, %v2323
    %v2444 = vmul.f32 %v2436, %v2324
    %v2445 = vmul.f32 %v2437, %v2325
    %v2446 = vmul.f32 %v2438, 1.442695
    %v2447 = vpow.pop %v2446
    %v2448 = vmul.f32 %v2439, 1.442695
    %v2449 = vpow.pop %v2448
    %v2450 = vmul.f32 %v2440, 1.442695
    %v2451 = vpow.pop %v2450
    %v2452 = vmul.f32 %v2441, 1.442695
    %v2453 = vpow.pop %v2452
    %v2454 = vmul.f32 %v2442, 1.442695
    %v2455 = vpow.pop %v2454
    %v2456 = vmul.f32 %v2443, 1.442695
    %v2457 = vpow.pop %v2456
    %v2458 = vmul.f32 %v2444, 1.442695
    %v2459 = vpow.pop %v2458
    %v2460 = vmul.f32 %v2445, 1.442695
    %v2461 = vpow.pop %v2460
    %v2462 = vmul.f32 %v2422, %v2447
    %v2463 = vmul.f32 %v2423, %v2449
    %v2464 = vmul.f32 %v2424, %v2451
    %v2465 = vmul.f32 %v2425, %v2453
    %v2466 = vmul.f32 %v2426, %v2455
    %v2467 = vmul.f32 %v2427, %v2457
    %v2468 = vmul.f32 %v2428, %v2459
    %v2469 = vmul.f32 %v2429, %v2461
    %v2470 = vsub.f32 1.0, %v2462
    %v2471 = vsub.f32 1.0, %v2463
    %v2472 = vsub.f32 1.0, %v2464
    %v2473 = vsub.f32 1.0, %v2465
    %v2474 = vsub.f32 1.0, %v2466
    %v2475 = vsub.f32 1.0, %v2467
    %v2476 = vsub.f32 1.0, %v2468
    %v2477 = vsub.f32 1.0, %v2469
    %vm2478 = vcmp.ge.f32.partialorder %v2310, 0.0
    %vm2479 = vcmp.ge.f32.partialorder %v2311, 0.0
    %vm2480 = vcmp.ge.f32.partialorder %v2312, 0.0
    %vm2481 = vcmp.ge.f32.partialorder %v2313, 0.0
    %vm2482 = vcmp.ge.f32.partialorder %v2314, 0.0
    %vm2483 = vcmp.ge.f32.partialorder %v2315, 0.0
    %vm2484 = vcmp.ge.f32.partialorder %v2316, 0.0
    %vm2485 = vcmp.ge.f32.partialorder %v2317, 0.0
    %v2486 = vsub.f32 0.0, %v2470
    %v2487 = vsub.f32 0.0, %v2471
    %v2488 = vsub.f32 0.0, %v2472
    %v2489 = vsub.f32 0.0, %v2473
    %v2490 = vsub.f32 0.0, %v2474
    %v2491 = vsub.f32 0.0, %v2475
    %v2492 = vsub.f32 0.0, %v2476
    %v2493 = vsub.f32 0.0, %v2477
    %v2494 = vsel %vm2478, %v2470, %v2486
    %v2495 = vsel %vm2479, %v2471, %v2487
    %v2496 = vsel %vm2480, %v2472, %v2488
    %v2497 = vsel %vm2481, %v2473, %v2489
    %v2498 = vsel %vm2482, %v2474, %v2490
    %v2499 = vsel %vm2483, %v2475, %v2491
    %v2500 = vsel %vm2484, %v2476, %v2492
    %v2501 = vsel %vm2485, %v2477, %v2493
    %v2502 = vadd.f32 %v2494, 1.0
    %v2503 = vadd.f32 %v2495, 1.0
    %v2504 = vadd.f32 %v2496, 1.0
    %v2505 = vadd.f32 %v2497, 1.0
    %v2506 = vadd.f32 %v2498, 1.0
    %v2507 = vadd.f32 %v2499, 1.0
    %v2508 = vadd.f32 %v2500, 1.0
    %v2509 = vadd.f32 %v2501, 1.0
    %v2510 = vmul.f32 %v2302, %v2502
    %v2511 = vmul.f32 %v2303, %v2503
    %v2512 = vmul.f32 %v2304, %v2504
    %v2513 = vmul.f32 %v2305, %v2505
    %v2514 = vmul.f32 %v2306, %v2506
    %v2515 = vmul.f32 %v2307, %v2507
    %v2516 = vmul.f32 %v2308, %v2508
    %v2517 = vmul.f32 %v2309, %v2509
    %v2518 = vpack.c.bf16 %v2514, %v2510
    %v2519 = vpack.c.bf16 %v2515, %v2511
    %v2520 = vpack.c.bf16 %v2516, %v2512
    %v2521 = vpack.c.bf16 %v2517, %v2513
    %v2522 = vld [vmem:[#allocation11] sm:$0xf]
    %v2523 = vld [vmem:[#allocation11 + $0x4] sm:$0xf]
    %v2524 = vld [vmem:[#allocation11 + $0x8] sm:$0xf]
    %v2525 = vld [vmem:[#allocation11 + $0xc] sm:$0xf]
    %v2526 = vld [vmem:[#allocation11 + $0x10] sm:$0xf]
    %v2527 = vld [vmem:[#allocation11 + $0x14] sm:$0xf]
    %v2528 = vld [vmem:[#allocation11 + $0x18] sm:$0xf]
    %v2529 = vld [vmem:[#allocation11 + $0x1c] sm:$0xf]
    %v2530 = vld [vmem:[#allocation11 + $0x20] sm:$0xf]
    %v2531 = vld [vmem:[#allocation11 + $0x24] sm:$0xf]
    %v2532 = vld [vmem:[#allocation11 + $0x28] sm:$0xf]
    %v2533 = vld [vmem:[#allocation11 + $0x2c] sm:$0xf]
    %v2534 = vld [vmem:[#allocation11 + $0x30] sm:$0xf]
    %v2535 = vld [vmem:[#allocation11 + $0x34] sm:$0xf]
    %v2536 = vld [vmem:[#allocation11 + $0x38] sm:$0xf]
    %v2537 = vld [vmem:[#allocation11 + $0x3c] sm:$0xf]
    %v2538 = vld [vmem:[#allocation11 + $0x40] sm:$0xf]
    %v2539 = vld [vmem:[#allocation11 + $0x44] sm:$0xf]
    %v2540 = vld [vmem:[#allocation11 + $0x48] sm:$0xf]
    %v2541 = vld [vmem:[#allocation11 + $0x4c] sm:$0xf]
    %v2542 = vld [vmem:[#allocation11 + $0x50] sm:$0xf]
    %v2543 = vld [vmem:[#allocation11 + $0x54] sm:$0xf]
    %v2544 = vld [vmem:[#allocation11 + $0x58] sm:$0xf]
    %v2545 = vld [vmem:[#allocation11 + $0x5c] sm:$0xf]
    %v2546 = vld [vmem:[#allocation11 + $0x60] sm:$0xf]
    %v2547 = vld [vmem:[#allocation11 + $0x64] sm:$0xf]
    %v2548 = vld [vmem:[#allocation11 + $0x68] sm:$0xf]
    %v2549 = vld [vmem:[#allocation11 + $0x6c] sm:$0xf]
    %v2550 = vld [vmem:[#allocation11 + $0x70] sm:$0xf]
    %v2551 = vld [vmem:[#allocation11 + $0x74] sm:$0xf]
    %v2552 = vld [vmem:[#allocation11 + $0x78] sm:$0xf]
    %v2553 = vld [vmem:[#allocation11 + $0x7c] sm:$0xf]
    %v2554 = vld [vmem:[#allocation11 + $0x80] sm:$0xf]
    %v2555 = vld [vmem:[#allocation11 + $0x84] sm:$0xf]
    %v2556 = vld [vmem:[#allocation11 + $0x88] sm:$0xf]
    %v2557 = vld [vmem:[#allocation11 + $0x8c] sm:$0xf]
    %v2558 = vld [vmem:[#allocation11 + $0x90] sm:$0xf]
    %v2559 = vld [vmem:[#allocation11 + $0x94] sm:$0xf]
    %v2560 = vld [vmem:[#allocation11 + $0x98] sm:$0xf]
    %v2561 = vld [vmem:[#allocation11 + $0x9c] sm:$0xf]
    %v2562 = vld [vmem:[#allocation11 + $0xa0] sm:$0xf]
    %v2563 = vld [vmem:[#allocation11 + $0xa4] sm:$0xf]
    %v2564 = vld [vmem:[#allocation11 + $0xa8] sm:$0xf]
    %v2565 = vld [vmem:[#allocation11 + $0xac] sm:$0xf]
    %v2566 = vld [vmem:[#allocation11 + $0xb0] sm:$0xf]
    %v2567 = vld [vmem:[#allocation11 + $0xb4] sm:$0xf]
    %v2568 = vld [vmem:[#allocation11 + $0xb8] sm:$0xf]
    %v2569 = vld [vmem:[#allocation11 + $0xbc] sm:$0xf]
    %v2570 = vld [vmem:[#allocation11 + $0xc0] sm:$0xf]
    %v2571 = vld [vmem:[#allocation11 + $0xc4] sm:$0xf]
    %v2572 = vld [vmem:[#allocation11 + $0xc8] sm:$0xf]
    %v2573 = vld [vmem:[#allocation11 + $0xcc] sm:$0xf]
    %v2574 = vld [vmem:[#allocation11 + $0xd0] sm:$0xf]
    %v2575 = vld [vmem:[#allocation11 + $0xd4] sm:$0xf]
    %v2576 = vld [vmem:[#allocation11 + $0xd8] sm:$0xf]
    %v2577 = vld [vmem:[#allocation11 + $0xdc] sm:$0xf]
    %v2578 = vld [vmem:[#allocation11 + $0xe0] sm:$0xf]
    %v2579 = vld [vmem:[#allocation11 + $0xe4] sm:$0xf]
    %v2580 = vld [vmem:[#allocation11 + $0xe8] sm:$0xf]
    %v2581 = vld [vmem:[#allocation11 + $0xec] sm:$0xf]
    %v2582 = vld [vmem:[#allocation11 + $0xf0] sm:$0xf]
    %v2583 = vld [vmem:[#allocation11 + $0xf4] sm:$0xf]
    %v2584 = vld [vmem:[#allocation11 + $0xf8] sm:$0xf]
    %v2585 = vld [vmem:[#allocation11 + $0xfc] sm:$0xf]
    %v2586 = vlaneseq
    %v2587 = vshrl.u32 %v2586, 7
    %v2588 = vsub.s32 7, %v2587
    %v2589 = vrot.slane %v107, %v2588
    %v2654 = vunpack.c.l.b16 %v2522
    %v2655 = vunpack.c.l.b16 %v2523
    %v2656 = vunpack.c.l.b16 %v2524
    %v2657 = vunpack.c.l.b16 %v2525
    %v2658 = vunpack.c.l.b16 %v2526
    %v2659 = vunpack.c.l.b16 %v2527
    %v2660 = vunpack.c.l.b16 %v2528
    %v2661 = vunpack.c.l.b16 %v2529
    %v2662 = vunpack.c.l.b16 %v2530
    %v2663 = vunpack.c.l.b16 %v2531
    %v2664 = vunpack.c.l.b16 %v2532
    %v2665 = vunpack.c.l.b16 %v2533
    %v2666 = vunpack.c.l.b16 %v2534
    %v2667 = vunpack.c.l.b16 %v2535
    %v2668 = vunpack.c.l.b16 %v2536
    %v2669 = vunpack.c.l.b16 %v2537
    %v2670 = vunpack.c.l.b16 %v2538
    %v2671 = vunpack.c.l.b16 %v2539
    %v2672 = vunpack.c.l.b16 %v2540
    %v2673 = vunpack.c.l.b16 %v2541
    %v2674 = vunpack.c.l.b16 %v2542
    %v2675 = vunpack.c.l.b16 %v2543
    %v2676 = vunpack.c.l.b16 %v2544
    %v2677 = vunpack.c.l.b16 %v2545
    %v2678 = vunpack.c.l.b16 %v2546
    %v2679 = vunpack.c.l.b16 %v2547
    %v2680 = vunpack.c.l.b16 %v2548
    %v2681 = vunpack.c.l.b16 %v2549
    %v2682 = vunpack.c.l.b16 %v2550
    %v2683 = vunpack.c.l.b16 %v2551
    %v2684 = vunpack.c.l.b16 %v2552
    %v2685 = vunpack.c.l.b16 %v2553
    %v2686 = vunpack.c.l.b16 %v2554
    %v2687 = vunpack.c.l.b16 %v2555
    %v2688 = vunpack.c.l.b16 %v2556
    %v2689 = vunpack.c.l.b16 %v2557
    %v2690 = vunpack.c.l.b16 %v2558
    %v2691 = vunpack.c.l.b16 %v2559
    %v2692 = vunpack.c.l.b16 %v2560
    %v2693 = vunpack.c.l.b16 %v2561
    %v2694 = vunpack.c.l.b16 %v2562
    %v2695 = vunpack.c.l.b16 %v2563
    %v2696 = vunpack.c.l.b16 %v2564
    %v2697 = vunpack.c.l.b16 %v2565
    %v2698 = vunpack.c.l.b16 %v2566
    %v2699 = vunpack.c.l.b16 %v2567
    %v2700 = vunpack.c.l.b16 %v2568
    %v2701 = vunpack.c.l.b16 %v2569
    %v2702 = vunpack.c.l.b16 %v2570
    %v2703 = vunpack.c.l.b16 %v2571
    %v2704 = vunpack.c.l.b16 %v2572
    %v2705 = vunpack.c.l.b16 %v2573
    %v2706 = vunpack.c.l.b16 %v2574
    %v2707 = vunpack.c.l.b16 %v2575
    %v2708 = vunpack.c.l.b16 %v2576
    %v2709 = vunpack.c.l.b16 %v2577
    %v2710 = vunpack.c.l.b16 %v2578
    %v2711 = vunpack.c.l.b16 %v2579
    %v2712 = vunpack.c.l.b16 %v2580
    %v2713 = vunpack.c.l.b16 %v2581
    %v2714 = vunpack.c.l.b16 %v2582
    %v2715 = vunpack.c.l.b16 %v2583
    %v2716 = vunpack.c.l.b16 %v2584
    %v2717 = vunpack.c.l.b16 %v2585
    %v2718 = vpack.c.b16 %v2655, %v2654
    %v2719 = vpack.c.b16 %v2657, %v2656
    %v2720 = vpack.c.b16 %v2659, %v2658
    %v2721 = vpack.c.b16 %v2661, %v2660
    %v2722 = vpack.c.b16 %v2663, %v2662
    %v2723 = vpack.c.b16 %v2665, %v2664
    %v2724 = vpack.c.b16 %v2667, %v2666
    %v2725 = vpack.c.b16 %v2669, %v2668
    %v2726 = vpack.c.b16 %v2671, %v2670
    %v2727 = vpack.c.b16 %v2673, %v2672
    %v2728 = vpack.c.b16 %v2675, %v2674
    %v2729 = vpack.c.b16 %v2677, %v2676
    %v2730 = vpack.c.b16 %v2679, %v2678
    %v2731 = vpack.c.b16 %v2681, %v2680
    %v2732 = vpack.c.b16 %v2683, %v2682
    %v2733 = vpack.c.b16 %v2685, %v2684
    %v2734 = vpack.c.b16 %v2687, %v2686
    %v2735 = vpack.c.b16 %v2689, %v2688
    %v2736 = vpack.c.b16 %v2691, %v2690
    %v2737 = vpack.c.b16 %v2693, %v2692
    %v2738 = vpack.c.b16 %v2695, %v2694
    %v2739 = vpack.c.b16 %v2697, %v2696
    %v2740 = vpack.c.b16 %v2699, %v2698
    %v2741 = vpack.c.b16 %v2701, %v2700
    %v2742 = vpack.c.b16 %v2703, %v2702
    %v2743 = vpack.c.b16 %v2705, %v2704
    %v2744 = vpack.c.b16 %v2707, %v2706
    %v2745 = vpack.c.b16 %v2709, %v2708
    %v2746 = vpack.c.b16 %v2711, %v2710
    %v2747 = vpack.c.b16 %v2713, %v2712
    %v2748 = vpack.c.b16 %v2715, %v2714
    %v2749 = vpack.c.b16 %v2717, %v2716
    %2782 = vmatprep.subr.bf16.mxu0 0
    %2783 = vmatpush1.bf16.msra.mxu0 %v2718
    %2784 = vmatprep.subr.bf16.mxu0 0
    %2785 = vmatpush1.bf16.msra.mxu0 %v2719
    %2786 = vmatprep.subr.bf16.mxu0 0
    %2787 = vmatpush1.bf16.msra.mxu0 %v2720
    %2788 = vmatprep.subr.bf16.mxu0 0
    %2789 = vmatpush1.bf16.msra.mxu0 %v2721
    %2790 = vmatprep.subr.bf16.mxu0 0
    %2791 = vmatpush1.bf16.msra.mxu0 %v2722
    %2792 = vmatprep.subr.bf16.mxu0 0
    %2793 = vmatpush1.bf16.msra.mxu0 %v2723
    %2794 = vmatprep.subr.bf16.mxu0 0
    %2795 = vmatpush1.bf16.msra.mxu0 %v2724
    %2796 = vmatprep.subr.bf16.mxu0 0
    %2797 = vmatpush1.bf16.msra.mxu0 %v2725
    %2798 = vmatprep.subr.bf16.mxu0 0
    %2799 = vmatpush1.bf16.msra.mxu0 %v2726
    %2800 = vmatprep.subr.bf16.mxu0 0
    %2801 = vmatpush1.bf16.msra.mxu0 %v2727
    %2802 = vmatprep.subr.bf16.mxu0 0
    %2803 = vmatpush1.bf16.msra.mxu0 %v2728
    %2804 = vmatprep.subr.bf16.mxu0 0
    %2805 = vmatpush1.bf16.msra.mxu0 %v2729
    %2806 = vmatprep.subr.bf16.mxu0 0
    %2807 = vmatpush1.bf16.msra.mxu0 %v2730
    %2808 = vmatprep.subr.bf16.mxu0 0
    %2809 = vmatpush1.bf16.msra.mxu0 %v2731
    %2810 = vmatprep.subr.bf16.mxu0 0
    %2811 = vmatpush1.bf16.msra.mxu0 %v2732
    %2812 = vmatprep.subr.bf16.mxu0 0
    %2813 = vmatpush1.bf16.msra.mxu0 %v2733
    %2814 = vmatprep.mubr.bf16.mxu0 %v2519
    %2815 = vmatmul.mubr.bf16.gmra.mrb[0].mxu0 %v2518
    %v2816 = vpop.f32.mrb[0].mxu0
    %v2817 = vadd.f32 %v2589, %v2816
    %v2818 = vpop.f32.mrb[0].mxu0
    %v2819 = vpop.f32.mrb[0].mxu0
    %v2820 = vadd.f32 %v2589, %v2819
    %v2821 = vpop.f32.mrb[0].mxu0
    %2822 = vdwg.mxu0
    %2823 = vmatprep.subr.bf16.mxu0 0
    %2824 = vmatpush1.bf16.msra.mxu0 %v2734
    %2825 = vmatprep.subr.bf16.mxu0 0
    %2826 = vmatpush1.bf16.msra.mxu0 %v2735
    %2827 = vmatprep.subr.bf16.mxu0 0
    %2828 = vmatpush1.bf16.msra.mxu0 %v2736
    %2829 = vmatprep.subr.bf16.mxu0 0
    %2830 = vmatpush1.bf16.msra.mxu0 %v2737
    %2831 = vmatprep.subr.bf16.mxu0 0
    %2832 = vmatpush1.bf16.msra.mxu0 %v2738
    %2833 = vmatprep.subr.bf16.mxu0 0
    %2834 = vmatpush1.bf16.msra.mxu0 %v2739
    %2835 = vmatprep.subr.bf16.mxu0 0
    %2836 = vmatpush1.bf16.msra.mxu0 %v2740
    %2837 = vmatprep.subr.bf16.mxu0 0
    %2838 = vmatpush1.bf16.msra.mxu0 %v2741
    %2839 = vmatprep.subr.bf16.mxu0 0
    %2840 = vmatpush1.bf16.msra.mxu0 %v2742
    %2841 = vmatprep.subr.bf16.mxu0 0
    %2842 = vmatpush1.bf16.msra.mxu0 %v2743
    %2843 = vmatprep.subr.bf16.mxu0 0
    %2844 = vmatpush1.bf16.msra.mxu0 %v2744
    %2845 = vmatprep.subr.bf16.mxu0 0
    %2846 = vmatpush1.bf16.msra.mxu0 %v2745
    %2847 = vmatprep.subr.bf16.mxu0 0
    %2848 = vmatpush1.bf16.msra.mxu0 %v2746
    %2849 = vmatprep.subr.bf16.mxu0 0
    %2850 = vmatpush1.bf16.msra.mxu0 %v2747
    %2851 = vmatprep.subr.bf16.mxu0 0
    %2852 = vmatpush1.bf16.msra.mxu0 %v2748
    %2853 = vmatprep.subr.bf16.mxu0 0
    %2854 = vmatpush1.bf16.msra.mxu0 %v2749
    %2855 = vmatprep.mubr.bf16.mxu0 %v2521
    %2856 = vmatmul.mubr.bf16.gmra.mrb[0].mxu0 %v2520
    %v2857 = vpop.f32.mrb[0].mxu0
    %v2858 = vadd.f32 %v2817, %v2857
    %v2859 = vpop.f32.mrb[0].mxu0
    %v2860 = vpop.f32.mrb[0].mxu0
    %v2861 = vadd.f32 %v2820, %v2860
    %v2862 = vpop.f32.mrb[0].mxu0
    %2863 = vdwg.mxu0
    %v2864 = vadd.f32 %v1971, %v2858
    %v2865 = vadd.f32 %v1972, %v2861
    %2866 = vst [vmem:[#allocation13] sm:$0xff] %v2864
    %2867 = vst [vmem:[#allocation13 + $0x8] sm:$0xff] %v2865
    // Predicated region
    $region50: #{transformer_block.1} parent=1 // pred_check
      _
    $region51: #{transformer_block.1} parent=1 // pred_check_branch
      %2869 = sbr.rel (0) target = $region53
    $region52: #{transformer_block.1} parent=1 // pred_region
      %s2871 = ssub.s32 256, 256
      %2872 = vsyncadd [#allocation4], %s2871
      %s2873 = sshll.u32 [#allocation13], 4
      %s2874 = int_to_ptr.vmem [resolvable:$true] %s2873
      %2879 = dma.vmem_to_hbm [thread:$0]  %s2874, 256, %s6, [#allocation4], 128, 128, 8
    $region53: #{transformer_block.1} parent=1 // pred_fallthru
      _
    // Predicated region
    $region54: #{transformer_block.1} parent=1 // pred_check
      _
    $region55: #{transformer_block.1} parent=1 // pred_check_branch
      %2881 = sbr.rel (0) target = $region57
    $region56: #{transformer_block.1} parent=1 // pred_region
      %2882 = dma.done [#allocation4], 256
    $region57: #{transformer_block.1} parent=1 // pred_fallthru
      _
    %2883 = vsyncpa [#allocation3], 1
    %2884 = vsyncpa [#allocation6], 1
    %2885 = vsyncpa [#allocation9], 1
    %2886 = vsyncpa [#allocation12], 1
    %2887 = vsyncpa [#allocation4], 1

</llo_original>
